<compile_context>
chip_gen: v6e
topology: v6e:2x2x1
jax: 0.10.0
libtpu: 0.0.40
codegen_flags: <defaults>
</compile_context>

<pallas_src>
import jax
import jax.numpy as jnp
from jax.experimental import pallas as pl
from jax.experimental.pallas import tpu as pltpu

C = 672           # channels
G = 42            # conv groups
CG = C // G       # 16 channels per group
SG = 6            # super-groups (7 conv groups packed per super-group)
GPS = G // SG     # 7 groups per super-group
CSG = GPS * CG    # 112 real channels per super-group
LSG = 128         # lane-padded super-group width
H = W = 7
NVALID = H * W    # 49 spatial positions (BN batch size)
NP = 64           # sublane-padded row count
KT = 9 * LSG      # 1152: im2col contraction size per super-group
CP = SG * LSG     # 768: lane-padded output channel count
EPS = 1e-5


def _fused_kernel(x_ref, w1_ref, g1_ref, b1_ref, w2_ref, g2_ref, b2_ref,
                  out_ref, yslab_ref):
    # x_ref    : [64, 1152] bf16  im2col of this super-group (rows 49..63 zero)
    # w1_ref   : [1152, 128] bf16 grouped-conv weight, tap-major K
    # w2_ref   : [768, 768]  bf16 1x1 conv weight (resident across all steps)
    # yslab_ref: [6, 64, 128] bf16 VMEM scratch holding the BN'd+ReLU'd slabs
    s = pl.program_id(0)
    inv_n = jnp.float32(1.0 / NVALID)

    # conv2d51 (grouped 3x3) for super-group s: a single K=1152 MXU matmul.
    y = jnp.dot(x_ref[...], w1_ref[...], preferred_element_type=jnp.float32)

    # batchnorm2d51: one-pass batch stats over the 49 valid rows (padded rows
    # and padded channels are exactly zero, so unmasked sums are correct),
    # affine folded into one scale/shift, then relu47.
    m = jnp.sum(y, axis=0, keepdims=True) * inv_n
    ex2 = jnp.sum(y * y, axis=0, keepdims=True) * inv_n
    sc = g1_ref[...] * jax.lax.rsqrt(ex2 - m * m + EPS)
    y = jnp.maximum(y * sc + (b1_ref[...] - m * sc), 0.0)

    # Zero the padded rows (the BN shift makes them nonzero) so they cannot
    # pollute batchnorm2d52 statistics, then park the slab in VMEM scratch.
    rows = jax.lax.broadcasted_iota(jnp.int32, (NP, 1), 0)
    y = jnp.where(rows < NVALID, y, 0.0)
    yslab_ref[s] = y.astype(yslab_ref.dtype)

    # Last super-group: conv2d52 (1x1) as ONE K=768 matmul + batchnorm2d52.
    @pl.when(s == SG - 1)
    def _():
        slab = jnp.concatenate([yslab_ref[t] for t in range(SG)], axis=1)
        z = jnp.dot(slab, w2_ref[...], preferred_element_type=jnp.float32)
        m2 = jnp.sum(z, axis=0, keepdims=True) * inv_n
        ez2 = jnp.sum(z * z, axis=0, keepdims=True) * inv_n
        sc2 = g2_ref[...] * jax.lax.rsqrt(ez2 - m2 * m2 + EPS)
        out_ref[...] = z * sc2 + (b2_ref[...] - m2 * sc2)


def prepare_params(w1, g1, b1, w2, g2, b2):
    """One-time weight massaging, hoisted out of the per-call hot path."""
    # grouped 3x3 conv weight [672, 16, 3, 3] -> per-super-group im2col weight
    # [1152, 128]: row = tap*128 + ci (block-diagonal over the 7 groups of 16),
    # col = co; both 112->128 zero-padded; bf16 for the MXU.
    w_g = w1.reshape(SG, GPS, CG, CG, 3, 3)               # [s, g, o, i, kh, kw]
    eye = jnp.eye(GPS, dtype=w1.dtype)
    blk = jnp.einsum('sgoikl,gh->sklgiho', w_g, eye)       # [s,kh,kw,g,i,h,o]
    blk = blk.reshape(SG, 9, CSG, CSG)                     # rows=ci, cols=co
    w1p = jnp.pad(blk, ((0, 0), (0, 0), (0, LSG - CSG), (0, LSG - CSG)))
    w1p = w1p.reshape(SG, KT, LSG).astype(jnp.bfloat16)    # [6, 1152, 128]

    # 1x1 conv weight -> one [768, 768] matrix: row = s*128 + ci (zero rows in
    # the 112..127 pads), col = output channel (672 -> 768 zero-padded).
    w2m = jnp.transpose(w2[:, :, 0, 0]).reshape(SG, CSG, C)     # [6, 112, 672]
    w2p = jnp.pad(w2m, ((0, 0), (0, LSG - CSG), (0, CP - C)))
    w2p = w2p.reshape(CP, CP).astype(jnp.bfloat16)               # [768, 768]

    g1p = jnp.pad(g1.reshape(SG, 1, CSG), ((0, 0), (0, 0), (0, LSG - CSG)))
    b1p = jnp.pad(b1.reshape(SG, 1, CSG), ((0, 0), (0, 0), (0, LSG - CSG)))
    g2p = jnp.pad(g2.reshape(1, C), ((0, 0), (0, CP - C)))
    b2p = jnp.pad(b2.reshape(1, C), ((0, 0), (0, CP - C)))
    return w1p, g1p, b1p, w2p, g2p, b2p


@jax.jit
def model_forward(x_nchw, prepped):
    w1p, g1p, b1p, w2p, g2p, b2p = prepped
    assert x_nchw.shape == (1, C, H, W)

    # relu46 + im2col layout glue (tiny, fuses into one XLA copy): per
    # super-group channels-last, zero-padded halo, 9 taps concatenated on the
    # lane axis (each tap slab 112->128 lanes), rows padded 49->64, bf16.
    x = jnp.maximum(x_nchw[0], 0.0)                           # relu46
    x = x.reshape(SG, CSG, H * W).transpose(0, 2, 1)           # [6, 49, 112]
    x = jnp.pad(x, ((0, 0), (0, 0), (0, LSG - CSG)))           # [6, 49, 128]
    x = x.reshape(SG, H, W, LSG)
    x = jnp.pad(x, ((0, 0), (1, 1), (1, 1), (0, 0)))           # [6, 9, 9, 128]
    taps = [x[:, kh:kh + H, kw:kw + W, :].reshape(SG, NVALID, LSG)
            for kh in range(3) for kw in range(3)]
    xim = jnp.concatenate(taps, axis=2)                        # [6, 49, 1152]
    xim = jnp.pad(xim, ((0, 0), (0, NP - NVALID), (0, 0)))
    xim = xim.astype(jnp.bfloat16)                              # [6, 64, 1152]

    out = pl.pallas_call(
        _fused_kernel,
        out_shape=jax.ShapeDtypeStruct((NP, CP), jnp.float32),
        grid=(SG,),
        in_specs=[
            pl.BlockSpec((None, NP, KT), lambda s: (s, 0, 0)),    # x im2col
            pl.BlockSpec((None, KT, LSG), lambda s: (s, 0, 0)),   # w1
            pl.BlockSpec((None, 1, LSG), lambda s: (s, 0, 0)),    # gamma1
            pl.BlockSpec((None, 1, LSG), lambda s: (s, 0, 0)),    # beta1
            pl.BlockSpec((CP, CP), lambda s: (0, 0)),             # w2 (resident)
            pl.BlockSpec((1, CP), lambda s: (0, 0)),              # gamma2
            pl.BlockSpec((1, CP), lambda s: (0, 0)),              # beta2
        ],
        out_specs=pl.BlockSpec((NP, CP), lambda s: (0, 0)),
        scratch_shapes=[pltpu.VMEM((SG, NP, LSG), jnp.bfloat16)],
        compiler_params=pltpu.CompilerParams(
            dimension_semantics=("arbitrary",),
            vmem_limit_bytes=12 * 1024 * 1024,
        ),
    )(xim, w1p, g1p, b1p, w2p, g2p, b2p)

    # keep the 49 valid rows / 672 real channels and restore NCHW
    z = out[:NVALID, :C].reshape(H, W, C)
    return jnp.transpose(z, (2, 0, 1))[None]                   # [1, 672, 7, 7]


def reference(x, w1, g1, b1, w2, g2, b2):
    # pure-JAX f32 reference mirroring the PyTorch forward (training-mode BN)
    def bn(t, g, b):
        m = t.mean(axis=(0, 2, 3), keepdims=True)
        v = ((t - m) ** 2).mean(axis=(0, 2, 3), keepdims=True)
        return (t - m) / jnp.sqrt(v + EPS) * g.reshape(1, -1, 1, 1) + b.reshape(1, -1, 1, 1)

    x = jnp.maximum(x, 0.0)
    y = jax.lax.conv_general_dilated(
        x, w1, (1, 1), ((1, 1), (1, 1)),
        dimension_numbers=('NCHW', 'OIHW', 'NCHW'), feature_group_count=G)
    y = jnp.maximum(bn(y, g1, b1), 0.0)
    z = jax.lax.conv_general_dilated(
        y, w2, (1, 1), 'VALID', dimension_numbers=('NCHW', 'OIHW', 'NCHW'))
    return bn(z, g2, b2)


if __name__ == "__main__":
    key = jax.random.PRNGKey(0)
    kx, k1, k2, kg1, kb1, kg2, kb2 = jax.random.split(key, 7)

    x = jax.random.normal(kx, (1, C, H, W), dtype=jnp.float32)
    w1 = jax.random.normal(k1, (C, CG, 3, 3), dtype=jnp.float32) * 0.1    # grouped 3x3
    w2 = jax.random.normal(k2, (C, C, 1, 1), dtype=jnp.float32) * 0.05    # 1x1
    g1 = 1.0 + 0.1 * jax.random.normal(kg1, (C,), dtype=jnp.float32)
    b1 = 0.1 * jax.random.normal(kb1, (C,), dtype=jnp.float32)
    g2 = 1.0 + 0.1 * jax.random.normal(kg2, (C,), dtype=jnp.float32)
    b2 = 0.1 * jax.random.normal(kb2, (C,), dtype=jnp.float32)

    # TODO(synk): running_mean/running_var momentum updates (a training-mode
    # side effect of BatchNorm2d) are not reproduced; only the forward output is.
    prepped = prepare_params(w1, g1, b1, w2, g2, b2)   # one-time, outside hot path

    out = jax.block_until_ready(model_forward(x, prepped))
    ref = jax.block_until_ready(reference(x, w1, g1, b1, w2, g2, b2))

    assert out.shape == (1, C, H, W)
    err_max = float(jnp.max(jnp.abs(out - ref)))
    err_mean = float(jnp.mean(jnp.abs(out - ref)))
    # bf16 MXU operands (per perf review) leave ~1e-2-level deviation vs the
    # f32 reference after two batch-norm normalisations; BN math itself is f32.
    assert err_mean < 1e-2, (err_mean, err_max)
    assert jnp.allclose(out, ref, atol=5e-2, rtol=5e-2), (err_mean, err_max)
    print("KERNEL_OK")
</pallas_src>

<mosaic_0001>
module attributes {stable_mosaic.version = 11 : i64} {
  func.func @_fused_kernel(%arg0: i32, %arg1: memref<1x64x1152xbf16, #tpu.memory_space<vmem>>, %arg2: memref<1x1152x128xbf16, #tpu.memory_space<vmem>>, %arg3: memref<1x1x128xf32, #tpu.memory_space<vmem>>, %arg4: memref<1x1x128xf32, #tpu.memory_space<vmem>>, %arg5: memref<768x768xbf16, #tpu.memory_space<vmem>>, %arg6: memref<1x768xf32, #tpu.memory_space<vmem>>, %arg7: memref<1x768xf32, #tpu.memory_space<vmem>>, %arg8: memref<64x768xf32, #tpu.memory_space<vmem>>, %arg9: memref<6x64x128xbf16, #tpu.memory_space<vmem>>) attributes {dimension_semantics = [#tpu.dimension_semantics<arbitrary>], iteration_bounds = array<i64: 6>, scalar_prefetch = 0 : i64, scratch_operands = 1 : i64, tpu.core_type = #tpu.core_type<tc>, window_params = [{transform_indices = @transform_0, window_bounds = array<i64: 1, 64, 1152>}, {transform_indices = @transform_1, window_bounds = array<i64: 1, 1152, 128>}, {transform_indices = @transform_2, window_bounds = array<i64: 1, 1, 128>}, {transform_indices = @transform_3, window_bounds = array<i64: 1, 1, 128>}, {pipeline_mode = #tpu.pipeline_mode<synchronous>, transform_indices = @transform_4, window_bounds = array<i64: 768, 768>}, {pipeline_mode = #tpu.pipeline_mode<synchronous>, transform_indices = @transform_5, window_bounds = array<i64: 1, 768>}, {pipeline_mode = #tpu.pipeline_mode<synchronous>, transform_indices = @transform_6, window_bounds = array<i64: 1, 768>}, {pipeline_mode = #tpu.pipeline_mode<synchronous>, transform_indices = @transform_7, window_bounds = array<i64: 64, 768>}]} {
    %c0 = arith.constant 0 : index
    %c0_0 = arith.constant 0 : index
    %c0_1 = arith.constant 0 : index
    %0 = vector.load %arg1[%c0, %c0_0, %c0_1] : memref<1x64x1152xbf16, #tpu.memory_space<vmem>>, vector<1x64x1152xbf16>
    %1 = vector.shape_cast %0 : vector<1x64x1152xbf16> to vector<64x1152xbf16>
    %c0_2 = arith.constant 0 : index
    %c0_3 = arith.constant 0 : index
    %c0_4 = arith.constant 0 : index
    %2 = vector.load %arg2[%c0_2, %c0_3, %c0_4] : memref<1x1152x128xbf16, #tpu.memory_space<vmem>>, vector<1x1152x128xbf16>
    %3 = vector.shape_cast %2 : vector<1x1152x128xbf16> to vector<1152x128xbf16>
    %cst = arith.constant dense<0.000000e+00> : vector<64x128xf32>
    %4 = tpu.matmul %1, %3, %cst {dimension_numbers = #tpu.dot_dimension_numbers<[1], [0], [0], [1], [0, 0, 1, 1], [], []>} : vector<64x1152xbf16>, vector<1152x128xbf16>, vector<64x128xf32> -> vector<64x128xf32>
    %cst_5 = arith.constant dense<0.000000e+00> : vector<128xf32>
    %5 = vector.multi_reduction <add>, %4, %cst_5 [0] : vector<64x128xf32> to vector<128xf32>
    %6 = vector.shape_cast %5 : vector<128xf32> to vector<1x128xf32>
    %cst_6 = arith.constant 0.0204081628 : f32
    %7 = vector.broadcast %cst_6 : f32 to vector<1x128xf32>
    %8 = arith.mulf %6, %7 : vector<1x128xf32>
    %9 = arith.mulf %4, %4 : vector<64x128xf32>
    %cst_7 = arith.constant dense<0.000000e+00> : vector<128xf32>
    %10 = vector.multi_reduction <add>, %9, %cst_7 [0] : vector<64x128xf32> to vector<128xf32>
    %11 = vector.shape_cast %10 : vector<128xf32> to vector<1x128xf32>
    %cst_8 = arith.constant 0.0204081628 : f32
    %12 = vector.broadcast %cst_8 : f32 to vector<1x128xf32>
    %13 = arith.mulf %11, %12 : vector<1x128xf32>
    %c0_9 = arith.constant 0 : index
    %c0_10 = arith.constant 0 : index
    %c0_11 = arith.constant 0 : index
    %14 = vector.load %arg3[%c0_9, %c0_10, %c0_11] : memref<1x1x128xf32, #tpu.memory_space<vmem>>, vector<1x1x128xf32>
    %15 = vector.shape_cast %14 : vector<1x1x128xf32> to vector<1x128xf32>
    %16 = arith.mulf %8, %8 : vector<1x128xf32>
    %17 = arith.subf %13, %16 : vector<1x128xf32>
    %cst_12 = arith.constant 9.99999974E-6 : f32
    %18 = vector.broadcast %cst_12 : f32 to vector<1x128xf32>
    %19 = arith.addf %17, %18 : vector<1x128xf32>
    %20 = math.rsqrt %19 : vector<1x128xf32>
    %21 = arith.mulf %15, %20 : vector<1x128xf32>
    %22 = vector.broadcast %21 : vector<1x128xf32> to vector<64x128xf32>
    %23 = arith.mulf %4, %22 : vector<64x128xf32>
    %c0_13 = arith.constant 0 : index
    %c0_14 = arith.constant 0 : index
    %c0_15 = arith.constant 0 : index
    %24 = vector.load %arg4[%c0_13, %c0_14, %c0_15] : memref<1x1x128xf32, #tpu.memory_space<vmem>>, vector<1x1x128xf32>
    %25 = vector.shape_cast %24 : vector<1x1x128xf32> to vector<1x128xf32>
    %26 = arith.mulf %8, %21 : vector<1x128xf32>
    %27 = arith.subf %25, %26 : vector<1x128xf32>
    %28 = vector.broadcast %27 : vector<1x128xf32> to vector<64x128xf32>
    %29 = arith.addf %23, %28 : vector<64x128xf32>
    %cst_16 = arith.constant 0.000000e+00 : f32
    %30 = vector.broadcast %cst_16 : f32 to vector<64x128xf32>
    %31 = arith.maximumf %29, %30 : vector<64x128xf32>
    %32 = tpu.iota {dimensions = array<i32: 0>} : vector<64x1xi32>
    %c49_i32 = arith.constant 49 : i32
    %33 = vector.broadcast %c49_i32 : i32 to vector<64x1xi32>
    %34 = arith.cmpi slt, %32, %33 : vector<64x1xi32>
    %cst_17 = arith.constant 0.000000e+00 : f32
    %35 = vector.shape_cast %34 : vector<64x1xi1> to vector<64x1xi1>
    %36 = vector.broadcast %35 : vector<64x1xi1> to vector<64x128xi1>
    %37 = vector.broadcast %cst_17 : f32 to vector<64x128xf32>
    %38 = arith.select %36, %31, %37 : vector<64x128xi1>, vector<64x128xf32>
    %39 = arith.truncf %38 : vector<64x128xf32> to vector<64x128xbf16>
    %40 = arith.index_cast %arg0 : i32 to index
    %c0_18 = arith.constant 0 : index
    %c0_19 = arith.constant 0 : index
    %41 = vector.load %arg9[%40, %c0_18, %c0_19] : memref<6x64x128xbf16, #tpu.memory_space<vmem>>, vector<1x64x128xbf16>
    %42 = vector.shape_cast %41 : vector<1x64x128xbf16> to vector<64x128xbf16>
    %43 = vector.shape_cast %39 : vector<64x128xbf16> to vector<1x64x128xbf16>
    tpu.vector_store %arg9[%40, %c0_18, %c0_19], %43 {strides = array<i32>} : memref<6x64x128xbf16, #tpu.memory_space<vmem>>, vector<1x64x128xbf16>,
    %c5_i32 = arith.constant 5 : i32
    %44 = arith.cmpi eq, %arg0, %c5_i32 : i32
    %45 = arith.extui %44 : i1 to i32
    %cst_20 = arith.constant 0.0204081628 : f32
    %c0_i32 = arith.constant 0 : i32
    %46 = arith.cmpi ne, %45, %c0_i32 : i32
    scf.if %46 {
      %c0_21 = arith.constant 0 : index
      %c0_22 = arith.constant 0 : index
      %c0_23 = arith.constant 0 : index
      %47 = vector.load %arg9[%c0_21, %c0_22, %c0_23] : memref<6x64x128xbf16, #tpu.memory_space<vmem>>, vector<1x64x128xbf16>
      %48 = vector.shape_cast %47 : vector<1x64x128xbf16> to vector<64x128xbf16>
      %c1 = arith.constant 1 : index
      %c0_24 = arith.constant 0 : index
      %c0_25 = arith.constant 0 : index
      %49 = vector.load %arg9[%c1, %c0_24, %c0_25] : memref<6x64x128xbf16, #tpu.memory_space<vmem>>, vector<1x64x128xbf16>
      %50 = vector.shape_cast %49 : vector<1x64x128xbf16> to vector<64x128xbf16>
      %c2 = arith.constant 2 : index
      %c0_26 = arith.constant 0 : index
      %c0_27 = arith.constant 0 : index
      %51 = vector.load %arg9[%c2, %c0_26, %c0_27] : memref<6x64x128xbf16, #tpu.memory_space<vmem>>, vector<1x64x128xbf16>
      %52 = vector.shape_cast %51 : vector<1x64x128xbf16> to vector<64x128xbf16>
      %c3 = arith.constant 3 : index
      %c0_28 = arith.constant 0 : index
      %c0_29 = arith.constant 0 : index
      %53 = vector.load %arg9[%c3, %c0_28, %c0_29] : memref<6x64x128xbf16, #tpu.memory_space<vmem>>, vector<1x64x128xbf16>
      %54 = vector.shape_cast %53 : vector<1x64x128xbf16> to vector<64x128xbf16>
      %c4 = arith.constant 4 : index
      %c0_30 = arith.constant 0 : index
      %c0_31 = arith.constant 0 : index
      %55 = vector.load %arg9[%c4, %c0_30, %c0_31] : memref<6x64x128xbf16, #tpu.memory_space<vmem>>, vector<1x64x128xbf16>
      %56 = vector.shape_cast %55 : vector<1x64x128xbf16> to vector<64x128xbf16>
      %c5 = arith.constant 5 : index
      %c0_32 = arith.constant 0 : index
      %c0_33 = arith.constant 0 : index
      %57 = vector.load %arg9[%c5, %c0_32, %c0_33] : memref<6x64x128xbf16, #tpu.memory_space<vmem>>, vector<1x64x128xbf16>
      %58 = vector.shape_cast %57 : vector<1x64x128xbf16> to vector<64x128xbf16>
      %59 = tpu.concatenate %48, %50, %52, %54, %56, %58 in 1 : vector<64x128xbf16>, vector<64x128xbf16>, vector<64x128xbf16>, vector<64x128xbf16>, vector<64x128xbf16>, vector<64x128xbf16> -> vector<64x768xbf16>
      %c0_34 = arith.constant 0 : index
      %c0_35 = arith.constant 0 : index
      %60 = vector.load %arg5[%c0_34, %c0_35] : memref<768x768xbf16, #tpu.memory_space<vmem>>, vector<768x768xbf16>
      %cst_36 = arith.constant dense<0.000000e+00> : vector<64x768xf32>
      %61 = tpu.matmul %59, %60, %cst_36 {dimension_numbers = #tpu.dot_dimension_numbers<[1], [0], [0], [1], [0, 0, 1, 1], [], []>} : vector<64x768xbf16>, vector<768x768xbf16>, vector<64x768xf32> -> vector<64x768xf32>
      %cst_37 = arith.constant dense<0.000000e+00> : vector<768xf32>
      %62 = vector.multi_reduction <add>, %61, %cst_37 [0] : vector<64x768xf32> to vector<768xf32>
      %63 = vector.shape_cast %62 : vector<768xf32> to vector<1x768xf32>
      %64 = vector.broadcast %cst_20 : f32 to vector<1x768xf32>
      %65 = arith.mulf %63, %64 : vector<1x768xf32>
      %66 = arith.mulf %61, %61 : vector<64x768xf32>
      %cst_38 = arith.constant dense<0.000000e+00> : vector<768xf32>
      %67 = vector.multi_reduction <add>, %66, %cst_38 [0] : vector<64x768xf32> to vector<768xf32>
      %68 = vector.shape_cast %67 : vector<768xf32> to vector<1x768xf32>
      %69 = vector.broadcast %cst_20 : f32 to vector<1x768xf32>
      %70 = arith.mulf %68, %69 : vector<1x768xf32>
      %c0_39 = arith.constant 0 : index
      %c0_40 = arith.constant 0 : index
      %71 = vector.load %arg6[%c0_39, %c0_40] : memref<1x768xf32, #tpu.memory_space<vmem>>, vector<1x768xf32>
      %72 = arith.mulf %65, %65 : vector<1x768xf32>
      %73 = arith.subf %70, %72 : vector<1x768xf32>
      %cst_41 = arith.constant 9.99999974E-6 : f32
      %74 = vector.broadcast %cst_41 : f32 to vector<1x768xf32>
      %75 = arith.addf %73, %74 : vector<1x768xf32>
      %76 = math.rsqrt %75 : vector<1x768xf32>
      %77 = arith.mulf %71, %76 : vector<1x768xf32>
      %78 = vector.broadcast %77 : vector<1x768xf32> to vector<64x768xf32>
      %79 = arith.mulf %61, %78 : vector<64x768xf32>
      %c0_42 = arith.constant 0 : index
      %c0_43 = arith.constant 0 : index
      %80 = vector.load %arg7[%c0_42, %c0_43] : memref<1x768xf32, #tpu.memory_space<vmem>>, vector<1x768xf32>
      %81 = arith.mulf %65, %77 : vector<1x768xf32>
      %82 = arith.subf %80, %81 : vector<1x768xf32>
      %83 = vector.broadcast %82 : vector<1x768xf32> to vector<64x768xf32>
      %84 = arith.addf %79, %83 : vector<64x768xf32>
      %c0_44 = arith.constant 0 : index
      %c0_45 = arith.constant 0 : index
      %85 = vector.load %arg8[%c0_44, %c0_45] : memref<64x768xf32, #tpu.memory_space<vmem>>, vector<64x768xf32>
      tpu.vector_store %arg8[%c0_44, %c0_45], %84 {strides = array<i32>} : memref<64x768xf32, #tpu.memory_space<vmem>>, vector<64x768xf32>,
    } else {
    }
    return
  }
  func.func @transform_0(%arg0: i32) -> (i32, i32, i32) {
    %c0_i32 = arith.constant 0 : i32
    %c0_i32_0 = arith.constant 0 : i32
    %c0_i32_1 = arith.constant 0 : i32
    return %arg0, %c0_i32, %c0_i32_0 : i32, i32, i32
  }
  func.func @transform_1(%arg0: i32) -> (i32, i32, i32) {
    %c0_i32 = arith.constant 0 : i32
    %c0_i32_0 = arith.constant 0 : i32
    %c0_i32_1 = arith.constant 0 : i32
    return %arg0, %c0_i32, %c0_i32_0 : i32, i32, i32
  }
  func.func @transform_2(%arg0: i32) -> (i32, i32, i32) {
    %c0_i32 = arith.constant 0 : i32
    %c0_i32_0 = arith.constant 0 : i32
    %c0_i32_1 = arith.constant 0 : i32
    return %arg0, %c0_i32, %c0_i32_0 : i32, i32, i32
  }
  func.func @transform_3(%arg0: i32) -> (i32, i32, i32) {
    %c0_i32 = arith.constant 0 : i32
    %c0_i32_0 = arith.constant 0 : i32
    %c0_i32_1 = arith.constant 0 : i32
    return %arg0, %c0_i32, %c0_i32_0 : i32, i32, i32
  }
  func.func @transform_4(%arg0: i32) -> (i32, i32) {
    %c0_i32 = arith.constant 0 : i32
    %c0_i32_0 = arith.constant 0 : i32
    %c0_i32_1 = arith.constant 0 : i32
    return %c0_i32, %c0_i32_0 : i32, i32
  }
  func.func @transform_5(%arg0: i32) -> (i32, i32) {
    %c0_i32 = arith.constant 0 : i32
    %c0_i32_0 = arith.constant 0 : i32
    %c0_i32_1 = arith.constant 0 : i32
    return %c0_i32, %c0_i32_0 : i32, i32
  }
  func.func @transform_6(%arg0: i32) -> (i32, i32) {
    %c0_i32 = arith.constant 0 : i32
    %c0_i32_0 = arith.constant 0 : i32
    %c0_i32_1 = arith.constant 0 : i32
    return %c0_i32, %c0_i32_0 : i32, i32
  }
  func.func @transform_7(%arg0: i32) -> (i32, i32) {
    %c0_i32 = arith.constant 0 : i32
    %c0_i32_0 = arith.constant 0 : i32
    %c0_i32_1 = arith.constant 0 : i32
    return %c0_i32, %c0_i32_0 : i32, i32
  }
}

</mosaic_0001>

<llo_original>
// kernel: model_forward.1
$region0: #{model_forward.1}
  #allocation0 [shape = 'u32[]', space=smem, size = 0x4, offset = 0x4, fixed_abs, tag = 'smem constant byte address 0x4 - core index']
  #allocation1 [shape = 'u32[144,128]{1,0:T(1,128)}', space=vmem, size = 0x12000, scoped, tag = 'internal scratch']
  #allocation2 [shape = 'bf16[6,64,128]{2,1,0:T(8,128)(2,1)}', space=vmem, size = 0x18000, scoped, tag = 'scratch operand']
  %s0 = inlined_call_operand.vmem [shape: bf16[6,64,1152], index: 0, kind: input, shape index: {}]
  %s1 = inlined_call_operand.vmem [shape: bf16[6,1152,128], index: 1, kind: input, shape index: {}]
  %s2 = inlined_call_operand.vmem [shape: f32[6,1,128], index: 2, kind: input, shape index: {}]
  %s3 = inlined_call_operand.vmem [shape: f32[6,1,128], index: 3, kind: input, shape index: {}]
  %s4 = inlined_call_operand.vmem [shape: bf16[768,768], index: 4, kind: input, shape index: {}]
  %s5 = inlined_call_operand.vmem [shape: f32[1,768], index: 5, kind: input, shape index: {}]
  %s6 = inlined_call_operand.vmem [shape: f32[1,768], index: 6, kind: input, shape index: {}]
  %s7 = inlined_call_operand.vmem [shape: f32[64,768], index: 7, kind: output, shape index: {}]
  %s8 = sld [smem:[#allocation0]]
  $region65: #{model_forward.1} parent=0
    _
  %s10 = ssub.s32 1, %s8
  %s11 = scalar_select 0, %s10, %s8
  loop: start=0, step=1, limit=8
  $region2: #{model_forward.1} parent=0 // loop_pre_header
    _
  $region3: #{model_forward.1} parent=0 // loop_header
    %s13 = sphi 0, %s17
    %p14 = scmp.ge.s32.totalorder %s13, 8
    %s23 = sphi 0, %s25
    %s26 = sphi 0, %s23
    %s27 = sphi 0, %s26
    %s43 = sphi 0, %s27
    %s49 = sphi 0, %s51
    %s52 = sphi 0, %s49
    %s53 = sphi 0, %s52
    %s69 = sphi 0, %s53
    %s75 = sphi 0, %s77
    %s78 = sphi 0, %s75
    %s79 = sphi 0, %s78
    %s95 = sphi 0, %s79
    %s101 = sphi 0, %s103
    %s104 = sphi 0, %s101
    %s105 = sphi 0, %s104
    %s121 = sphi 0, %s105
    %s125 = sphi 0, %s125
    %s127 = sphi 0, %s125
    %s128 = sphi 0, %s127
    %s142 = sphi 0, %s128
    %s146 = sphi 0, %s146
    %s148 = sphi 0, %s146
    %s149 = sphi 0, %s148
    %s163 = sphi 0, %s149
    %s167 = sphi 0, %s167
    %s169 = sphi 0, %s167
    %s170 = sphi 0, %s169
    %s184 = sphi 0, %s170
    %s188 = sphi 0, %s188
    %s190 = sphi 0, %s188
    %s191 = sphi 0, %s190
    %s205 = sphi 0, %s191
  $region4: #{model_forward.1} parent=0 // loop_header_branch
    %16 = sbr.rel (%p14) target = $region8
  $region5: #{model_forward.1} parent=0 // loop_body
    %s18 = ssub.s32 %s13, 1
    %s19 = ssub.s32 %s13, 2
    %s20 = sadd.s32 %s13, 1
    %s21 = ssub.s32 %s13, %s20
    %p22 = scmp.eq.s32.totalorder %s21, 0
    %s24 = sadd.s32 %s23, 1
    %s25 = scalar_select %p22, %s23, %s24
    %p28 = pneg %p22
    %p29 = scmp.eq.s32.totalorder %s13, 5
    %p30 = por %p28, %p29
    %p31 = scmp.ne.s32.totalorder %s23, %s26
    %p32 = scmp.eq.s32.totalorder %s13, 0
    %p33 = por %p31, %p32
    %p34 = scmp.ne.s32.totalorder %s23, %s26
    %p35 = scmp.eq.s32.totalorder %s18, 5
    %p36 = por %p34, %p35
    %p37 = scmp.ne.s32.totalorder %s26, %s27
    %p38 = scmp.eq.s32.totalorder %s18, 0
    %p39 = por %p37, %p38
    %p40 = scmp.ne.s32.totalorder %s26, %s27
    %p41 = scmp.eq.s32.totalorder %s19, 5
    %p42 = por %p40, %p41
    %p44 = scmp.ne.s32.totalorder %s27, %s43
    %p45 = scmp.eq.s32.totalorder %s19, 0
    %p46 = por %p44, %p45
    %s47 = ssub.s32 %s13, %s20
    %p48 = scmp.eq.s32.totalorder %s47, 0
    %s50 = sadd.s32 %s49, 1
    %s51 = scalar_select %p48, %s49, %s50
    %p54 = pneg %p48
    %p55 = scmp.eq.s32.totalorder %s13, 5
    %p56 = por %p54, %p55
    %p57 = scmp.ne.s32.totalorder %s49, %s52
    %p58 = scmp.eq.s32.totalorder %s13, 0
    %p59 = por %p57, %p58
    %p60 = scmp.ne.s32.totalorder %s49, %s52
    %p61 = scmp.eq.s32.totalorder %s18, 5
    %p62 = por %p60, %p61
    %p63 = scmp.ne.s32.totalorder %s52, %s53
    %p64 = scmp.eq.s32.totalorder %s18, 0
    %p65 = por %p63, %p64
    %p66 = scmp.ne.s32.totalorder %s52, %s53
    %p67 = scmp.eq.s32.totalorder %s19, 5
    %p68 = por %p66, %p67
    %p70 = scmp.ne.s32.totalorder %s53, %s69
    %p71 = scmp.eq.s32.totalorder %s19, 0
    %p72 = por %p70, %p71
    %s73 = ssub.s32 %s13, %s20
    %p74 = scmp.eq.s32.totalorder %s73, 0
    %s76 = sadd.s32 %s75, 1
    %s77 = scalar_select %p74, %s75, %s76
    %p80 = pneg %p74
    %p81 = scmp.eq.s32.totalorder %s13, 5
    %p82 = por %p80, %p81
    %p83 = scmp.ne.s32.totalorder %s75, %s78
    %p84 = scmp.eq.s32.totalorder %s13, 0
    %p85 = por %p83, %p84
    %p86 = scmp.ne.s32.totalorder %s75, %s78
    %p87 = scmp.eq.s32.totalorder %s18, 5
    %p88 = por %p86, %p87
    %p89 = scmp.ne.s32.totalorder %s78, %s79
    %p90 = scmp.eq.s32.totalorder %s18, 0
    %p91 = por %p89, %p90
    %p92 = scmp.ne.s32.totalorder %s78, %s79
    %p93 = scmp.eq.s32.totalorder %s19, 5
    %p94 = por %p92, %p93
    %p96 = scmp.ne.s32.totalorder %s79, %s95
    %p97 = scmp.eq.s32.totalorder %s19, 0
    %p98 = por %p96, %p97
    %s99 = ssub.s32 %s13, %s20
    %p100 = scmp.eq.s32.totalorder %s99, 0
    %s102 = sadd.s32 %s101, 1
    %s103 = scalar_select %p100, %s101, %s102
    %p106 = pneg %p100
    %p107 = scmp.eq.s32.totalorder %s13, 5
    %p108 = por %p106, %p107
    %p109 = scmp.ne.s32.totalorder %s101, %s104
    %p110 = scmp.eq.s32.totalorder %s13, 0
    %p111 = por %p109, %p110
    %p112 = scmp.ne.s32.totalorder %s101, %s104
    %p113 = scmp.eq.s32.totalorder %s18, 5
    %p114 = por %p112, %p113
    %p115 = scmp.ne.s32.totalorder %s104, %s105
    %p116 = scmp.eq.s32.totalorder %s18, 0
    %p117 = por %p115, %p116
    %p118 = scmp.ne.s32.totalorder %s104, %s105
    %p119 = scmp.eq.s32.totalorder %s19, 5
    %p120 = por %p118, %p119
    %p122 = scmp.ne.s32.totalorder %s105, %s121
    %p123 = scmp.eq.s32.totalorder %s19, 0
    %p124 = por %p122, %p123
    %s126 = sadd.s32 %s125, 1
    %p129 = scmp.eq.s32.totalorder %s13, 5
    %p130 = scmp.ne.s32.totalorder %s125, %s127
    %p131 = scmp.eq.s32.totalorder %s13, 0
    %p132 = por %p130, %p131
    %p133 = scmp.ne.s32.totalorder %s125, %s127
    %p134 = scmp.eq.s32.totalorder %s18, 5
    %p135 = por %p133, %p134
    %p136 = scmp.ne.s32.totalorder %s127, %s128
    %p137 = scmp.eq.s32.totalorder %s18, 0
    %p138 = por %p136, %p137
    %p139 = scmp.ne.s32.totalorder %s127, %s128
    %p140 = scmp.eq.s32.totalorder %s19, 5
    %p141 = por %p139, %p140
    %p143 = scmp.ne.s32.totalorder %s128, %s142
    %p144 = scmp.eq.s32.totalorder %s19, 0
    %p145 = por %p143, %p144
    %s147 = sadd.s32 %s146, 1
    %p150 = scmp.eq.s32.totalorder %s13, 5
    %p151 = scmp.ne.s32.totalorder %s146, %s148
    %p152 = scmp.eq.s32.totalorder %s13, 0
    %p153 = por %p151, %p152
    %p154 = scmp.ne.s32.totalorder %s146, %s148
    %p155 = scmp.eq.s32.totalorder %s18, 5
    %p156 = por %p154, %p155
    %p157 = scmp.ne.s32.totalorder %s148, %s149
    %p158 = scmp.eq.s32.totalorder %s18, 0
    %p159 = por %p157, %p158
    %p160 = scmp.ne.s32.totalorder %s148, %s149
    %p161 = scmp.eq.s32.totalorder %s19, 5
    %p162 = por %p160, %p161
    %p164 = scmp.ne.s32.totalorder %s149, %s163
    %p165 = scmp.eq.s32.totalorder %s19, 0
    %p166 = por %p164, %p165
    %s168 = sadd.s32 %s167, 1
    %p171 = scmp.eq.s32.totalorder %s13, 5
    %p172 = scmp.ne.s32.totalorder %s167, %s169
    %p173 = scmp.eq.s32.totalorder %s13, 0
    %p174 = por %p172, %p173
    %p175 = scmp.ne.s32.totalorder %s167, %s169
    %p176 = scmp.eq.s32.totalorder %s18, 5
    %p177 = por %p175, %p176
    %p178 = scmp.ne.s32.totalorder %s169, %s170
    %p179 = scmp.eq.s32.totalorder %s18, 0
    %p180 = por %p178, %p179
    %p181 = scmp.ne.s32.totalorder %s169, %s170
    %p182 = scmp.eq.s32.totalorder %s19, 5
    %p183 = por %p181, %p182
    %p185 = scmp.ne.s32.totalorder %s170, %s184
    %p186 = scmp.eq.s32.totalorder %s19, 0
    %p187 = por %p185, %p186
    %s189 = sadd.s32 %s188, 1
    %p192 = scmp.eq.s32.totalorder %s13, 5
    %p193 = scmp.ne.s32.totalorder %s188, %s190
    %p194 = scmp.eq.s32.totalorder %s13, 0
    %p195 = por %p193, %p194
    %p196 = scmp.ne.s32.totalorder %s188, %s190
    %p197 = scmp.eq.s32.totalorder %s18, 5
    %p198 = por %p196, %p197
    %p199 = scmp.ne.s32.totalorder %s190, %s191
    %p200 = scmp.eq.s32.totalorder %s18, 0
    %p201 = por %p199, %p200
    %p202 = scmp.ne.s32.totalorder %s190, %s191
    %p203 = scmp.eq.s32.totalorder %s19, 5
    %p204 = por %p202, %p203
    %p206 = scmp.ne.s32.totalorder %s191, %s205
    %p207 = scmp.eq.s32.totalorder %s19, 0
    %p208 = por %p206, %p207
    %p209 = scmp.le.s32.totalorder 1, %s13
    %p210 = scmp.lt.s32.totalorder %s13, 7
    %p211 = pnand %p209, %p210
    %p212 = pneg %p211
    // Predicated region
    $region9: #{model_forward.1} parent=5 // pred_check
      _
    $region10: #{model_forward.1} parent=5 // pred_check_branch
      %214 = sbr.rel (%p211) target = $region12
    $region11: #{model_forward.1} parent=5 // pred_region
      %s215 = ssub.s32 %s13, 1
      // Predicated region
      $region13: #{model_forward.1} parent=11 // pred_check
        %p216 = pneg %p138
      $region14: #{model_forward.1} parent=11 // pred_check_branch
        %218 = sbr.rel (%p216) target = $region16
      $region15: #{model_forward.1} parent=11 // pred_region
        _
      $region16: #{model_forward.1} parent=11 // pred_fallthru
        _
      // Predicated region
      $region17: #{model_forward.1} parent=11 // pred_check
        %p219 = pneg %p159
      $region18: #{model_forward.1} parent=11 // pred_check_branch
        %221 = sbr.rel (%p219) target = $region20
      $region19: #{model_forward.1} parent=11 // pred_region
        _
      $region20: #{model_forward.1} parent=11 // pred_fallthru
        _
      // Predicated region
      $region21: #{model_forward.1} parent=11 // pred_check
        %p222 = pneg %p180
      $region22: #{model_forward.1} parent=11 // pred_check_branch
        %224 = sbr.rel (%p222) target = $region24
      $region23: #{model_forward.1} parent=11 // pred_region
        _
      $region24: #{model_forward.1} parent=11 // pred_fallthru
        _
    $region12: #{model_forward.1} parent=5 // pred_fallthru
      _
    %p225 = scmp.lt.s32.totalorder %s13, 6
    // Predicated region
    $region25: #{model_forward.1} parent=5 // pred_check
      %p226 = pneg %p225
    $region26: #{model_forward.1} parent=5 // pred_check_branch
      %228 = sbr.rel (%p226) target = $region28
    $region27: #{model_forward.1} parent=5 // pred_region
      // Predicated region
      $region29: #{model_forward.1} parent=27 // pred_check
        %p229 = pneg %p33
      $region30: #{model_forward.1} parent=27 // pred_check_branch
        %231 = sbr.rel (%p229) target = $region32
      $region31: #{model_forward.1} parent=27 // pred_region
        %p232 = scmp.lt.s32.totalorder %s13, 5
        %s233 = scalar_select %p232, %s13, 5
        %s234 = smul.addr %s233, 72
        %s235 = smul.addr %s234, 4
        %s236 = scalar_lea.vmem %s0, %s235
      $region32: #{model_forward.1} parent=27 // pred_fallthru
        _
      // Predicated region
      $region33: #{model_forward.1} parent=27 // pred_check
        %p237 = pneg %p59
      $region34: #{model_forward.1} parent=27 // pred_check_branch
        %239 = sbr.rel (%p237) target = $region36
      $region35: #{model_forward.1} parent=27 // pred_region
        %p240 = scmp.lt.s32.totalorder %s13, 5
        %s241 = scalar_select %p240, %s13, 5
        %s242 = smul.addr %s241, 144
        %s243 = smul.addr %s242, 4
        %s244 = scalar_lea.vmem %s1, %s243
      $region36: #{model_forward.1} parent=27 // pred_fallthru
        _
      // Predicated region
      $region37: #{model_forward.1} parent=27 // pred_check
        %p245 = pneg %p85
      $region38: #{model_forward.1} parent=27 // pred_check_branch
        %247 = sbr.rel (%p245) target = $region40
      $region39: #{model_forward.1} parent=27 // pred_region
        %p248 = scmp.lt.s32.totalorder %s13, 5
        %s249 = scalar_select %p248, %s13, 5
        %s250 = scalar_lea.vmem %s2, %s249
      $region40: #{model_forward.1} parent=27 // pred_fallthru
        _
      // Predicated region
      $region41: #{model_forward.1} parent=27 // pred_check
        %p251 = pneg %p111
      $region42: #{model_forward.1} parent=27 // pred_check_branch
        %253 = sbr.rel (%p251) target = $region44
      $region43: #{model_forward.1} parent=27 // pred_region
        %p254 = scmp.lt.s32.totalorder %s13, 5
        %s255 = scalar_select %p254, %s13, 5
        %s256 = scalar_lea.vmem %s3, %s255
      $region44: #{model_forward.1} parent=27 // pred_fallthru
        _
    $region28: #{model_forward.1} parent=5 // pred_fallthru
      _
    %p257 = scmp.le.s32.totalorder 1, %s13
    %p258 = scmp.lt.s32.totalorder %s13, 7
    %p259 = pnand %p257, %p258
    %p260 = pneg %p259
    // Predicated region
    $region45: #{model_forward.1} parent=5 // pred_check
      _
    $region46: #{model_forward.1} parent=5 // pred_check_branch
      %262 = sbr.rel (%p259) target = $region48
    $region47: #{model_forward.1} parent=5 // pred_region
      %s263 = ssub.s32 %s13, 1
      %p264 = scmp.lt.s32.totalorder %s18, 5
      %s265 = scalar_select %p264, %s18, 5
      %s266 = smul.addr %s265, 72
      %s267 = smul.addr %s266, 4
      %s268 = scalar_lea.vmem %s0, %s267
      %p269 = pneg %p39
      %p270 = pneg %p36
      %p271 = scmp.lt.s32.totalorder %s18, 5
      %s272 = scalar_select %p271, %s18, 5
      %s273 = smul.addr %s272, 144
      %s274 = smul.addr %s273, 4
      %s275 = scalar_lea.vmem %s1, %s274
      %p276 = pneg %p65
      %p277 = pneg %p62
      %p278 = scmp.lt.s32.totalorder %s18, 5
      %s279 = scalar_select %p278, %s18, 5
      %s280 = scalar_lea.vmem %s2, %s279
      %p281 = pneg %p91
      %p282 = pneg %p88
      %p283 = scmp.lt.s32.totalorder %s18, 5
      %s284 = scalar_select %p283, %s18, 5
      %s285 = scalar_lea.vmem %s3, %s284
      %p286 = pneg %p117
      %p287 = pneg %p114
      %p288 = pneg %p138
      %p289 = pneg %p135
      %p290 = pneg %p159
      %p291 = pneg %p156
      %p292 = pneg %p180
      %p293 = pneg %p177
      %p294 = pneg %p201
      %p295 = pneg %p198
      %p296 = scmp.lt.s32.totalorder %s18, 5
      %s297 = scalar_select %p296, %s18, 5
      %s298 = smul.addr %s297, 72
      %s299 = smul.addr %s298, 4
      %s300 = scalar_lea.vmem %s0, %s299
      %p301 = scmp.lt.s32.totalorder %s18, 5
      %s302 = scalar_select %p301, %s18, 5
      %s303 = smul.addr %s302, 144
      %s304 = smul.addr %s303, 4
      %s305 = scalar_lea.vmem %s1, %s304
      %p306 = scmp.lt.s32.totalorder %s18, 5
      %s307 = scalar_select %p306, %s18, 5
      %s308 = scalar_lea.vmem %s2, %s307
      %p309 = scmp.lt.s32.totalorder %s18, 5
      %s310 = scalar_select %p309, %s18, 5
      %s311 = scalar_lea.vmem %s3, %s310
      %v313 = vld [vmem:[%s300] sm:$0xff]
      %v314 = vld [vmem:[%s300 + $0x8] sm:$0xff]
      %v315 = vld [vmem:[%s300 + $0x10] sm:$0xff]
      %v316 = vld [vmem:[%s300 + $0x18] sm:$0xff]
      %v317 = vld [vmem:[%s300 + $0x20] sm:$0xf]
      %v318 = vld [vmem:[%s300 + $0x24] sm:$0xff]
      %v319 = vld [vmem:[%s300 + $0x2c] sm:$0xff]
      %v320 = vld [vmem:[%s300 + $0x34] sm:$0xff]
      %v321 = vld [vmem:[%s300 + $0x3c] sm:$0xff]
      %v322 = vld [vmem:[%s300 + $0x44] sm:$0xf]
      %v323 = vld [vmem:[%s300 + $0x48] sm:$0xff]
      %v324 = vld [vmem:[%s300 + $0x50] sm:$0xff]
      %v325 = vld [vmem:[%s300 + $0x58] sm:$0xff]
      %v326 = vld [vmem:[%s300 + $0x60] sm:$0xff]
      %v327 = vld [vmem:[%s300 + $0x68] sm:$0xf]
      %v328 = vld [vmem:[%s300 + $0x6c] sm:$0xff]
      %v329 = vld [vmem:[%s300 + $0x74] sm:$0xff]
      %v330 = vld [vmem:[%s300 + $0x7c] sm:$0xff]
      %v331 = vld [vmem:[%s300 + $0x84] sm:$0xff]
      %v332 = vld [vmem:[%s300 + $0x8c] sm:$0xf]
      %v333 = vld [vmem:[%s300 + $0x90] sm:$0xff]
      %v334 = vld [vmem:[%s300 + $0x98] sm:$0xff]
      %v335 = vld [vmem:[%s300 + $0xa0] sm:$0xff]
      %v336 = vld [vmem:[%s300 + $0xa8] sm:$0xff]
      %v337 = vld [vmem:[%s300 + $0xb0] sm:$0xf]
      %v338 = vld [vmem:[%s300 + $0xb4] sm:$0xff]
      %v339 = vld [vmem:[%s300 + $0xbc] sm:$0xff]
      %v340 = vld [vmem:[%s300 + $0xc4] sm:$0xff]
      %v341 = vld [vmem:[%s300 + $0xcc] sm:$0xff]
      %v342 = vld [vmem:[%s300 + $0xd4] sm:$0xf]
      %v343 = vld [vmem:[%s300 + $0xd8] sm:$0xff]
      %v344 = vld [vmem:[%s300 + $0xe0] sm:$0xff]
      %v345 = vld [vmem:[%s300 + $0xe8] sm:$0xff]
      %v346 = vld [vmem:[%s300 + $0xf0] sm:$0xff]
      %v347 = vld [vmem:[%s300 + $0xf8] sm:$0xf]
      %v348 = vld [vmem:[%s300 + $0xfc] sm:$0xff]
      %v349 = vld [vmem:[%s300 + $0x104] sm:$0xff]
      %v350 = vld [vmem:[%s300 + $0x10c] sm:$0xff]
      %v351 = vld [vmem:[%s300 + $0x114] sm:$0xff]
      %v352 = vld [vmem:[%s300 + $0x11c] sm:$0xf]
      %v353 = vld [vmem:[%s305] sm:$0xf]
      %v354 = vld [vmem:[%s305 + $0x4] sm:$0xf]
      %v355 = vld [vmem:[%s305 + $0x8] sm:$0xf]
      %v356 = vld [vmem:[%s305 + $0xc] sm:$0xf]
      %v357 = vld [vmem:[%s305 + $0x10] sm:$0xf]
      %v358 = vld [vmem:[%s305 + $0x14] sm:$0xf]
      %v359 = vld [vmem:[%s305 + $0x18] sm:$0xf]
      %v360 = vld [vmem:[%s305 + $0x1c] sm:$0xf]
      %v361 = vld [vmem:[%s305 + $0x20] sm:$0xf]
      %v362 = vld [vmem:[%s305 + $0x24] sm:$0xf]
      %v363 = vld [vmem:[%s305 + $0x28] sm:$0xf]
      %v364 = vld [vmem:[%s305 + $0x2c] sm:$0xf]
      %v365 = vld [vmem:[%s305 + $0x30] sm:$0xf]
      %v366 = vld [vmem:[%s305 + $0x34] sm:$0xf]
      %v367 = vld [vmem:[%s305 + $0x38] sm:$0xf]
      %v368 = vld [vmem:[%s305 + $0x3c] sm:$0xf]
      %v369 = vld [vmem:[%s305 + $0x40] sm:$0xf]
      %v370 = vld [vmem:[%s305 + $0x44] sm:$0xf]
      %v371 = vld [vmem:[%s305 + $0x48] sm:$0xf]
      %v372 = vld [vmem:[%s305 + $0x4c] sm:$0xf]
      %v373 = vld [vmem:[%s305 + $0x50] sm:$0xf]
      %v374 = vld [vmem:[%s305 + $0x54] sm:$0xf]
      %v375 = vld [vmem:[%s305 + $0x58] sm:$0xf]
      %v376 = vld [vmem:[%s305 + $0x5c] sm:$0xf]
      %v377 = vld [vmem:[%s305 + $0x60] sm:$0xf]
      %v378 = vld [vmem:[%s305 + $0x64] sm:$0xf]
      %v379 = vld [vmem:[%s305 + $0x68] sm:$0xf]
      %v380 = vld [vmem:[%s305 + $0x6c] sm:$0xf]
      %v381 = vld [vmem:[%s305 + $0x70] sm:$0xf]
      %v382 = vld [vmem:[%s305 + $0x74] sm:$0xf]
      %v383 = vld [vmem:[%s305 + $0x78] sm:$0xf]
      %v384 = vld [vmem:[%s305 + $0x7c] sm:$0xf]
      %v385 = vld [vmem:[%s305 + $0x80] sm:$0xf]
      %v386 = vld [vmem:[%s305 + $0x84] sm:$0xf]
      %v387 = vld [vmem:[%s305 + $0x88] sm:$0xf]
      %v388 = vld [vmem:[%s305 + $0x8c] sm:$0xf]
      %v389 = vld [vmem:[%s305 + $0x90] sm:$0xf]
      %v390 = vld [vmem:[%s305 + $0x94] sm:$0xf]
      %v391 = vld [vmem:[%s305 + $0x98] sm:$0xf]
      %v392 = vld [vmem:[%s305 + $0x9c] sm:$0xf]
      %v393 = vld [vmem:[%s305 + $0xa0] sm:$0xf]
      %v394 = vld [vmem:[%s305 + $0xa4] sm:$0xf]
      %v395 = vld [vmem:[%s305 + $0xa8] sm:$0xf]
      %v396 = vld [vmem:[%s305 + $0xac] sm:$0xf]
      %v397 = vld [vmem:[%s305 + $0xb0] sm:$0xf]
      %v398 = vld [vmem:[%s305 + $0xb4] sm:$0xf]
      %v399 = vld [vmem:[%s305 + $0xb8] sm:$0xf]
      %v400 = vld [vmem:[%s305 + $0xbc] sm:$0xf]
      %v401 = vld [vmem:[%s305 + $0xc0] sm:$0xf]
      %v402 = vld [vmem:[%s305 + $0xc4] sm:$0xf]
      %v403 = vld [vmem:[%s305 + $0xc8] sm:$0xf]
      %v404 = vld [vmem:[%s305 + $0xcc] sm:$0xf]
      %v405 = vld [vmem:[%s305 + $0xd0] sm:$0xf]
      %v406 = vld [vmem:[%s305 + $0xd4] sm:$0xf]
      %v407 = vld [vmem:[%s305 + $0xd8] sm:$0xf]
      %v408 = vld [vmem:[%s305 + $0xdc] sm:$0xf]
      %v409 = vld [vmem:[%s305 + $0xe0] sm:$0xf]
      %v410 = vld [vmem:[%s305 + $0xe4] sm:$0xf]
      %v411 = vld [vmem:[%s305 + $0xe8] sm:$0xf]
      %v412 = vld [vmem:[%s305 + $0xec] sm:$0xf]
      %v413 = vld [vmem:[%s305 + $0xf0] sm:$0xf]
      %v414 = vld [vmem:[%s305 + $0xf4] sm:$0xf]
      %v415 = vld [vmem:[%s305 + $0xf8] sm:$0xf]
      %v416 = vld [vmem:[%s305 + $0xfc] sm:$0xf]
      %v417 = vld [vmem:[%s305 + $0x100] sm:$0xf]
      %v418 = vld [vmem:[%s305 + $0x104] sm:$0xf]
      %v419 = vld [vmem:[%s305 + $0x108] sm:$0xf]
      %v420 = vld [vmem:[%s305 + $0x10c] sm:$0xf]
      %v421 = vld [vmem:[%s305 + $0x110] sm:$0xf]
      %v422 = vld [vmem:[%s305 + $0x114] sm:$0xf]
      %v423 = vld [vmem:[%s305 + $0x118] sm:$0xf]
      %v424 = vld [vmem:[%s305 + $0x11c] sm:$0xf]
      %v425 = vld [vmem:[%s305 + $0x120] sm:$0xf]
      %v426 = vld [vmem:[%s305 + $0x124] sm:$0xf]
      %v427 = vld [vmem:[%s305 + $0x128] sm:$0xf]
      %v428 = vld [vmem:[%s305 + $0x12c] sm:$0xf]
      %v429 = vld [vmem:[%s305 + $0x130] sm:$0xf]
      %v430 = vld [vmem:[%s305 + $0x134] sm:$0xf]
      %v431 = vld [vmem:[%s305 + $0x138] sm:$0xf]
      %v432 = vld [vmem:[%s305 + $0x13c] sm:$0xf]
      %v433 = vld [vmem:[%s305 + $0x140] sm:$0xf]
      %v434 = vld [vmem:[%s305 + $0x144] sm:$0xf]
      %v435 = vld [vmem:[%s305 + $0x148] sm:$0xf]
      %v436 = vld [vmem:[%s305 + $0x14c] sm:$0xf]
      %v437 = vld [vmem:[%s305 + $0x150] sm:$0xf]
      %v438 = vld [vmem:[%s305 + $0x154] sm:$0xf]
      %v439 = vld [vmem:[%s305 + $0x158] sm:$0xf]
      %v440 = vld [vmem:[%s305 + $0x15c] sm:$0xf]
      %v441 = vld [vmem:[%s305 + $0x160] sm:$0xf]
      %v442 = vld [vmem:[%s305 + $0x164] sm:$0xf]
      %v443 = vld [vmem:[%s305 + $0x168] sm:$0xf]
      %v444 = vld [vmem:[%s305 + $0x16c] sm:$0xf]
      %v445 = vld [vmem:[%s305 + $0x170] sm:$0xf]
      %v446 = vld [vmem:[%s305 + $0x174] sm:$0xf]
      %v447 = vld [vmem:[%s305 + $0x178] sm:$0xf]
      %v448 = vld [vmem:[%s305 + $0x17c] sm:$0xf]
      %v449 = vld [vmem:[%s305 + $0x180] sm:$0xf]
      %v450 = vld [vmem:[%s305 + $0x184] sm:$0xf]
      %v451 = vld [vmem:[%s305 + $0x188] sm:$0xf]
      %v452 = vld [vmem:[%s305 + $0x18c] sm:$0xf]
      %v453 = vld [vmem:[%s305 + $0x190] sm:$0xf]
      %v454 = vld [vmem:[%s305 + $0x194] sm:$0xf]
      %v455 = vld [vmem:[%s305 + $0x198] sm:$0xf]
      %v456 = vld [vmem:[%s305 + $0x19c] sm:$0xf]
      %v457 = vld [vmem:[%s305 + $0x1a0] sm:$0xf]
      %v458 = vld [vmem:[%s305 + $0x1a4] sm:$0xf]
      %v459 = vld [vmem:[%s305 + $0x1a8] sm:$0xf]
      %v460 = vld [vmem:[%s305 + $0x1ac] sm:$0xf]
      %v461 = vld [vmem:[%s305 + $0x1b0] sm:$0xf]
      %v462 = vld [vmem:[%s305 + $0x1b4] sm:$0xf]
      %v463 = vld [vmem:[%s305 + $0x1b8] sm:$0xf]
      %v464 = vld [vmem:[%s305 + $0x1bc] sm:$0xf]
      %v465 = vld [vmem:[%s305 + $0x1c0] sm:$0xf]
      %v466 = vld [vmem:[%s305 + $0x1c4] sm:$0xf]
      %v467 = vld [vmem:[%s305 + $0x1c8] sm:$0xf]
      %v468 = vld [vmem:[%s305 + $0x1cc] sm:$0xf]
      %v469 = vld [vmem:[%s305 + $0x1d0] sm:$0xf]
      %v470 = vld [vmem:[%s305 + $0x1d4] sm:$0xf]
      %v471 = vld [vmem:[%s305 + $0x1d8] sm:$0xf]
      %v472 = vld [vmem:[%s305 + $0x1dc] sm:$0xf]
      %v473 = vld [vmem:[%s305 + $0x1e0] sm:$0xf]
      %v474 = vld [vmem:[%s305 + $0x1e4] sm:$0xf]
      %v475 = vld [vmem:[%s305 + $0x1e8] sm:$0xf]
      %v476 = vld [vmem:[%s305 + $0x1ec] sm:$0xf]
      %v477 = vld [vmem:[%s305 + $0x1f0] sm:$0xf]
      %v478 = vld [vmem:[%s305 + $0x1f4] sm:$0xf]
      %v479 = vld [vmem:[%s305 + $0x1f8] sm:$0xf]
      %v480 = vld [vmem:[%s305 + $0x1fc] sm:$0xf]
      %v481 = vld [vmem:[%s305 + $0x200] sm:$0xf]
      %v482 = vld [vmem:[%s305 + $0x204] sm:$0xf]
      %v483 = vld [vmem:[%s305 + $0x208] sm:$0xf]
      %v484 = vld [vmem:[%s305 + $0x20c] sm:$0xf]
      %v485 = vld [vmem:[%s305 + $0x210] sm:$0xf]
      %v486 = vld [vmem:[%s305 + $0x214] sm:$0xf]
      %v487 = vld [vmem:[%s305 + $0x218] sm:$0xf]
      %v488 = vld [vmem:[%s305 + $0x21c] sm:$0xf]
      %v489 = vld [vmem:[%s305 + $0x220] sm:$0xf]
      %v490 = vld [vmem:[%s305 + $0x224] sm:$0xf]
      %v491 = vld [vmem:[%s305 + $0x228] sm:$0xf]
      %v492 = vld [vmem:[%s305 + $0x22c] sm:$0xf]
      %v493 = vld [vmem:[%s305 + $0x230] sm:$0xf]
      %v494 = vld [vmem:[%s305 + $0x234] sm:$0xf]
      %v495 = vld [vmem:[%s305 + $0x238] sm:$0xf]
      %v496 = vld [vmem:[%s305 + $0x23c] sm:$0xf]
      %v537 = vunpack.c.l.b16 %v313
      %v538 = vunpack.c.h.b16 %v313
      %v539 = vunpack.c.l.b16 %v314
      %v540 = vunpack.c.h.b16 %v314
      %v541 = vunpack.c.l.b16 %v315
      %v542 = vunpack.c.h.b16 %v315
      %v543 = vunpack.c.l.b16 %v316
      %v544 = vunpack.c.h.b16 %v316
      %v545 = vunpack.c.l.b16 %v317
      %v546 = vunpack.c.l.b16 %v318
      %v547 = vunpack.c.h.b16 %v318
      %v548 = vunpack.c.l.b16 %v319
      %v549 = vunpack.c.h.b16 %v319
      %v550 = vunpack.c.l.b16 %v320
      %v551 = vunpack.c.h.b16 %v320
      %v552 = vunpack.c.l.b16 %v321
      %v553 = vunpack.c.h.b16 %v321
      %v554 = vunpack.c.l.b16 %v322
      %v555 = vunpack.c.l.b16 %v323
      %v556 = vunpack.c.h.b16 %v323
      %v557 = vunpack.c.l.b16 %v324
      %v558 = vunpack.c.h.b16 %v324
      %v559 = vunpack.c.l.b16 %v325
      %v560 = vunpack.c.h.b16 %v325
      %v561 = vunpack.c.l.b16 %v326
      %v562 = vunpack.c.h.b16 %v326
      %v563 = vunpack.c.l.b16 %v327
      %v564 = vunpack.c.l.b16 %v328
      %v565 = vunpack.c.h.b16 %v328
      %v566 = vunpack.c.l.b16 %v329
      %v567 = vunpack.c.h.b16 %v329
      %v568 = vunpack.c.l.b16 %v330
      %v569 = vunpack.c.h.b16 %v330
      %v570 = vunpack.c.l.b16 %v331
      %v571 = vunpack.c.h.b16 %v331
      %v572 = vunpack.c.l.b16 %v332
      %v573 = vunpack.c.l.b16 %v333
      %v574 = vunpack.c.h.b16 %v333
      %v575 = vunpack.c.l.b16 %v334
      %v576 = vunpack.c.h.b16 %v334
      %v577 = vunpack.c.l.b16 %v335
      %v578 = vunpack.c.h.b16 %v335
      %v579 = vunpack.c.l.b16 %v336
      %v580 = vunpack.c.h.b16 %v336
      %v581 = vunpack.c.l.b16 %v337
      %v582 = vunpack.c.l.b16 %v338
      %v583 = vunpack.c.h.b16 %v338
      %v584 = vunpack.c.l.b16 %v339
      %v585 = vunpack.c.h.b16 %v339
      %v586 = vunpack.c.l.b16 %v340
      %v587 = vunpack.c.h.b16 %v340
      %v588 = vunpack.c.l.b16 %v341
      %v589 = vunpack.c.h.b16 %v341
      %v590 = vunpack.c.l.b16 %v342
      %v591 = vunpack.c.l.b16 %v343
      %v592 = vunpack.c.h.b16 %v343
      %v593 = vunpack.c.l.b16 %v344
      %v594 = vunpack.c.h.b16 %v344
      %v595 = vunpack.c.l.b16 %v345
      %v596 = vunpack.c.h.b16 %v345
      %v597 = vunpack.c.l.b16 %v346
      %v598 = vunpack.c.h.b16 %v346
      %v599 = vunpack.c.l.b16 %v347
      %v600 = vunpack.c.l.b16 %v348
      %v601 = vunpack.c.h.b16 %v348
      %v602 = vunpack.c.l.b16 %v349
      %v603 = vunpack.c.h.b16 %v349
      %v604 = vunpack.c.l.b16 %v350
      %v605 = vunpack.c.h.b16 %v350
      %v606 = vunpack.c.l.b16 %v351
      %v607 = vunpack.c.h.b16 %v351
      %v608 = vunpack.c.l.b16 %v352
      %v609 = vpack.c.b16 %v546, %v537
      %v610 = vpack.c.b16 %v547, %v538
      %v611 = vpack.c.b16 %v548, %v539
      %v612 = vpack.c.b16 %v549, %v540
      %v613 = vpack.c.b16 %v550, %v541
      %v614 = vpack.c.b16 %v551, %v542
      %v615 = vpack.c.b16 %v552, %v543
      %v616 = vpack.c.b16 %v553, %v544
      %v617 = vpack.c.b16 %v554, %v545
      %v618 = vpack.c.b16 %v564, %v555
      %v619 = vpack.c.b16 %v565, %v556
      %v620 = vpack.c.b16 %v566, %v557
      %v621 = vpack.c.b16 %v567, %v558
      %v622 = vpack.c.b16 %v568, %v559
      %v623 = vpack.c.b16 %v569, %v560
      %v624 = vpack.c.b16 %v570, %v561
      %v625 = vpack.c.b16 %v571, %v562
      %v626 = vpack.c.b16 %v572, %v563
      %v627 = vpack.c.b16 %v582, %v573
      %v628 = vpack.c.b16 %v583, %v574
      %v629 = vpack.c.b16 %v584, %v575
      %v630 = vpack.c.b16 %v585, %v576
      %v631 = vpack.c.b16 %v586, %v577
      %v632 = vpack.c.b16 %v587, %v578
      %v633 = vpack.c.b16 %v588, %v579
      %v634 = vpack.c.b16 %v589, %v580
      %v635 = vpack.c.b16 %v590, %v581
      %v636 = vpack.c.b16 %v600, %v591
      %v637 = vpack.c.b16 %v601, %v592
      %v638 = vpack.c.b16 %v602, %v593
      %v639 = vpack.c.b16 %v603, %v594
      %v640 = vpack.c.b16 %v604, %v595
      %v641 = vpack.c.b16 %v605, %v596
      %v642 = vpack.c.b16 %v606, %v597
      %v643 = vpack.c.b16 %v607, %v598
      %v644 = vpack.c.b16 %v608, %v599
      %v825 = vunpack.c.l.b16 %v353
      %v826 = vunpack.c.l.b16 %v354
      %v827 = vunpack.c.l.b16 %v355
      %v828 = vunpack.c.l.b16 %v356
      %v829 = vunpack.c.l.b16 %v357
      %v830 = vunpack.c.l.b16 %v358
      %v831 = vunpack.c.l.b16 %v359
      %v832 = vunpack.c.l.b16 %v360
      %v833 = vunpack.c.l.b16 %v361
      %v834 = vunpack.c.l.b16 %v362
      %v835 = vunpack.c.l.b16 %v363
      %v836 = vunpack.c.l.b16 %v364
      %v837 = vunpack.c.l.b16 %v365
      %v838 = vunpack.c.l.b16 %v366
      %v839 = vunpack.c.l.b16 %v367
      %v840 = vunpack.c.l.b16 %v368
      %v841 = vunpack.c.l.b16 %v369
      %v842 = vunpack.c.l.b16 %v370
      %v843 = vunpack.c.l.b16 %v371
      %v844 = vunpack.c.l.b16 %v372
      %v845 = vunpack.c.l.b16 %v373
      %v846 = vunpack.c.l.b16 %v374
      %v847 = vunpack.c.l.b16 %v375
      %v848 = vunpack.c.l.b16 %v376
      %v849 = vunpack.c.l.b16 %v377
      %v850 = vunpack.c.l.b16 %v378
      %v851 = vunpack.c.l.b16 %v379
      %v852 = vunpack.c.l.b16 %v380
      %v853 = vunpack.c.l.b16 %v381
      %v854 = vunpack.c.l.b16 %v382
      %v855 = vunpack.c.l.b16 %v383
      %v856 = vunpack.c.l.b16 %v384
      %v857 = vunpack.c.l.b16 %v385
      %v858 = vunpack.c.l.b16 %v386
      %v859 = vunpack.c.l.b16 %v387
      %v860 = vunpack.c.l.b16 %v388
      %v861 = vunpack.c.l.b16 %v389
      %v862 = vunpack.c.l.b16 %v390
      %v863 = vunpack.c.l.b16 %v391
      %v864 = vunpack.c.l.b16 %v392
      %v865 = vunpack.c.l.b16 %v393
      %v866 = vunpack.c.l.b16 %v394
      %v867 = vunpack.c.l.b16 %v395
      %v868 = vunpack.c.l.b16 %v396
      %v869 = vunpack.c.l.b16 %v397
      %v870 = vunpack.c.l.b16 %v398
      %v871 = vunpack.c.l.b16 %v399
      %v872 = vunpack.c.l.b16 %v400
      %v873 = vunpack.c.l.b16 %v401
      %v874 = vunpack.c.l.b16 %v402
      %v875 = vunpack.c.l.b16 %v403
      %v876 = vunpack.c.l.b16 %v404
      %v877 = vunpack.c.l.b16 %v405
      %v878 = vunpack.c.l.b16 %v406
      %v879 = vunpack.c.l.b16 %v407
      %v880 = vunpack.c.l.b16 %v408
      %v881 = vunpack.c.l.b16 %v409
      %v882 = vunpack.c.l.b16 %v410
      %v883 = vunpack.c.l.b16 %v411
      %v884 = vunpack.c.l.b16 %v412
      %v885 = vunpack.c.l.b16 %v413
      %v886 = vunpack.c.l.b16 %v414
      %v887 = vunpack.c.l.b16 %v415
      %v888 = vunpack.c.l.b16 %v416
      %v889 = vunpack.c.l.b16 %v417
      %v890 = vunpack.c.l.b16 %v418
      %v891 = vunpack.c.l.b16 %v419
      %v892 = vunpack.c.l.b16 %v420
      %v893 = vunpack.c.l.b16 %v421
      %v894 = vunpack.c.l.b16 %v422
      %v895 = vunpack.c.l.b16 %v423
      %v896 = vunpack.c.l.b16 %v424
      %v897 = vunpack.c.l.b16 %v425
      %v898 = vunpack.c.l.b16 %v426
      %v899 = vunpack.c.l.b16 %v427
      %v900 = vunpack.c.l.b16 %v428
      %v901 = vunpack.c.l.b16 %v429
      %v902 = vunpack.c.l.b16 %v430
      %v903 = vunpack.c.l.b16 %v431
      %v904 = vunpack.c.l.b16 %v432
      %v905 = vunpack.c.l.b16 %v433
      %v906 = vunpack.c.l.b16 %v434
      %v907 = vunpack.c.l.b16 %v435
      %v908 = vunpack.c.l.b16 %v436
      %v909 = vunpack.c.l.b16 %v437
      %v910 = vunpack.c.l.b16 %v438
      %v911 = vunpack.c.l.b16 %v439
      %v912 = vunpack.c.l.b16 %v440
      %v913 = vunpack.c.l.b16 %v441
      %v914 = vunpack.c.l.b16 %v442
      %v915 = vunpack.c.l.b16 %v443
      %v916 = vunpack.c.l.b16 %v444
      %v917 = vunpack.c.l.b16 %v445
      %v918 = vunpack.c.l.b16 %v446
      %v919 = vunpack.c.l.b16 %v447
      %v920 = vunpack.c.l.b16 %v448
      %v921 = vunpack.c.l.b16 %v449
      %v922 = vunpack.c.l.b16 %v450
      %v923 = vunpack.c.l.b16 %v451
      %v924 = vunpack.c.l.b16 %v452
      %v925 = vunpack.c.l.b16 %v453
      %v926 = vunpack.c.l.b16 %v454
      %v927 = vunpack.c.l.b16 %v455
      %v928 = vunpack.c.l.b16 %v456
      %v929 = vunpack.c.l.b16 %v457
      %v930 = vunpack.c.l.b16 %v458
      %v931 = vunpack.c.l.b16 %v459
      %v932 = vunpack.c.l.b16 %v460
      %v933 = vunpack.c.l.b16 %v461
      %v934 = vunpack.c.l.b16 %v462
      %v935 = vunpack.c.l.b16 %v463
      %v936 = vunpack.c.l.b16 %v464
      %v937 = vunpack.c.l.b16 %v465
      %v938 = vunpack.c.l.b16 %v466
      %v939 = vunpack.c.l.b16 %v467
      %v940 = vunpack.c.l.b16 %v468
      %v941 = vunpack.c.l.b16 %v469
      %v942 = vunpack.c.l.b16 %v470
      %v943 = vunpack.c.l.b16 %v471
      %v944 = vunpack.c.l.b16 %v472
      %v945 = vunpack.c.l.b16 %v473
      %v946 = vunpack.c.l.b16 %v474
      %v947 = vunpack.c.l.b16 %v475
      %v948 = vunpack.c.l.b16 %v476
      %v949 = vunpack.c.l.b16 %v477
      %v950 = vunpack.c.l.b16 %v478
      %v951 = vunpack.c.l.b16 %v479
      %v952 = vunpack.c.l.b16 %v480
      %v953 = vunpack.c.l.b16 %v481
      %v954 = vunpack.c.l.b16 %v482
      %v955 = vunpack.c.l.b16 %v483
      %v956 = vunpack.c.l.b16 %v484
      %v957 = vunpack.c.l.b16 %v485
      %v958 = vunpack.c.l.b16 %v486
      %v959 = vunpack.c.l.b16 %v487
      %v960 = vunpack.c.l.b16 %v488
      %v961 = vunpack.c.l.b16 %v489
      %v962 = vunpack.c.l.b16 %v490
      %v963 = vunpack.c.l.b16 %v491
      %v964 = vunpack.c.l.b16 %v492
      %v965 = vunpack.c.l.b16 %v493
      %v966 = vunpack.c.l.b16 %v494
      %v967 = vunpack.c.l.b16 %v495
      %v968 = vunpack.c.l.b16 %v496
      %v969 = vpack.c.b16 %v826, %v825
      %v970 = vpack.c.b16 %v828, %v827
      %v971 = vpack.c.b16 %v830, %v829
      %v972 = vpack.c.b16 %v832, %v831
      %v973 = vpack.c.b16 %v834, %v833
      %v974 = vpack.c.b16 %v836, %v835
      %v975 = vpack.c.b16 %v838, %v837
      %v976 = vpack.c.b16 %v840, %v839
      %v977 = vpack.c.b16 %v842, %v841
      %v978 = vpack.c.b16 %v844, %v843
      %v979 = vpack.c.b16 %v846, %v845
      %v980 = vpack.c.b16 %v848, %v847
      %v981 = vpack.c.b16 %v850, %v849
      %v982 = vpack.c.b16 %v852, %v851
      %v983 = vpack.c.b16 %v854, %v853
      %v984 = vpack.c.b16 %v856, %v855
      %v985 = vpack.c.b16 %v858, %v857
      %v986 = vpack.c.b16 %v860, %v859
      %v987 = vpack.c.b16 %v862, %v861
      %v988 = vpack.c.b16 %v864, %v863
      %v989 = vpack.c.b16 %v866, %v865
      %v990 = vpack.c.b16 %v868, %v867
      %v991 = vpack.c.b16 %v870, %v869
      %v992 = vpack.c.b16 %v872, %v871
      %v993 = vpack.c.b16 %v874, %v873
      %v994 = vpack.c.b16 %v876, %v875
      %v995 = vpack.c.b16 %v878, %v877
      %v996 = vpack.c.b16 %v880, %v879
      %v997 = vpack.c.b16 %v882, %v881
      %v998 = vpack.c.b16 %v884, %v883
      %v999 = vpack.c.b16 %v886, %v885
      %v1000 = vpack.c.b16 %v888, %v887
      %v1001 = vpack.c.b16 %v890, %v889
      %v1002 = vpack.c.b16 %v892, %v891
      %v1003 = vpack.c.b16 %v894, %v893
      %v1004 = vpack.c.b16 %v896, %v895
      %v1005 = vpack.c.b16 %v898, %v897
      %v1006 = vpack.c.b16 %v900, %v899
      %v1007 = vpack.c.b16 %v902, %v901
      %v1008 = vpack.c.b16 %v904, %v903
      %v1009 = vpack.c.b16 %v906, %v905
      %v1010 = vpack.c.b16 %v908, %v907
      %v1011 = vpack.c.b16 %v910, %v909
      %v1012 = vpack.c.b16 %v912, %v911
      %v1013 = vpack.c.b16 %v914, %v913
      %v1014 = vpack.c.b16 %v916, %v915
      %v1015 = vpack.c.b16 %v918, %v917
      %v1016 = vpack.c.b16 %v920, %v919
      %v1017 = vpack.c.b16 %v922, %v921
      %v1018 = vpack.c.b16 %v924, %v923
      %v1019 = vpack.c.b16 %v926, %v925
      %v1020 = vpack.c.b16 %v928, %v927
      %v1021 = vpack.c.b16 %v930, %v929
      %v1022 = vpack.c.b16 %v932, %v931
      %v1023 = vpack.c.b16 %v934, %v933
      %v1024 = vpack.c.b16 %v936, %v935
      %v1025 = vpack.c.b16 %v938, %v937
      %v1026 = vpack.c.b16 %v940, %v939
      %v1027 = vpack.c.b16 %v942, %v941
      %v1028 = vpack.c.b16 %v944, %v943
      %v1029 = vpack.c.b16 %v946, %v945
      %v1030 = vpack.c.b16 %v948, %v947
      %v1031 = vpack.c.b16 %v950, %v949
      %v1032 = vpack.c.b16 %v952, %v951
      %v1033 = vpack.c.b16 %v954, %v953
      %v1034 = vpack.c.b16 %v956, %v955
      %v1035 = vpack.c.b16 %v958, %v957
      %v1036 = vpack.c.b16 %v960, %v959
      %v1037 = vpack.c.b16 %v962, %v961
      %v1038 = vpack.c.b16 %v964, %v963
      %v1039 = vpack.c.b16 %v966, %v965
      %v1040 = vpack.c.b16 %v968, %v967
      %1113 = vmatprep.subr.bf16.mxu0 0
      %1114 = vmatpush1.bf16.msra.mxu0 %v976
      %1115 = vmatprep.subr.bf16.mxu0 0
      %1116 = vmatpush1.bf16.msra.mxu0 %v975
      %1117 = vmatprep.subr.bf16.mxu0 0
      %1118 = vmatpush1.bf16.msra.mxu0 %v974
      %1119 = vmatprep.subr.bf16.mxu0 0
      %1120 = vmatpush1.bf16.msra.mxu0 %v973
      %1121 = vmatprep.subr.bf16.mxu0 0
      %1122 = vmatpush1.bf16.msra.mxu0 %v972
      %1123 = vmatprep.subr.bf16.mxu0 0
      %1124 = vmatpush1.bf16.msra.mxu0 %v971
      %1125 = vmatprep.subr.bf16.mxu0 0
      %1126 = vmatpush1.bf16.msra.mxu0 %v970
      %1127 = vmatprep.subr.bf16.mxu0 0
      %1128 = vmatpush1.bf16.msra.mxu0 %v969
      %1129 = vmatprep.subr.bf16.mxu0 0
      %1130 = vmatpush2.bf16.msra.mxu0 %v984
      %1131 = vmatprep.subr.bf16.mxu0 0
      %1132 = vmatpush2.bf16.msra.mxu0 %v983
      %1133 = vmatprep.subr.bf16.mxu0 0
      %1134 = vmatpush2.bf16.msra.mxu0 %v982
      %1135 = vmatprep.subr.bf16.mxu0 0
      %1136 = vmatpush2.bf16.msra.mxu0 %v981
      %1137 = vmatprep.subr.bf16.mxu0 0
      %1138 = vmatpush2.bf16.msra.mxu0 %v980
      %1139 = vmatprep.subr.bf16.mxu0 0
      %1140 = vmatpush2.bf16.msra.mxu0 %v979
      %1141 = vmatprep.subr.bf16.mxu0 0
      %1142 = vmatpush2.bf16.msra.mxu0 %v978
      %1143 = vmatprep.subr.bf16.mxu0 0
      %1144 = vmatpush2.bf16.msra.mxu0 %v977
      %1145 = vmatprep.mubr.bf16.mxu0 %v610
      %1146 = vmatmul.mubr.bf16.gmra.mxu0 %v609
      %v1147 = vpop.f32.mrf.mxu0
      %v1148 = vadd.f32 0.0, %v1147
      %v1149 = vpop.f32.mrf.mxu0
      %v1150 = vpop.f32.mrf.mxu0
      %v1151 = vadd.f32 0.0, %v1150
      %v1152 = vpop.f32.mrf.mxu0
      %1153 = vmatprep.mubr.bf16.mxu0 %v619
      %1154 = vmatmul.mubr.bf16.gmra.mxu0 %v618
      %v1155 = vpop.f32.mrf.mxu0
      %v1156 = vadd.f32 0.0, %v1155
      %v1157 = vpop.f32.mrf.mxu0
      %v1158 = vpop.f32.mrf.mxu0
      %v1159 = vadd.f32 0.0, %v1158
      %v1160 = vpop.f32.mrf.mxu0
      %1161 = vmatprep.mubr.bf16.mxu0 %v628
      %1162 = vmatmul.mubr.bf16.gmra.mxu0 %v627
      %v1163 = vpop.f32.mrf.mxu0
      %v1164 = vadd.f32 0.0, %v1163
      %v1165 = vpop.f32.mrf.mxu0
      %v1166 = vpop.f32.mrf.mxu0
      %v1167 = vadd.f32 0.0, %v1166
      %v1168 = vpop.f32.mrf.mxu0
      %1169 = vmatprep.mubr.bf16.mxu0 %v637
      %1170 = vmatmul.mubr.bf16.gmra.mxu0 %v636
      %v1171 = vpop.f32.mrf.mxu0
      %v1172 = vadd.f32 0.0, %v1171
      %v1173 = vpop.f32.mrf.mxu0
      %v1174 = vpop.f32.mrf.mxu0
      %v1175 = vadd.f32 0.0, %v1174
      %v1176 = vpop.f32.mrf.mxu0
      %1177 = vdwg.mxu0
      %1178 = vmatprep.subr.bf16.mxu0 0
      %1179 = vmatpush1.bf16.msra.mxu0 %v992
      %1180 = vmatprep.subr.bf16.mxu0 0
      %1181 = vmatpush1.bf16.msra.mxu0 %v991
      %1182 = vmatprep.subr.bf16.mxu0 0
      %1183 = vmatpush1.bf16.msra.mxu0 %v990
      %1184 = vmatprep.subr.bf16.mxu0 0
      %1185 = vmatpush1.bf16.msra.mxu0 %v989
      %1186 = vmatprep.subr.bf16.mxu0 0
      %1187 = vmatpush1.bf16.msra.mxu0 %v988
      %1188 = vmatprep.subr.bf16.mxu0 0
      %1189 = vmatpush1.bf16.msra.mxu0 %v987
      %1190 = vmatprep.subr.bf16.mxu0 0
      %1191 = vmatpush1.bf16.msra.mxu0 %v986
      %1192 = vmatprep.subr.bf16.mxu0 0
      %1193 = vmatpush1.bf16.msra.mxu0 %v985
      %1194 = vmatprep.subr.bf16.mxu0 0
      %1195 = vmatpush2.bf16.msra.mxu0 %v1000
      %1196 = vmatprep.subr.bf16.mxu0 0
      %1197 = vmatpush2.bf16.msra.mxu0 %v999
      %1198 = vmatprep.subr.bf16.mxu0 0
      %1199 = vmatpush2.bf16.msra.mxu0 %v998
      %1200 = vmatprep.subr.bf16.mxu0 0
      %1201 = vmatpush2.bf16.msra.mxu0 %v997
      %1202 = vmatprep.subr.bf16.mxu0 0
      %1203 = vmatpush2.bf16.msra.mxu0 %v996
      %1204 = vmatprep.subr.bf16.mxu0 0
      %1205 = vmatpush2.bf16.msra.mxu0 %v995
      %1206 = vmatprep.subr.bf16.mxu0 0
      %1207 = vmatpush2.bf16.msra.mxu0 %v994
      %1208 = vmatprep.subr.bf16.mxu0 0
      %1209 = vmatpush2.bf16.msra.mxu0 %v993
      %1210 = vmatprep.mubr.bf16.mxu0 %v612
      %1211 = vmatmul.mubr.bf16.gmra.mxu0 %v611
      %v1212 = vpop.f32.mrf.mxu0
      %v1213 = vadd.f32 %v1148, %v1212
      %v1214 = vpop.f32.mrf.mxu0
      %v1215 = vpop.f32.mrf.mxu0
      %v1216 = vadd.f32 %v1151, %v1215
      %v1217 = vpop.f32.mrf.mxu0
      %1218 = vmatprep.mubr.bf16.mxu0 %v621
      %1219 = vmatmul.mubr.bf16.gmra.mxu0 %v620
      %v1220 = vpop.f32.mrf.mxu0
      %v1221 = vadd.f32 %v1156, %v1220
      %v1222 = vpop.f32.mrf.mxu0
      %v1223 = vpop.f32.mrf.mxu0
      %v1224 = vadd.f32 %v1159, %v1223
      %v1225 = vpop.f32.mrf.mxu0
      %1226 = vmatprep.mubr.bf16.mxu0 %v630
      %1227 = vmatmul.mubr.bf16.gmra.mxu0 %v629
      %v1228 = vpop.f32.mrf.mxu0
      %v1229 = vadd.f32 %v1164, %v1228
      %v1230 = vpop.f32.mrf.mxu0
      %v1231 = vpop.f32.mrf.mxu0
      %v1232 = vadd.f32 %v1167, %v1231
      %v1233 = vpop.f32.mrf.mxu0
      %1234 = vmatprep.mubr.bf16.mxu0 %v639
      %1235 = vmatmul.mubr.bf16.gmra.mxu0 %v638
      %v1236 = vpop.f32.mrf.mxu0
      %v1237 = vadd.f32 %v1172, %v1236
      %v1238 = vpop.f32.mrf.mxu0
      %v1239 = vpop.f32.mrf.mxu0
      %v1240 = vadd.f32 %v1175, %v1239
      %v1241 = vpop.f32.mrf.mxu0
      %1242 = vdwg.mxu0
      %1243 = vmatprep.subr.bf16.mxu0 0
      %1244 = vmatpush1.bf16.msra.mxu0 %v1008
      %1245 = vmatprep.subr.bf16.mxu0 0
      %1246 = vmatpush1.bf16.msra.mxu0 %v1007
      %1247 = vmatprep.subr.bf16.mxu0 0
      %1248 = vmatpush1.bf16.msra.mxu0 %v1006
      %1249 = vmatprep.subr.bf16.mxu0 0
      %1250 = vmatpush1.bf16.msra.mxu0 %v1005
      %1251 = vmatprep.subr.bf16.mxu0 0
      %1252 = vmatpush1.bf16.msra.mxu0 %v1004
      %1253 = vmatprep.subr.bf16.mxu0 0
      %1254 = vmatpush1.bf16.msra.mxu0 %v1003
      %1255 = vmatprep.subr.bf16.mxu0 0
      %1256 = vmatpush1.bf16.msra.mxu0 %v1002
      %1257 = vmatprep.subr.bf16.mxu0 0
      %1258 = vmatpush1.bf16.msra.mxu0 %v1001
      %1259 = vmatprep.subr.bf16.mxu0 0
      %1260 = vmatpush2.bf16.msra.mxu0 %v1016
      %1261 = vmatprep.subr.bf16.mxu0 0
      %1262 = vmatpush2.bf16.msra.mxu0 %v1015
      %1263 = vmatprep.subr.bf16.mxu0 0
      %1264 = vmatpush2.bf16.msra.mxu0 %v1014
      %1265 = vmatprep.subr.bf16.mxu0 0
      %1266 = vmatpush2.bf16.msra.mxu0 %v1013
      %1267 = vmatprep.subr.bf16.mxu0 0
      %1268 = vmatpush2.bf16.msra.mxu0 %v1012
      %1269 = vmatprep.subr.bf16.mxu0 0
      %1270 = vmatpush2.bf16.msra.mxu0 %v1011
      %1271 = vmatprep.subr.bf16.mxu0 0
      %1272 = vmatpush2.bf16.msra.mxu0 %v1010
      %1273 = vmatprep.subr.bf16.mxu0 0
      %1274 = vmatpush2.bf16.msra.mxu0 %v1009
      %1275 = vmatprep.mubr.bf16.mxu0 %v614
      %1276 = vmatmul.mubr.bf16.gmra.mxu0 %v613
      %v1277 = vpop.f32.mrf.mxu0
      %v1278 = vadd.f32 %v1213, %v1277
      %v1279 = vpop.f32.mrf.mxu0
      %v1280 = vpop.f32.mrf.mxu0
      %v1281 = vadd.f32 %v1216, %v1280
      %v1282 = vpop.f32.mrf.mxu0
      %1283 = vmatprep.mubr.bf16.mxu0 %v623
      %1284 = vmatmul.mubr.bf16.gmra.mxu0 %v622
      %v1285 = vpop.f32.mrf.mxu0
      %v1286 = vadd.f32 %v1221, %v1285
      %v1287 = vpop.f32.mrf.mxu0
      %v1288 = vpop.f32.mrf.mxu0
      %v1289 = vadd.f32 %v1224, %v1288
      %v1290 = vpop.f32.mrf.mxu0
      %1291 = vmatprep.mubr.bf16.mxu0 %v632
      %1292 = vmatmul.mubr.bf16.gmra.mxu0 %v631
      %v1293 = vpop.f32.mrf.mxu0
      %v1294 = vadd.f32 %v1229, %v1293
      %v1295 = vpop.f32.mrf.mxu0
      %v1296 = vpop.f32.mrf.mxu0
      %v1297 = vadd.f32 %v1232, %v1296
      %v1298 = vpop.f32.mrf.mxu0
      %1299 = vmatprep.mubr.bf16.mxu0 %v641
      %1300 = vmatmul.mubr.bf16.gmra.mxu0 %v640
      %v1301 = vpop.f32.mrf.mxu0
      %v1302 = vadd.f32 %v1237, %v1301
      %v1303 = vpop.f32.mrf.mxu0
      %v1304 = vpop.f32.mrf.mxu0
      %v1305 = vadd.f32 %v1240, %v1304
      %v1306 = vpop.f32.mrf.mxu0
      %1307 = vdwg.mxu0
      %1308 = vmatprep.subr.bf16.mxu0 0
      %1309 = vmatpush1.bf16.msra.mxu0 %v1024
      %1310 = vmatprep.subr.bf16.mxu0 0
      %1311 = vmatpush1.bf16.msra.mxu0 %v1023
      %1312 = vmatprep.subr.bf16.mxu0 0
      %1313 = vmatpush1.bf16.msra.mxu0 %v1022
      %1314 = vmatprep.subr.bf16.mxu0 0
      %1315 = vmatpush1.bf16.msra.mxu0 %v1021
      %1316 = vmatprep.subr.bf16.mxu0 0
      %1317 = vmatpush1.bf16.msra.mxu0 %v1020
      %1318 = vmatprep.subr.bf16.mxu0 0
      %1319 = vmatpush1.bf16.msra.mxu0 %v1019
      %1320 = vmatprep.subr.bf16.mxu0 0
      %1321 = vmatpush1.bf16.msra.mxu0 %v1018
      %1322 = vmatprep.subr.bf16.mxu0 0
      %1323 = vmatpush1.bf16.msra.mxu0 %v1017
      %1324 = vmatprep.subr.bf16.mxu0 0
      %1325 = vmatpush2.bf16.msra.mxu0 %v1032
      %1326 = vmatprep.subr.bf16.mxu0 0
      %1327 = vmatpush2.bf16.msra.mxu0 %v1031
      %1328 = vmatprep.subr.bf16.mxu0 0
      %1329 = vmatpush2.bf16.msra.mxu0 %v1030
      %1330 = vmatprep.subr.bf16.mxu0 0
      %1331 = vmatpush2.bf16.msra.mxu0 %v1029
      %1332 = vmatprep.subr.bf16.mxu0 0
      %1333 = vmatpush2.bf16.msra.mxu0 %v1028
      %1334 = vmatprep.subr.bf16.mxu0 0
      %1335 = vmatpush2.bf16.msra.mxu0 %v1027
      %1336 = vmatprep.subr.bf16.mxu0 0
      %1337 = vmatpush2.bf16.msra.mxu0 %v1026
      %1338 = vmatprep.subr.bf16.mxu0 0
      %1339 = vmatpush2.bf16.msra.mxu0 %v1025
      %1340 = vmatprep.mubr.bf16.mxu0 %v616
      %1341 = vmatmul.mubr.bf16.gmra.mxu0 %v615
      %v1342 = vpop.f32.mrf.mxu0
      %v1343 = vadd.f32 %v1278, %v1342
      %v1344 = vpop.f32.mrf.mxu0
      %v1345 = vpop.f32.mrf.mxu0
      %v1346 = vadd.f32 %v1281, %v1345
      %v1347 = vpop.f32.mrf.mxu0
      %1348 = vmatprep.mubr.bf16.mxu0 %v625
      %1349 = vmatmul.mubr.bf16.gmra.mxu0 %v624
      %v1350 = vpop.f32.mrf.mxu0
      %v1351 = vadd.f32 %v1286, %v1350
      %v1352 = vpop.f32.mrf.mxu0
      %v1353 = vpop.f32.mrf.mxu0
      %v1354 = vadd.f32 %v1289, %v1353
      %v1355 = vpop.f32.mrf.mxu0
      %1356 = vmatprep.mubr.bf16.mxu0 %v634
      %1357 = vmatmul.mubr.bf16.gmra.mxu0 %v633
      %v1358 = vpop.f32.mrf.mxu0
      %v1359 = vadd.f32 %v1294, %v1358
      %v1360 = vpop.f32.mrf.mxu0
      %v1361 = vpop.f32.mrf.mxu0
      %v1362 = vadd.f32 %v1297, %v1361
      %v1363 = vpop.f32.mrf.mxu0
      %1364 = vmatprep.mubr.bf16.mxu0 %v643
      %1365 = vmatmul.mubr.bf16.gmra.mxu0 %v642
      %v1366 = vpop.f32.mrf.mxu0
      %v1367 = vadd.f32 %v1302, %v1366
      %v1368 = vpop.f32.mrf.mxu0
      %v1369 = vpop.f32.mrf.mxu0
      %v1370 = vadd.f32 %v1305, %v1369
      %v1371 = vpop.f32.mrf.mxu0
      %1372 = vdwg.mxu0
      %1373 = vmatprep.subr.bf16.mxu0 0
      %1374 = vmatpush1.bf16.msra.mxu0 %v1040
      %1375 = vmatprep.subr.bf16.mxu0 0
      %1376 = vmatpush1.bf16.msra.mxu0 %v1039
      %1377 = vmatprep.subr.bf16.mxu0 0
      %1378 = vmatpush1.bf16.msra.mxu0 %v1038
      %1379 = vmatprep.subr.bf16.mxu0 0
      %1380 = vmatpush1.bf16.msra.mxu0 %v1037
      %1381 = vmatprep.subr.bf16.mxu0 0
      %1382 = vmatpush1.bf16.msra.mxu0 %v1036
      %1383 = vmatprep.subr.bf16.mxu0 0
      %1384 = vmatpush1.bf16.msra.mxu0 %v1035
      %1385 = vmatprep.subr.bf16.mxu0 0
      %1386 = vmatpush1.bf16.msra.mxu0 %v1034
      %1387 = vmatprep.subr.bf16.mxu0 0
      %1388 = vmatpush1.bf16.msra.mxu0 %v1033
      %1389 = vmatprep.subr.bf16.mxu0 0
      %1390 = vmatpush2.bf16.msra.mxu0 0
      %1391 = vmatprep.subr.bf16.mxu0 0
      %1392 = vmatpush2.bf16.msra.mxu0 0
      %1393 = vmatprep.subr.bf16.mxu0 0
      %1394 = vmatpush2.bf16.msra.mxu0 0
      %1395 = vmatprep.subr.bf16.mxu0 0
      %1396 = vmatpush2.bf16.msra.mxu0 0
      %1397 = vmatprep.subr.bf16.mxu0 0
      %1398 = vmatpush2.bf16.msra.mxu0 0
      %1399 = vmatprep.subr.bf16.mxu0 0
      %1400 = vmatpush2.bf16.msra.mxu0 0
      %1401 = vmatprep.subr.bf16.mxu0 0
      %1402 = vmatpush2.bf16.msra.mxu0 0
      %1403 = vmatprep.subr.bf16.mxu0 0
      %1404 = vmatpush2.bf16.msra.mxu0 0
      %1405 = vmatprep.mubr.bf16.mxu0 0
      %1406 = vmatmul.mubr.bf16.gmra.mxu0 %v617
      %v1407 = vpop.f32.mrf.mxu0
      %v1408 = vadd.f32 %v1343, %v1407
      %v1409 = vpop.f32.mrf.mxu0
      %v1410 = vpop.f32.mrf.mxu0
      %v1411 = vadd.f32 %v1346, %v1410
      %v1412 = vpop.f32.mrf.mxu0
      %1413 = vmatprep.mubr.bf16.mxu0 0
      %1414 = vmatmul.mubr.bf16.gmra.mxu0 %v626
      %v1415 = vpop.f32.mrf.mxu0
      %v1416 = vadd.f32 %v1351, %v1415
      %v1417 = vpop.f32.mrf.mxu0
      %v1418 = vpop.f32.mrf.mxu0
      %v1419 = vadd.f32 %v1354, %v1418
      %v1420 = vpop.f32.mrf.mxu0
      %1421 = vmatprep.mubr.bf16.mxu0 0
      %1422 = vmatmul.mubr.bf16.gmra.mxu0 %v635
      %v1423 = vpop.f32.mrf.mxu0
      %v1424 = vadd.f32 %v1359, %v1423
      %v1425 = vpop.f32.mrf.mxu0
      %v1426 = vpop.f32.mrf.mxu0
      %v1427 = vadd.f32 %v1362, %v1426
      %v1428 = vpop.f32.mrf.mxu0
      %1429 = vmatprep.mubr.bf16.mxu0 0
      %1430 = vmatmul.mubr.bf16.gmra.mxu0 %v644
      %v1431 = vpop.f32.mrf.mxu0
      %v1432 = vadd.f32 %v1367, %v1431
      %v1433 = vpop.f32.mrf.mxu0
      %v1434 = vpop.f32.mrf.mxu0
      %v1435 = vadd.f32 %v1370, %v1434
      %v1436 = vpop.f32.mrf.mxu0
      %1437 = vdwg.mxu0
      %v1438 = vadd.f32 %v1408, %v1411
      %v1439 = vadd.f32 %v1438, %v1416
      %v1440 = vadd.f32 %v1439, %v1419
      %v1441 = vadd.f32 %v1440, %v1424
      %v1442 = vadd.f32 %v1441, %v1427
      %v1443 = vadd.f32 %v1442, %v1432
      %v1444 = vadd.f32 %v1443, %v1435
      %v1445 = vrot.slane %v1444, 4
      %v1446 = vadd.f32 %v1444, %v1445
      %v1447 = vrot.slane %v1446, 2
      %v1448 = vadd.f32 %v1446, %v1447
      %v1449 = vrot.slane %v1448, 1
      %v1450 = vadd.f32 %v1448, %v1449
      %v1451 = vmul.f32 %v1450, 0.020408163
      %v1452 = vmul.f32 %v1408, %v1408
      %v1453 = vmul.f32 %v1411, %v1411
      %v1454 = vmul.f32 %v1416, %v1416
      %v1455 = vmul.f32 %v1419, %v1419
      %v1456 = vmul.f32 %v1424, %v1424
      %v1457 = vmul.f32 %v1427, %v1427
      %v1458 = vmul.f32 %v1432, %v1432
      %v1459 = vmul.f32 %v1435, %v1435
      %v1460 = vadd.f32 %v1452, %v1453
      %v1461 = vadd.f32 %v1460, %v1454
      %v1462 = vadd.f32 %v1461, %v1455
      %v1463 = vadd.f32 %v1462, %v1456
      %v1464 = vadd.f32 %v1463, %v1457
      %v1465 = vadd.f32 %v1464, %v1458
      %v1466 = vadd.f32 %v1465, %v1459
      %v1467 = vrot.slane %v1466, 4
      %v1468 = vadd.f32 %v1466, %v1467
      %v1469 = vrot.slane %v1468, 2
      %v1470 = vadd.f32 %v1468, %v1469
      %v1471 = vrot.slane %v1470, 1
      %v1472 = vadd.f32 %v1470, %v1471
      %v1473 = vmul.f32 %v1472, 0.020408163
      %v1474 = vld [vmem:[%s308] sm:$0x1]
      %v1475 = vmul.f32 %v1451, %v1451
      %v1476 = vsub.f32 %v1473, %v1475
      %v1477 = vadd.f32 %v1476, 1e-05
      %v1478 = vrsqrt.pop %v1477
      %v1479 = vmul.f32 %v1474, %v1478
      %v1481 = vlaneseq
      %v1482 = vshrl.u32 %v1481, 7
      %v1483 = vsub.s32 0, %v1482
      %v1484 = vrot.slane %v1479, %v1483
      %v1486 = vmul.f32 %v1408, %v1484
      %v1487 = vmul.f32 %v1411, %v1484
      %v1488 = vmul.f32 %v1416, %v1484
      %v1489 = vmul.f32 %v1419, %v1484
      %v1490 = vmul.f32 %v1424, %v1484
      %v1491 = vmul.f32 %v1427, %v1484
      %v1492 = vmul.f32 %v1432, %v1484
      %v1493 = vmul.f32 %v1435, %v1484
      %v1494 = vld [vmem:[%s311] sm:$0x1]
      %v1495 = vmul.f32 %v1451, %v1479
      %v1496 = vsub.f32 %v1494, %v1495
      %v1498 = vlaneseq
      %v1499 = vshrl.u32 %v1498, 7
      %v1500 = vsub.s32 0, %v1499
      %v1501 = vrot.slane %v1496, %v1500
      %v1503 = vadd.f32 %v1486, %v1501
      %v1504 = vadd.f32 %v1487, %v1501
      %v1505 = vadd.f32 %v1488, %v1501
      %v1506 = vadd.f32 %v1489, %v1501
      %v1507 = vadd.f32 %v1490, %v1501
      %v1508 = vadd.f32 %v1491, %v1501
      %v1509 = vadd.f32 %v1492, %v1501
      %v1510 = vadd.f32 %v1493, %v1501
      %v1511 = vmax.f32 %v1503, 0.0
      %v1512 = vmax.f32 %v1504, 0.0
      %v1513 = vmax.f32 %v1505, 0.0
      %v1514 = vmax.f32 %v1506, 0.0
      %v1515 = vmax.f32 %v1507, 0.0
      %v1516 = vmax.f32 %v1508, 0.0
      %v1517 = vmax.f32 %v1509, 0.0
      %v1518 = vmax.f32 %v1510, 0.0
      %v1519 = vlaneseq
      %v1520 = vshrl.u32 %v1519, 7
      %v1521 = vadd.s32 %v1520, 8
      %v1522 = vadd.s32 %v1520, 16
      %v1523 = vadd.s32 %v1520, 24
      %v1524 = vadd.s32 %v1520, 32
      %v1525 = vadd.s32 %v1520, 40
      %v1526 = vadd.s32 %v1520, 48
      %v1527 = vadd.s32 %v1520, 56
      %vm1528 = vcmp.lt.s32.totalorder %v1520, 49
      %vm1529 = vcmp.lt.s32.totalorder %v1521, 49
      %vm1530 = vcmp.lt.s32.totalorder %v1522, 49
      %vm1531 = vcmp.lt.s32.totalorder %v1523, 49
      %vm1532 = vcmp.lt.s32.totalorder %v1524, 49
      %vm1533 = vcmp.lt.s32.totalorder %v1525, 49
      %vm1534 = vcmp.lt.s32.totalorder %v1526, 49
      %vm1535 = vcmp.lt.s32.totalorder %v1527, 49
      %v1536 = vsel %vm1528, 1, 0
      %v1537 = vsel %vm1529, 1, 0
      %v1538 = vsel %vm1530, 1, 0
      %v1539 = vsel %vm1531, 1, 0
      %v1540 = vsel %vm1532, 1, 0
      %v1541 = vsel %vm1533, 1, 0
      %v1542 = vsel %vm1534, 1, 0
      %v1543 = vsel %vm1535, 1, 0
      %vm1544 = vcmp.eq.s32.totalorder %v1536, 1
      %vm1545 = vcmp.eq.s32.totalorder %v1537, 1
      %vm1546 = vcmp.eq.s32.totalorder %v1538, 1
      %vm1547 = vcmp.eq.s32.totalorder %v1539, 1
      %vm1548 = vcmp.eq.s32.totalorder %v1540, 1
      %vm1549 = vcmp.eq.s32.totalorder %v1541, 1
      %vm1550 = vcmp.eq.s32.totalorder %v1542, 1
      %vm1551 = vcmp.eq.s32.totalorder %v1543, 1
      %v1552 = vsel %vm1544, %v1511, 0.0
      %v1553 = vsel %vm1545, %v1512, 0.0
      %v1554 = vsel %vm1546, %v1513, 0.0
      %v1555 = vsel %vm1547, %v1514, 0.0
      %v1556 = vsel %vm1548, %v1515, 0.0
      %v1557 = vsel %vm1549, %v1516, 0.0
      %v1558 = vsel %vm1550, %v1517, 0.0
      %v1559 = vsel %vm1551, %v1518, 0.0
      %v1560 = vpack.c.bf16 %v1553, %v1552
      %v1561 = vpack.c.bf16 %v1555, %v1554
      %v1562 = vpack.c.bf16 %v1557, %v1556
      %v1563 = vpack.c.bf16 %v1559, %v1558
      %v1568 = vunpack.c.l.b16 %v1560
      %v1569 = vunpack.c.h.b16 %v1560
      %v1570 = vunpack.c.l.b16 %v1561
      %v1571 = vunpack.c.h.b16 %v1561
      %v1572 = vunpack.c.l.b16 %v1562
      %v1573 = vunpack.c.h.b16 %v1562
      %v1574 = vunpack.c.l.b16 %v1563
      %v1575 = vunpack.c.h.b16 %v1563
      %v1576 = vpack.c.b16 %v1568, %v1568
      %v1577 = vpack.c.b16 %v1569, %v1569
      %v1578 = vpack.c.b16 %v1570, %v1570
      %v1579 = vpack.c.b16 %v1571, %v1571
      %v1580 = vpack.c.b16 %v1572, %v1572
      %v1581 = vpack.c.b16 %v1573, %v1573
      %v1582 = vpack.c.b16 %v1574, %v1574
      %v1583 = vpack.c.b16 %v1575, %v1575
      %s1592 = smul.u32 %s18, 8
      %s1593 = smul.addr %s1592, 4
      %s1594 = scalar_lea.vmem [#allocation2], %s1593
      %1595 = vst [vmem:[%s1594] sm:$0xf] %v1576
      %1596 = vst [vmem:[%s1594 + $0x4] sm:$0xf] %v1577
      %1597 = vst [vmem:[%s1594 + $0x8] sm:$0xf] %v1578
      %1598 = vst [vmem:[%s1594 + $0xc] sm:$0xf] %v1579
      %1599 = vst [vmem:[%s1594 + $0x10] sm:$0xf] %v1580
      %1600 = vst [vmem:[%s1594 + $0x14] sm:$0xf] %v1581
      %1601 = vst [vmem:[%s1594 + $0x18] sm:$0xf] %v1582
      %1602 = vst [vmem:[%s1594 + $0x1c] sm:$0xf] %v1583
      %p1603 = scmp.eq.s32.totalorder %s18, 5
      // Predicated region
      $region49: #{model_forward.1} parent=47 // pred_check
        %p1604 = pneg %p1603
      $region50: #{model_forward.1} parent=47 // pred_check_branch
        %1606 = sbr.rel (%p1604) target = $region52
      $region51: #{model_forward.1} parent=47 // pred_region
        %v1607 = vld [vmem:[#allocation2] sm:$0xf]
        %v1608 = vld [vmem:[#allocation2 + $0x4] sm:$0xf]
        %v1609 = vld [vmem:[#allocation2 + $0x8] sm:$0xf]
        %v1610 = vld [vmem:[#allocation2 + $0xc] sm:$0xf]
        %v1611 = vld [vmem:[#allocation2 + $0x10] sm:$0xf]
        %v1612 = vld [vmem:[#allocation2 + $0x14] sm:$0xf]
        %v1613 = vld [vmem:[#allocation2 + $0x18] sm:$0xf]
        %v1614 = vld [vmem:[#allocation2 + $0x1c] sm:$0xf]
        %s1615 = scalar_lea.vmem [#allocation2], 32
        %v1616 = vld [vmem:[%s1615] sm:$0xf]
        %v1617 = vld [vmem:[%s1615 + $0x4] sm:$0xf]
        %v1618 = vld [vmem:[%s1615 + $0x8] sm:$0xf]
        %v1619 = vld [vmem:[%s1615 + $0xc] sm:$0xf]
        %v1620 = vld [vmem:[%s1615 + $0x10] sm:$0xf]
        %v1621 = vld [vmem:[%s1615 + $0x14] sm:$0xf]
        %v1622 = vld [vmem:[%s1615 + $0x18] sm:$0xf]
        %v1623 = vld [vmem:[%s1615 + $0x1c] sm:$0xf]
        %s1624 = scalar_lea.vmem [#allocation2], 64
        %v1625 = vld [vmem:[%s1624] sm:$0xf]
        %v1626 = vld [vmem:[%s1624 + $0x4] sm:$0xf]
        %v1627 = vld [vmem:[%s1624 + $0x8] sm:$0xf]
        %v1628 = vld [vmem:[%s1624 + $0xc] sm:$0xf]
        %v1629 = vld [vmem:[%s1624 + $0x10] sm:$0xf]
        %v1630 = vld [vmem:[%s1624 + $0x14] sm:$0xf]
        %v1631 = vld [vmem:[%s1624 + $0x18] sm:$0xf]
        %v1632 = vld [vmem:[%s1624 + $0x1c] sm:$0xf]
        %s1633 = scalar_lea.vmem [#allocation2], 96
        %v1634 = vld [vmem:[%s1633] sm:$0xf]
        %v1635 = vld [vmem:[%s1633 + $0x4] sm:$0xf]
        %v1636 = vld [vmem:[%s1633 + $0x8] sm:$0xf]
        %v1637 = vld [vmem:[%s1633 + $0xc] sm:$0xf]
        %v1638 = vld [vmem:[%s1633 + $0x10] sm:$0xf]
        %v1639 = vld [vmem:[%s1633 + $0x14] sm:$0xf]
        %v1640 = vld [vmem:[%s1633 + $0x18] sm:$0xf]
        %v1641 = vld [vmem:[%s1633 + $0x1c] sm:$0xf]
        %s1642 = scalar_lea.vmem [#allocation2], 128
        %v1643 = vld [vmem:[%s1642] sm:$0xf]
        %v1644 = vld [vmem:[%s1642 + $0x4] sm:$0xf]
        %v1645 = vld [vmem:[%s1642 + $0x8] sm:$0xf]
        %v1646 = vld [vmem:[%s1642 + $0xc] sm:$0xf]
        %v1647 = vld [vmem:[%s1642 + $0x10] sm:$0xf]
        %v1648 = vld [vmem:[%s1642 + $0x14] sm:$0xf]
        %v1649 = vld [vmem:[%s1642 + $0x18] sm:$0xf]
        %v1650 = vld [vmem:[%s1642 + $0x1c] sm:$0xf]
        %s1651 = scalar_lea.vmem [#allocation2], 160
        %v1652 = vld [vmem:[%s1651] sm:$0xf]
        %v1653 = vld [vmem:[%s1651 + $0x4] sm:$0xf]
        %v1654 = vld [vmem:[%s1651 + $0x8] sm:$0xf]
        %v1655 = vld [vmem:[%s1651 + $0xc] sm:$0xf]
        %v1656 = vld [vmem:[%s1651 + $0x10] sm:$0xf]
        %v1657 = vld [vmem:[%s1651 + $0x14] sm:$0xf]
        %v1658 = vld [vmem:[%s1651 + $0x18] sm:$0xf]
        %v1659 = vld [vmem:[%s1651 + $0x1c] sm:$0xf]
        %v1668 = vunpack.c.l.b16 %v1607
        %v1669 = vunpack.c.l.b16 %v1608
        %v1670 = vunpack.c.l.b16 %v1609
        %v1671 = vunpack.c.l.b16 %v1610
        %v1672 = vunpack.c.l.b16 %v1611
        %v1673 = vunpack.c.l.b16 %v1612
        %v1674 = vunpack.c.l.b16 %v1613
        %v1675 = vunpack.c.l.b16 %v1614
        %v1676 = vpack.c.b16 %v1669, %v1668
        %v1677 = vpack.c.b16 %v1671, %v1670
        %v1678 = vpack.c.b16 %v1673, %v1672
        %v1679 = vpack.c.b16 %v1675, %v1674
        %v1692 = vunpack.c.l.b16 %v1616
        %v1693 = vunpack.c.l.b16 %v1617
        %v1694 = vunpack.c.l.b16 %v1618
        %v1695 = vunpack.c.l.b16 %v1619
        %v1696 = vunpack.c.l.b16 %v1620
        %v1697 = vunpack.c.l.b16 %v1621
        %v1698 = vunpack.c.l.b16 %v1622
        %v1699 = vunpack.c.l.b16 %v1623
        %v1700 = vpack.c.b16 %v1693, %v1692
        %v1701 = vpack.c.b16 %v1695, %v1694
        %v1702 = vpack.c.b16 %v1697, %v1696
        %v1703 = vpack.c.b16 %v1699, %v1698
        %v1716 = vunpack.c.l.b16 %v1625
        %v1717 = vunpack.c.l.b16 %v1626
        %v1718 = vunpack.c.l.b16 %v1627
        %v1719 = vunpack.c.l.b16 %v1628
        %v1720 = vunpack.c.l.b16 %v1629
        %v1721 = vunpack.c.l.b16 %v1630
        %v1722 = vunpack.c.l.b16 %v1631
        %v1723 = vunpack.c.l.b16 %v1632
        %v1724 = vpack.c.b16 %v1717, %v1716
        %v1725 = vpack.c.b16 %v1719, %v1718
        %v1726 = vpack.c.b16 %v1721, %v1720
        %v1727 = vpack.c.b16 %v1723, %v1722
        %v1740 = vunpack.c.l.b16 %v1634
        %v1741 = vunpack.c.l.b16 %v1635
        %v1742 = vunpack.c.l.b16 %v1636
        %v1743 = vunpack.c.l.b16 %v1637
        %v1744 = vunpack.c.l.b16 %v1638
        %v1745 = vunpack.c.l.b16 %v1639
        %v1746 = vunpack.c.l.b16 %v1640
        %v1747 = vunpack.c.l.b16 %v1641
        %v1748 = vpack.c.b16 %v1741, %v1740
        %v1749 = vpack.c.b16 %v1743, %v1742
        %v1750 = vpack.c.b16 %v1745, %v1744
        %v1751 = vpack.c.b16 %v1747, %v1746
        %v1764 = vunpack.c.l.b16 %v1643
        %v1765 = vunpack.c.l.b16 %v1644
        %v1766 = vunpack.c.l.b16 %v1645
        %v1767 = vunpack.c.l.b16 %v1646
        %v1768 = vunpack.c.l.b16 %v1647
        %v1769 = vunpack.c.l.b16 %v1648
        %v1770 = vunpack.c.l.b16 %v1649
        %v1771 = vunpack.c.l.b16 %v1650
        %v1772 = vpack.c.b16 %v1765, %v1764
        %v1773 = vpack.c.b16 %v1767, %v1766
        %v1774 = vpack.c.b16 %v1769, %v1768
        %v1775 = vpack.c.b16 %v1771, %v1770
        %v1788 = vunpack.c.l.b16 %v1652
        %v1789 = vunpack.c.l.b16 %v1653
        %v1790 = vunpack.c.l.b16 %v1654
        %v1791 = vunpack.c.l.b16 %v1655
        %v1792 = vunpack.c.l.b16 %v1656
        %v1793 = vunpack.c.l.b16 %v1657
        %v1794 = vunpack.c.l.b16 %v1658
        %v1795 = vunpack.c.l.b16 %v1659
        %v1796 = vpack.c.b16 %v1789, %v1788
        %v1797 = vpack.c.b16 %v1791, %v1790
        %v1798 = vpack.c.b16 %v1793, %v1792
        %v1799 = vpack.c.b16 %v1795, %v1794
        %v1804 = vld [vmem:[%s4] sm:$0xff]
        %v1805 = vld [vmem:[%s4 + $0x8] sm:$0xff]
        %v1806 = vld [vmem:[%s4 + $0x10] sm:$0xff]
        %v1807 = vld [vmem:[%s4 + $0x18] sm:$0xff]
        %v1808 = vld [vmem:[%s4 + $0x20] sm:$0xff]
        %v1809 = vld [vmem:[%s4 + $0x28] sm:$0xff]
        %v1810 = vld [vmem:[%s4 + $0x30] sm:$0xff]
        %v1811 = vld [vmem:[%s4 + $0x38] sm:$0xff]
        %v1812 = vld [vmem:[%s4 + $0x40] sm:$0xff]
        %v1813 = vld [vmem:[%s4 + $0x48] sm:$0xff]
        %v1814 = vld [vmem:[%s4 + $0x50] sm:$0xff]
        %v1815 = vld [vmem:[%s4 + $0x58] sm:$0xff]
        %v1816 = vld [vmem:[%s4 + $0x60] sm:$0xff]
        %v1817 = vld [vmem:[%s4 + $0x68] sm:$0xff]
        %v1818 = vld [vmem:[%s4 + $0x70] sm:$0xff]
        %v1819 = vld [vmem:[%s4 + $0x78] sm:$0xff]
        %v1820 = vld [vmem:[%s4 + $0x80] sm:$0xff]
        %v1821 = vld [vmem:[%s4 + $0x88] sm:$0xff]
        %v1822 = vld [vmem:[%s4 + $0x90] sm:$0xff]
        %v1823 = vld [vmem:[%s4 + $0x98] sm:$0xff]
        %v1824 = vld [vmem:[%s4 + $0xa0] sm:$0xff]
        %v1825 = vld [vmem:[%s4 + $0xa8] sm:$0xff]
        %v1826 = vld [vmem:[%s4 + $0xb0] sm:$0xff]
        %v1827 = vld [vmem:[%s4 + $0xb8] sm:$0xff]
        %v1828 = vld [vmem:[%s4 + $0xc0] sm:$0xff]
        %v1829 = vld [vmem:[%s4 + $0xc8] sm:$0xff]
        %v1830 = vld [vmem:[%s4 + $0xd0] sm:$0xff]
        %v1831 = vld [vmem:[%s4 + $0xd8] sm:$0xff]
        %v1832 = vld [vmem:[%s4 + $0xe0] sm:$0xff]
        %v1833 = vld [vmem:[%s4 + $0xe8] sm:$0xff]
        %v1834 = vld [vmem:[%s4 + $0xf0] sm:$0xff]
        %v1835 = vld [vmem:[%s4 + $0xf8] sm:$0xff]
        %v1836 = vld [vmem:[%s4 + $0x100] sm:$0xff]
        %v1837 = vld [vmem:[%s4 + $0x108] sm:$0xff]
        %v1838 = vld [vmem:[%s4 + $0x110] sm:$0xff]
        %v1839 = vld [vmem:[%s4 + $0x118] sm:$0xff]
        %v1840 = vld [vmem:[%s4 + $0x120] sm:$0xff]
        %v1841 = vld [vmem:[%s4 + $0x128] sm:$0xff]
        %v1842 = vld [vmem:[%s4 + $0x130] sm:$0xff]
        %v1843 = vld [vmem:[%s4 + $0x138] sm:$0xff]
        %v1844 = vld [vmem:[%s4 + $0x140] sm:$0xff]
        %v1845 = vld [vmem:[%s4 + $0x148] sm:$0xff]
        %v1846 = vld [vmem:[%s4 + $0x150] sm:$0xff]
        %v1847 = vld [vmem:[%s4 + $0x158] sm:$0xff]
        %v1848 = vld [vmem:[%s4 + $0x160] sm:$0xff]
        %v1849 = vld [vmem:[%s4 + $0x168] sm:$0xff]
        %v1850 = vld [vmem:[%s4 + $0x170] sm:$0xff]
        %v1851 = vld [vmem:[%s4 + $0x178] sm:$0xff]
        %v1852 = vld [vmem:[%s4 + $0x180] sm:$0xff]
        %v1853 = vld [vmem:[%s4 + $0x188] sm:$0xff]
        %v1854 = vld [vmem:[%s4 + $0x190] sm:$0xff]
        %v1855 = vld [vmem:[%s4 + $0x198] sm:$0xff]
        %v1856 = vld [vmem:[%s4 + $0x1a0] sm:$0xff]
        %v1857 = vld [vmem:[%s4 + $0x1a8] sm:$0xff]
        %v1858 = vld [vmem:[%s4 + $0x1b0] sm:$0xff]
        %v1859 = vld [vmem:[%s4 + $0x1b8] sm:$0xff]
        %v1860 = vld [vmem:[%s4 + $0x1c0] sm:$0xff]
        %v1861 = vld [vmem:[%s4 + $0x1c8] sm:$0xff]
        %v1862 = vld [vmem:[%s4 + $0x1d0] sm:$0xff]
        %v1863 = vld [vmem:[%s4 + $0x1d8] sm:$0xff]
        %v1864 = vld [vmem:[%s4 + $0x1e0] sm:$0xff]
        %v1865 = vld [vmem:[%s4 + $0x1e8] sm:$0xff]
        %v1866 = vld [vmem:[%s4 + $0x1f0] sm:$0xff]
        %v1867 = vld [vmem:[%s4 + $0x1f8] sm:$0xff]
        %v1868 = vld [vmem:[%s4 + $0x200] sm:$0xff]
        %v1869 = vld [vmem:[%s4 + $0x208] sm:$0xff]
        %v1870 = vld [vmem:[%s4 + $0x210] sm:$0xff]
        %v1871 = vld [vmem:[%s4 + $0x218] sm:$0xff]
        %v1872 = vld [vmem:[%s4 + $0x220] sm:$0xff]
        %v1873 = vld [vmem:[%s4 + $0x228] sm:$0xff]
        %v1874 = vld [vmem:[%s4 + $0x230] sm:$0xff]
        %v1875 = vld [vmem:[%s4 + $0x238] sm:$0xff]
        %v1876 = vld [vmem:[%s4 + $0x240] sm:$0xff]
        %v1877 = vld [vmem:[%s4 + $0x248] sm:$0xff]
        %v1878 = vld [vmem:[%s4 + $0x250] sm:$0xff]
        %v1879 = vld [vmem:[%s4 + $0x258] sm:$0xff]
        %v1880 = vld [vmem:[%s4 + $0x260] sm:$0xff]
        %v1881 = vld [vmem:[%s4 + $0x268] sm:$0xff]
        %v1882 = vld [vmem:[%s4 + $0x270] sm:$0xff]
        %v1883 = vld [vmem:[%s4 + $0x278] sm:$0xff]
        %v1884 = vld [vmem:[%s4 + $0x280] sm:$0xff]
        %v1885 = vld [vmem:[%s4 + $0x288] sm:$0xff]
        %v1886 = vld [vmem:[%s4 + $0x290] sm:$0xff]
        %v1887 = vld [vmem:[%s4 + $0x298] sm:$0xff]
        %v1888 = vld [vmem:[%s4 + $0x2a0] sm:$0xff]
        %v1889 = vld [vmem:[%s4 + $0x2a8] sm:$0xff]
        %v1890 = vld [vmem:[%s4 + $0x2b0] sm:$0xff]
        %v1891 = vld [vmem:[%s4 + $0x2b8] sm:$0xff]
        %v1892 = vld [vmem:[%s4 + $0x2c0] sm:$0xff]
        %v1893 = vld [vmem:[%s4 + $0x2c8] sm:$0xff]
        %v1894 = vld [vmem:[%s4 + $0x2d0] sm:$0xff]
        %v1895 = vld [vmem:[%s4 + $0x2d8] sm:$0xff]
        %v1896 = vld [vmem:[%s4 + $0x2e0] sm:$0xff]
        %v1897 = vld [vmem:[%s4 + $0x2e8] sm:$0xff]
        %v1898 = vld [vmem:[%s4 + $0x2f0] sm:$0xff]
        %v1899 = vld [vmem:[%s4 + $0x2f8] sm:$0xff]
        %v1900 = vld [vmem:[%s4 + $0x300] sm:$0xff]
        %v1901 = vld [vmem:[%s4 + $0x308] sm:$0xff]
        %v1902 = vld [vmem:[%s4 + $0x310] sm:$0xff]
        %v1903 = vld [vmem:[%s4 + $0x318] sm:$0xff]
        %v1904 = vld [vmem:[%s4 + $0x320] sm:$0xff]
        %v1905 = vld [vmem:[%s4 + $0x328] sm:$0xff]
        %v1906 = vld [vmem:[%s4 + $0x330] sm:$0xff]
        %v1907 = vld [vmem:[%s4 + $0x338] sm:$0xff]
        %v1908 = vld [vmem:[%s4 + $0x340] sm:$0xff]
        %v1909 = vld [vmem:[%s4 + $0x348] sm:$0xff]
        %v1910 = vld [vmem:[%s4 + $0x350] sm:$0xff]
        %v1911 = vld [vmem:[%s4 + $0x358] sm:$0xff]
        %v1912 = vld [vmem:[%s4 + $0x360] sm:$0xff]
        %v1913 = vld [vmem:[%s4 + $0x368] sm:$0xff]
        %v1914 = vld [vmem:[%s4 + $0x370] sm:$0xff]
        %v1915 = vld [vmem:[%s4 + $0x378] sm:$0xff]
        %v1916 = vld [vmem:[%s4 + $0x380] sm:$0xff]
        %v1917 = vld [vmem:[%s4 + $0x388] sm:$0xff]
        %v1918 = vld [vmem:[%s4 + $0x390] sm:$0xff]
        %v1919 = vld [vmem:[%s4 + $0x398] sm:$0xff]
        %v1920 = vld [vmem:[%s4 + $0x3a0] sm:$0xff]
        %v1921 = vld [vmem:[%s4 + $0x3a8] sm:$0xff]
        %v1922 = vld [vmem:[%s4 + $0x3b0] sm:$0xff]
        %v1923 = vld [vmem:[%s4 + $0x3b8] sm:$0xff]
        %v1924 = vld [vmem:[%s4 + $0x3c0] sm:$0xff]
        %v1925 = vld [vmem:[%s4 + $0x3c8] sm:$0xff]
        %v1926 = vld [vmem:[%s4 + $0x3d0] sm:$0xff]
        %v1927 = vld [vmem:[%s4 + $0x3d8] sm:$0xff]
        %v1928 = vld [vmem:[%s4 + $0x3e0] sm:$0xff]
        %v1929 = vld [vmem:[%s4 + $0x3e8] sm:$0xff]
        %v1930 = vld [vmem:[%s4 + $0x3f0] sm:$0xff]
        %v1931 = vld [vmem:[%s4 + $0x3f8] sm:$0xff]
        %v1932 = vld [vmem:[%s4 + $0x400] sm:$0xff]
        %v1933 = vld [vmem:[%s4 + $0x408] sm:$0xff]
        %v1934 = vld [vmem:[%s4 + $0x410] sm:$0xff]
        %v1935 = vld [vmem:[%s4 + $0x418] sm:$0xff]
        %v1936 = vld [vmem:[%s4 + $0x420] sm:$0xff]
        %v1937 = vld [vmem:[%s4 + $0x428] sm:$0xff]
        %v1938 = vld [vmem:[%s4 + $0x430] sm:$0xff]
        %v1939 = vld [vmem:[%s4 + $0x438] sm:$0xff]
        %v1940 = vld [vmem:[%s4 + $0x440] sm:$0xff]
        %v1941 = vld [vmem:[%s4 + $0x448] sm:$0xff]
        %v1942 = vld [vmem:[%s4 + $0x450] sm:$0xff]
        %v1943 = vld [vmem:[%s4 + $0x458] sm:$0xff]
        %v1944 = vld [vmem:[%s4 + $0x460] sm:$0xff]
        %v1945 = vld [vmem:[%s4 + $0x468] sm:$0xff]
        %v1946 = vld [vmem:[%s4 + $0x470] sm:$0xff]
        %v1947 = vld [vmem:[%s4 + $0x478] sm:$0xff]
        %v1948 = vld [vmem:[%s4 + $0x480] sm:$0xff]
        %v1949 = vld [vmem:[%s4 + $0x488] sm:$0xff]
        %v1950 = vld [vmem:[%s4 + $0x490] sm:$0xff]
        %v1951 = vld [vmem:[%s4 + $0x498] sm:$0xff]
        %v1952 = vld [vmem:[%s4 + $0x4a0] sm:$0xff]
        %v1953 = vld [vmem:[%s4 + $0x4a8] sm:$0xff]
        %v1954 = vld [vmem:[%s4 + $0x4b0] sm:$0xff]
        %v1955 = vld [vmem:[%s4 + $0x4b8] sm:$0xff]
        %v1956 = vld [vmem:[%s4 + $0x4c0] sm:$0xff]
        %v1957 = vld [vmem:[%s4 + $0x4c8] sm:$0xff]
        %v1958 = vld [vmem:[%s4 + $0x4d0] sm:$0xff]
        %v1959 = vld [vmem:[%s4 + $0x4d8] sm:$0xff]
        %v1960 = vld [vmem:[%s4 + $0x4e0] sm:$0xff]
        %v1961 = vld [vmem:[%s4 + $0x4e8] sm:$0xff]
        %v1962 = vld [vmem:[%s4 + $0x4f0] sm:$0xff]
        %v1963 = vld [vmem:[%s4 + $0x4f8] sm:$0xff]
        %v1964 = vld [vmem:[%s4 + $0x500] sm:$0xff]
        %v1965 = vld [vmem:[%s4 + $0x508] sm:$0xff]
        %v1966 = vld [vmem:[%s4 + $0x510] sm:$0xff]
        %v1967 = vld [vmem:[%s4 + $0x518] sm:$0xff]
        %v1968 = vld [vmem:[%s4 + $0x520] sm:$0xff]
        %v1969 = vld [vmem:[%s4 + $0x528] sm:$0xff]
        %v1970 = vld [vmem:[%s4 + $0x530] sm:$0xff]
        %v1971 = vld [vmem:[%s4 + $0x538] sm:$0xff]
        %v1972 = vld [vmem:[%s4 + $0x540] sm:$0xff]
        %v1973 = vld [vmem:[%s4 + $0x548] sm:$0xff]
        %v1974 = vld [vmem:[%s4 + $0x550] sm:$0xff]
        %v1975 = vld [vmem:[%s4 + $0x558] sm:$0xff]
        %v1976 = vld [vmem:[%s4 + $0x560] sm:$0xff]
        %v1977 = vld [vmem:[%s4 + $0x568] sm:$0xff]
        %v1978 = vld [vmem:[%s4 + $0x570] sm:$0xff]
        %v1979 = vld [vmem:[%s4 + $0x578] sm:$0xff]
        %v1980 = vld [vmem:[%s4 + $0x580] sm:$0xff]
        %v1981 = vld [vmem:[%s4 + $0x588] sm:$0xff]
        %v1982 = vld [vmem:[%s4 + $0x590] sm:$0xff]
        %v1983 = vld [vmem:[%s4 + $0x598] sm:$0xff]
        %v1984 = vld [vmem:[%s4 + $0x5a0] sm:$0xff]
        %v1985 = vld [vmem:[%s4 + $0x5a8] sm:$0xff]
        %v1986 = vld [vmem:[%s4 + $0x5b0] sm:$0xff]
        %v1987 = vld [vmem:[%s4 + $0x5b8] sm:$0xff]
        %v1988 = vld [vmem:[%s4 + $0x5c0] sm:$0xff]
        %v1989 = vld [vmem:[%s4 + $0x5c8] sm:$0xff]
        %v1990 = vld [vmem:[%s4 + $0x5d0] sm:$0xff]
        %v1991 = vld [vmem:[%s4 + $0x5d8] sm:$0xff]
        %v1992 = vld [vmem:[%s4 + $0x5e0] sm:$0xff]
        %v1993 = vld [vmem:[%s4 + $0x5e8] sm:$0xff]
        %v1994 = vld [vmem:[%s4 + $0x5f0] sm:$0xff]
        %v1995 = vld [vmem:[%s4 + $0x5f8] sm:$0xff]
        %v1996 = vld [vmem:[%s4 + $0x600] sm:$0xff]
        %v1997 = vld [vmem:[%s4 + $0x608] sm:$0xff]
        %v1998 = vld [vmem:[%s4 + $0x610] sm:$0xff]
        %v1999 = vld [vmem:[%s4 + $0x618] sm:$0xff]
        %v2000 = vld [vmem:[%s4 + $0x620] sm:$0xff]
        %v2001 = vld [vmem:[%s4 + $0x628] sm:$0xff]
        %v2002 = vld [vmem:[%s4 + $0x630] sm:$0xff]
        %v2003 = vld [vmem:[%s4 + $0x638] sm:$0xff]
        %v2004 = vld [vmem:[%s4 + $0x640] sm:$0xff]
        %v2005 = vld [vmem:[%s4 + $0x648] sm:$0xff]
        %v2006 = vld [vmem:[%s4 + $0x650] sm:$0xff]
        %v2007 = vld [vmem:[%s4 + $0x658] sm:$0xff]
        %v2008 = vld [vmem:[%s4 + $0x660] sm:$0xff]
        %v2009 = vld [vmem:[%s4 + $0x668] sm:$0xff]
        %v2010 = vld [vmem:[%s4 + $0x670] sm:$0xff]
        %v2011 = vld [vmem:[%s4 + $0x678] sm:$0xff]
        %v2012 = vld [vmem:[%s4 + $0x680] sm:$0xff]
        %v2013 = vld [vmem:[%s4 + $0x688] sm:$0xff]
        %v2014 = vld [vmem:[%s4 + $0x690] sm:$0xff]
        %v2015 = vld [vmem:[%s4 + $0x698] sm:$0xff]
        %v2016 = vld [vmem:[%s4 + $0x6a0] sm:$0xff]
        %v2017 = vld [vmem:[%s4 + $0x6a8] sm:$0xff]
        %v2018 = vld [vmem:[%s4 + $0x6b0] sm:$0xff]
        %v2019 = vld [vmem:[%s4 + $0x6b8] sm:$0xff]
        %v2020 = vld [vmem:[%s4 + $0x6c0] sm:$0xff]
        %v2021 = vld [vmem:[%s4 + $0x6c8] sm:$0xff]
        %v2022 = vld [vmem:[%s4 + $0x6d0] sm:$0xff]
        %v2023 = vld [vmem:[%s4 + $0x6d8] sm:$0xff]
        %v2024 = vld [vmem:[%s4 + $0x6e0] sm:$0xff]
        %v2025 = vld [vmem:[%s4 + $0x6e8] sm:$0xff]
        %v2026 = vld [vmem:[%s4 + $0x6f0] sm:$0xff]
        %v2027 = vld [vmem:[%s4 + $0x6f8] sm:$0xff]
        %v2028 = vld [vmem:[%s4 + $0x700] sm:$0xff]
        %v2029 = vld [vmem:[%s4 + $0x708] sm:$0xff]
        %v2030 = vld [vmem:[%s4 + $0x710] sm:$0xff]
        %v2031 = vld [vmem:[%s4 + $0x718] sm:$0xff]
        %v2032 = vld [vmem:[%s4 + $0x720] sm:$0xff]
        %v2033 = vld [vmem:[%s4 + $0x728] sm:$0xff]
        %v2034 = vld [vmem:[%s4 + $0x730] sm:$0xff]
        %v2035 = vld [vmem:[%s4 + $0x738] sm:$0xff]
        %v2036 = vld [vmem:[%s4 + $0x740] sm:$0xff]
        %v2037 = vld [vmem:[%s4 + $0x748] sm:$0xff]
        %v2038 = vld [vmem:[%s4 + $0x750] sm:$0xff]
        %v2039 = vld [vmem:[%s4 + $0x758] sm:$0xff]
        %v2040 = vld [vmem:[%s4 + $0x760] sm:$0xff]
        %v2041 = vld [vmem:[%s4 + $0x768] sm:$0xff]
        %v2042 = vld [vmem:[%s4 + $0x770] sm:$0xff]
        %v2043 = vld [vmem:[%s4 + $0x778] sm:$0xff]
        %v2044 = vld [vmem:[%s4 + $0x780] sm:$0xff]
        %v2045 = vld [vmem:[%s4 + $0x788] sm:$0xff]
        %v2046 = vld [vmem:[%s4 + $0x790] sm:$0xff]
        %v2047 = vld [vmem:[%s4 + $0x798] sm:$0xff]
        %v2048 = vld [vmem:[%s4 + $0x7a0] sm:$0xff]
        %v2049 = vld [vmem:[%s4 + $0x7a8] sm:$0xff]
        %v2050 = vld [vmem:[%s4 + $0x7b0] sm:$0xff]
        %v2051 = vld [vmem:[%s4 + $0x7b8] sm:$0xff]
        %v2052 = vld [vmem:[%s4 + $0x7c0] sm:$0xff]
        %v2053 = vld [vmem:[%s4 + $0x7c8] sm:$0xff]
        %v2054 = vld [vmem:[%s4 + $0x7d0] sm:$0xff]
        %v2055 = vld [vmem:[%s4 + $0x7d8] sm:$0xff]
        %v2056 = vld [vmem:[%s4 + $0x7e0] sm:$0xff]
        %v2057 = vld [vmem:[%s4 + $0x7e8] sm:$0xff]
        %v2058 = vld [vmem:[%s4 + $0x7f0] sm:$0xff]
        %v2059 = vld [vmem:[%s4 + $0x7f8] sm:$0xff]
        %v2060 = vld [vmem:[%s4 + $0x800] sm:$0xff]
        %v2061 = vld [vmem:[%s4 + $0x808] sm:$0xff]
        %v2062 = vld [vmem:[%s4 + $0x810] sm:$0xff]
        %v2063 = vld [vmem:[%s4 + $0x818] sm:$0xff]
        %v2064 = vld [vmem:[%s4 + $0x820] sm:$0xff]
        %v2065 = vld [vmem:[%s4 + $0x828] sm:$0xff]
        %v2066 = vld [vmem:[%s4 + $0x830] sm:$0xff]
        %v2067 = vld [vmem:[%s4 + $0x838] sm:$0xff]
        %v2068 = vld [vmem:[%s4 + $0x840] sm:$0xff]
        %v2069 = vld [vmem:[%s4 + $0x848] sm:$0xff]
        %v2070 = vld [vmem:[%s4 + $0x850] sm:$0xff]
        %v2071 = vld [vmem:[%s4 + $0x858] sm:$0xff]
        %v2072 = vld [vmem:[%s4 + $0x860] sm:$0xff]
        %v2073 = vld [vmem:[%s4 + $0x868] sm:$0xff]
        %v2074 = vld [vmem:[%s4 + $0x870] sm:$0xff]
        %v2075 = vld [vmem:[%s4 + $0x878] sm:$0xff]
        %v2076 = vld [vmem:[%s4 + $0x880] sm:$0xff]
        %v2077 = vld [vmem:[%s4 + $0x888] sm:$0xff]
        %v2078 = vld [vmem:[%s4 + $0x890] sm:$0xff]
        %v2079 = vld [vmem:[%s4 + $0x898] sm:$0xff]
        %v2080 = vld [vmem:[%s4 + $0x8a0] sm:$0xff]
        %v2081 = vld [vmem:[%s4 + $0x8a8] sm:$0xff]
        %v2082 = vld [vmem:[%s4 + $0x8b0] sm:$0xff]
        %v2083 = vld [vmem:[%s4 + $0x8b8] sm:$0xff]
        %v2084 = vld [vmem:[%s4 + $0x8c0] sm:$0xff]
        %v2085 = vld [vmem:[%s4 + $0x8c8] sm:$0xff]
        %v2086 = vld [vmem:[%s4 + $0x8d0] sm:$0xff]
        %v2087 = vld [vmem:[%s4 + $0x8d8] sm:$0xff]
        %v2088 = vld [vmem:[%s4 + $0x8e0] sm:$0xff]
        %v2089 = vld [vmem:[%s4 + $0x8e8] sm:$0xff]
        %v2090 = vld [vmem:[%s4 + $0x8f0] sm:$0xff]
        %v2091 = vld [vmem:[%s4 + $0x8f8] sm:$0xff]
        %v2380 = vunpack.c.l.b16 %v1804
        %v2381 = vunpack.c.h.b16 %v1804
        %v2382 = vunpack.c.l.b16 %v1805
        %v2383 = vunpack.c.h.b16 %v1805
        %v2384 = vunpack.c.l.b16 %v1806
        %v2385 = vunpack.c.h.b16 %v1806
        %v2386 = vunpack.c.l.b16 %v1807
        %v2387 = vunpack.c.h.b16 %v1807
        %v2388 = vunpack.c.l.b16 %v1808
        %v2389 = vunpack.c.h.b16 %v1808
        %v2390 = vunpack.c.l.b16 %v1809
        %v2391 = vunpack.c.h.b16 %v1809
        %v2392 = vunpack.c.l.b16 %v1810
        %v2393 = vunpack.c.h.b16 %v1810
        %v2394 = vunpack.c.l.b16 %v1811
        %v2395 = vunpack.c.h.b16 %v1811
        %v2396 = vunpack.c.l.b16 %v1812
        %v2397 = vunpack.c.h.b16 %v1812
        %v2398 = vunpack.c.l.b16 %v1813
        %v2399 = vunpack.c.h.b16 %v1813
        %v2400 = vunpack.c.l.b16 %v1814
        %v2401 = vunpack.c.h.b16 %v1814
        %v2402 = vunpack.c.l.b16 %v1815
        %v2403 = vunpack.c.h.b16 %v1815
        %v2404 = vunpack.c.l.b16 %v1816
        %v2405 = vunpack.c.h.b16 %v1816
        %v2406 = vunpack.c.l.b16 %v1817
        %v2407 = vunpack.c.h.b16 %v1817
        %v2408 = vunpack.c.l.b16 %v1818
        %v2409 = vunpack.c.h.b16 %v1818
        %v2410 = vunpack.c.l.b16 %v1819
        %v2411 = vunpack.c.h.b16 %v1819
        %v2412 = vunpack.c.l.b16 %v1820
        %v2413 = vunpack.c.h.b16 %v1820
        %v2414 = vunpack.c.l.b16 %v1821
        %v2415 = vunpack.c.h.b16 %v1821
        %v2416 = vunpack.c.l.b16 %v1822
        %v2417 = vunpack.c.h.b16 %v1822
        %v2418 = vunpack.c.l.b16 %v1823
        %v2419 = vunpack.c.h.b16 %v1823
        %v2420 = vunpack.c.l.b16 %v1824
        %v2421 = vunpack.c.h.b16 %v1824
        %v2422 = vunpack.c.l.b16 %v1825
        %v2423 = vunpack.c.h.b16 %v1825
        %v2424 = vunpack.c.l.b16 %v1826
        %v2425 = vunpack.c.h.b16 %v1826
        %v2426 = vunpack.c.l.b16 %v1827
        %v2427 = vunpack.c.h.b16 %v1827
        %v2428 = vunpack.c.l.b16 %v1828
        %v2429 = vunpack.c.h.b16 %v1828
        %v2430 = vunpack.c.l.b16 %v1829
        %v2431 = vunpack.c.h.b16 %v1829
        %v2432 = vunpack.c.l.b16 %v1830
        %v2433 = vunpack.c.h.b16 %v1830
        %v2434 = vunpack.c.l.b16 %v1831
        %v2435 = vunpack.c.h.b16 %v1831
        %v2436 = vunpack.c.l.b16 %v1832
        %v2437 = vunpack.c.h.b16 %v1832
        %v2438 = vunpack.c.l.b16 %v1833
        %v2439 = vunpack.c.h.b16 %v1833
        %v2440 = vunpack.c.l.b16 %v1834
        %v2441 = vunpack.c.h.b16 %v1834
        %v2442 = vunpack.c.l.b16 %v1835
        %v2443 = vunpack.c.h.b16 %v1835
        %v2444 = vunpack.c.l.b16 %v1836
        %v2445 = vunpack.c.h.b16 %v1836
        %v2446 = vunpack.c.l.b16 %v1837
        %v2447 = vunpack.c.h.b16 %v1837
        %v2448 = vunpack.c.l.b16 %v1838
        %v2449 = vunpack.c.h.b16 %v1838
        %v2450 = vunpack.c.l.b16 %v1839
        %v2451 = vunpack.c.h.b16 %v1839
        %v2452 = vunpack.c.l.b16 %v1840
        %v2453 = vunpack.c.h.b16 %v1840
        %v2454 = vunpack.c.l.b16 %v1841
        %v2455 = vunpack.c.h.b16 %v1841
        %v2456 = vunpack.c.l.b16 %v1842
        %v2457 = vunpack.c.h.b16 %v1842
        %v2458 = vunpack.c.l.b16 %v1843
        %v2459 = vunpack.c.h.b16 %v1843
        %v2460 = vunpack.c.l.b16 %v1844
        %v2461 = vunpack.c.h.b16 %v1844
        %v2462 = vunpack.c.l.b16 %v1845
        %v2463 = vunpack.c.h.b16 %v1845
        %v2464 = vunpack.c.l.b16 %v1846
        %v2465 = vunpack.c.h.b16 %v1846
        %v2466 = vunpack.c.l.b16 %v1847
        %v2467 = vunpack.c.h.b16 %v1847
        %v2468 = vunpack.c.l.b16 %v1848
        %v2469 = vunpack.c.h.b16 %v1848
        %v2470 = vunpack.c.l.b16 %v1849
        %v2471 = vunpack.c.h.b16 %v1849
        %v2472 = vunpack.c.l.b16 %v1850
        %v2473 = vunpack.c.h.b16 %v1850
        %v2474 = vunpack.c.l.b16 %v1851
        %v2475 = vunpack.c.h.b16 %v1851
        %v2476 = vunpack.c.l.b16 %v1852
        %v2477 = vunpack.c.h.b16 %v1852
        %v2478 = vunpack.c.l.b16 %v1853
        %v2479 = vunpack.c.h.b16 %v1853
        %v2480 = vunpack.c.l.b16 %v1854
        %v2481 = vunpack.c.h.b16 %v1854
        %v2482 = vunpack.c.l.b16 %v1855
        %v2483 = vunpack.c.h.b16 %v1855
        %v2484 = vunpack.c.l.b16 %v1856
        %v2485 = vunpack.c.h.b16 %v1856
        %v2486 = vunpack.c.l.b16 %v1857
        %v2487 = vunpack.c.h.b16 %v1857
        %v2488 = vunpack.c.l.b16 %v1858
        %v2489 = vunpack.c.h.b16 %v1858
        %v2490 = vunpack.c.l.b16 %v1859
        %v2491 = vunpack.c.h.b16 %v1859
        %v2492 = vunpack.c.l.b16 %v1860
        %v2493 = vunpack.c.h.b16 %v1860
        %v2494 = vunpack.c.l.b16 %v1861
        %v2495 = vunpack.c.h.b16 %v1861
        %v2496 = vunpack.c.l.b16 %v1862
        %v2497 = vunpack.c.h.b16 %v1862
        %v2498 = vunpack.c.l.b16 %v1863
        %v2499 = vunpack.c.h.b16 %v1863
        %v2500 = vunpack.c.l.b16 %v1864
        %v2501 = vunpack.c.h.b16 %v1864
        %v2502 = vunpack.c.l.b16 %v1865
        %v2503 = vunpack.c.h.b16 %v1865
        %v2504 = vunpack.c.l.b16 %v1866
        %v2505 = vunpack.c.h.b16 %v1866
        %v2506 = vunpack.c.l.b16 %v1867
        %v2507 = vunpack.c.h.b16 %v1867
        %v2508 = vunpack.c.l.b16 %v1868
        %v2509 = vunpack.c.h.b16 %v1868
        %v2510 = vunpack.c.l.b16 %v1869
        %v2511 = vunpack.c.h.b16 %v1869
        %v2512 = vunpack.c.l.b16 %v1870
        %v2513 = vunpack.c.h.b16 %v1870
        %v2514 = vunpack.c.l.b16 %v1871
        %v2515 = vunpack.c.h.b16 %v1871
        %v2516 = vunpack.c.l.b16 %v1872
        %v2517 = vunpack.c.h.b16 %v1872
        %v2518 = vunpack.c.l.b16 %v1873
        %v2519 = vunpack.c.h.b16 %v1873
        %v2520 = vunpack.c.l.b16 %v1874
        %v2521 = vunpack.c.h.b16 %v1874
        %v2522 = vunpack.c.l.b16 %v1875
        %v2523 = vunpack.c.h.b16 %v1875
        %v2524 = vunpack.c.l.b16 %v1876
        %v2525 = vunpack.c.h.b16 %v1876
        %v2526 = vunpack.c.l.b16 %v1877
        %v2527 = vunpack.c.h.b16 %v1877
        %v2528 = vunpack.c.l.b16 %v1878
        %v2529 = vunpack.c.h.b16 %v1878
        %v2530 = vunpack.c.l.b16 %v1879
        %v2531 = vunpack.c.h.b16 %v1879
        %v2532 = vunpack.c.l.b16 %v1880
        %v2533 = vunpack.c.h.b16 %v1880
        %v2534 = vunpack.c.l.b16 %v1881
        %v2535 = vunpack.c.h.b16 %v1881
        %v2536 = vunpack.c.l.b16 %v1882
        %v2537 = vunpack.c.h.b16 %v1882
        %v2538 = vunpack.c.l.b16 %v1883
        %v2539 = vunpack.c.h.b16 %v1883
        %v2540 = vunpack.c.l.b16 %v1884
        %v2541 = vunpack.c.h.b16 %v1884
        %v2542 = vunpack.c.l.b16 %v1885
        %v2543 = vunpack.c.h.b16 %v1885
        %v2544 = vunpack.c.l.b16 %v1886
        %v2545 = vunpack.c.h.b16 %v1886
        %v2546 = vunpack.c.l.b16 %v1887
        %v2547 = vunpack.c.h.b16 %v1887
        %v2548 = vunpack.c.l.b16 %v1888
        %v2549 = vunpack.c.h.b16 %v1888
        %v2550 = vunpack.c.l.b16 %v1889
        %v2551 = vunpack.c.h.b16 %v1889
        %v2552 = vunpack.c.l.b16 %v1890
        %v2553 = vunpack.c.h.b16 %v1890
        %v2554 = vunpack.c.l.b16 %v1891
        %v2555 = vunpack.c.h.b16 %v1891
        %v2556 = vunpack.c.l.b16 %v1892
        %v2557 = vunpack.c.h.b16 %v1892
        %v2558 = vunpack.c.l.b16 %v1893
        %v2559 = vunpack.c.h.b16 %v1893
        %v2560 = vunpack.c.l.b16 %v1894
        %v2561 = vunpack.c.h.b16 %v1894
        %v2562 = vunpack.c.l.b16 %v1895
        %v2563 = vunpack.c.h.b16 %v1895
        %v2564 = vunpack.c.l.b16 %v1896
        %v2565 = vunpack.c.h.b16 %v1896
        %v2566 = vunpack.c.l.b16 %v1897
        %v2567 = vunpack.c.h.b16 %v1897
        %v2568 = vunpack.c.l.b16 %v1898
        %v2569 = vunpack.c.h.b16 %v1898
        %v2570 = vunpack.c.l.b16 %v1899
        %v2571 = vunpack.c.h.b16 %v1899
        %v2572 = vunpack.c.l.b16 %v1900
        %v2573 = vunpack.c.h.b16 %v1900
        %v2574 = vunpack.c.l.b16 %v1901
        %v2575 = vunpack.c.h.b16 %v1901
        %v2576 = vunpack.c.l.b16 %v1902
        %v2577 = vunpack.c.h.b16 %v1902
        %v2578 = vunpack.c.l.b16 %v1903
        %v2579 = vunpack.c.h.b16 %v1903
        %v2580 = vunpack.c.l.b16 %v1904
        %v2581 = vunpack.c.h.b16 %v1904
        %v2582 = vunpack.c.l.b16 %v1905
        %v2583 = vunpack.c.h.b16 %v1905
        %v2584 = vunpack.c.l.b16 %v1906
        %v2585 = vunpack.c.h.b16 %v1906
        %v2586 = vunpack.c.l.b16 %v1907
        %v2587 = vunpack.c.h.b16 %v1907
        %v2588 = vunpack.c.l.b16 %v1908
        %v2589 = vunpack.c.h.b16 %v1908
        %v2590 = vunpack.c.l.b16 %v1909
        %v2591 = vunpack.c.h.b16 %v1909
        %v2592 = vunpack.c.l.b16 %v1910
        %v2593 = vunpack.c.h.b16 %v1910
        %v2594 = vunpack.c.l.b16 %v1911
        %v2595 = vunpack.c.h.b16 %v1911
        %v2596 = vunpack.c.l.b16 %v1912
        %v2597 = vunpack.c.h.b16 %v1912
        %v2598 = vunpack.c.l.b16 %v1913
        %v2599 = vunpack.c.h.b16 %v1913
        %v2600 = vunpack.c.l.b16 %v1914
        %v2601 = vunpack.c.h.b16 %v1914
        %v2602 = vunpack.c.l.b16 %v1915
        %v2603 = vunpack.c.h.b16 %v1915
        %v2604 = vunpack.c.l.b16 %v1916
        %v2605 = vunpack.c.h.b16 %v1916
        %v2606 = vunpack.c.l.b16 %v1917
        %v2607 = vunpack.c.h.b16 %v1917
        %v2608 = vunpack.c.l.b16 %v1918
        %v2609 = vunpack.c.h.b16 %v1918
        %v2610 = vunpack.c.l.b16 %v1919
        %v2611 = vunpack.c.h.b16 %v1919
        %v2612 = vunpack.c.l.b16 %v1920
        %v2613 = vunpack.c.h.b16 %v1920
        %v2614 = vunpack.c.l.b16 %v1921
        %v2615 = vunpack.c.h.b16 %v1921
        %v2616 = vunpack.c.l.b16 %v1922
        %v2617 = vunpack.c.h.b16 %v1922
        %v2618 = vunpack.c.l.b16 %v1923
        %v2619 = vunpack.c.h.b16 %v1923
        %v2620 = vunpack.c.l.b16 %v1924
        %v2621 = vunpack.c.h.b16 %v1924
        %v2622 = vunpack.c.l.b16 %v1925
        %v2623 = vunpack.c.h.b16 %v1925
        %v2624 = vunpack.c.l.b16 %v1926
        %v2625 = vunpack.c.h.b16 %v1926
        %v2626 = vunpack.c.l.b16 %v1927
        %v2627 = vunpack.c.h.b16 %v1927
        %v2628 = vunpack.c.l.b16 %v1928
        %v2629 = vunpack.c.h.b16 %v1928
        %v2630 = vunpack.c.l.b16 %v1929
        %v2631 = vunpack.c.h.b16 %v1929
        %v2632 = vunpack.c.l.b16 %v1930
        %v2633 = vunpack.c.h.b16 %v1930
        %v2634 = vunpack.c.l.b16 %v1931
        %v2635 = vunpack.c.h.b16 %v1931
        %v2636 = vunpack.c.l.b16 %v1932
        %v2637 = vunpack.c.h.b16 %v1932
        %v2638 = vunpack.c.l.b16 %v1933
        %v2639 = vunpack.c.h.b16 %v1933
        %v2640 = vunpack.c.l.b16 %v1934
        %v2641 = vunpack.c.h.b16 %v1934
        %v2642 = vunpack.c.l.b16 %v1935
        %v2643 = vunpack.c.h.b16 %v1935
        %v2644 = vunpack.c.l.b16 %v1936
        %v2645 = vunpack.c.h.b16 %v1936
        %v2646 = vunpack.c.l.b16 %v1937
        %v2647 = vunpack.c.h.b16 %v1937
        %v2648 = vunpack.c.l.b16 %v1938
        %v2649 = vunpack.c.h.b16 %v1938
        %v2650 = vunpack.c.l.b16 %v1939
        %v2651 = vunpack.c.h.b16 %v1939
        %v2652 = vunpack.c.l.b16 %v1940
        %v2653 = vunpack.c.h.b16 %v1940
        %v2654 = vunpack.c.l.b16 %v1941
        %v2655 = vunpack.c.h.b16 %v1941
        %v2656 = vunpack.c.l.b16 %v1942
        %v2657 = vunpack.c.h.b16 %v1942
        %v2658 = vunpack.c.l.b16 %v1943
        %v2659 = vunpack.c.h.b16 %v1943
        %v2660 = vunpack.c.l.b16 %v1944
        %v2661 = vunpack.c.h.b16 %v1944
        %v2662 = vunpack.c.l.b16 %v1945
        %v2663 = vunpack.c.h.b16 %v1945
        %v2664 = vunpack.c.l.b16 %v1946
        %v2665 = vunpack.c.h.b16 %v1946
        %v2666 = vunpack.c.l.b16 %v1947
        %v2667 = vunpack.c.h.b16 %v1947
        %v2668 = vunpack.c.l.b16 %v1948
        %v2669 = vunpack.c.h.b16 %v1948
        %v2670 = vunpack.c.l.b16 %v1949
        %v2671 = vunpack.c.h.b16 %v1949
        %v2672 = vunpack.c.l.b16 %v1950
        %v2673 = vunpack.c.h.b16 %v1950
        %v2674 = vunpack.c.l.b16 %v1951
        %v2675 = vunpack.c.h.b16 %v1951
        %v2676 = vunpack.c.l.b16 %v1952
        %v2677 = vunpack.c.h.b16 %v1952
        %v2678 = vunpack.c.l.b16 %v1953
        %v2679 = vunpack.c.h.b16 %v1953
        %v2680 = vunpack.c.l.b16 %v1954
        %v2681 = vunpack.c.h.b16 %v1954
        %v2682 = vunpack.c.l.b16 %v1955
        %v2683 = vunpack.c.h.b16 %v1955
        %v2684 = vunpack.c.l.b16 %v1956
        %v2685 = vunpack.c.h.b16 %v1956
        %v2686 = vunpack.c.l.b16 %v1957
        %v2687 = vunpack.c.h.b16 %v1957
        %v2688 = vunpack.c.l.b16 %v1958
        %v2689 = vunpack.c.h.b16 %v1958
        %v2690 = vunpack.c.l.b16 %v1959
        %v2691 = vunpack.c.h.b16 %v1959
        %v2692 = vunpack.c.l.b16 %v1960
        %v2693 = vunpack.c.h.b16 %v1960
        %v2694 = vunpack.c.l.b16 %v1961
        %v2695 = vunpack.c.h.b16 %v1961
        %v2696 = vunpack.c.l.b16 %v1962
        %v2697 = vunpack.c.h.b16 %v1962
        %v2698 = vunpack.c.l.b16 %v1963
        %v2699 = vunpack.c.h.b16 %v1963
        %v2700 = vunpack.c.l.b16 %v1964
        %v2701 = vunpack.c.h.b16 %v1964
        %v2702 = vunpack.c.l.b16 %v1965
        %v2703 = vunpack.c.h.b16 %v1965
        %v2704 = vunpack.c.l.b16 %v1966
        %v2705 = vunpack.c.h.b16 %v1966
        %v2706 = vunpack.c.l.b16 %v1967
        %v2707 = vunpack.c.h.b16 %v1967
        %v2708 = vunpack.c.l.b16 %v1968
        %v2709 = vunpack.c.h.b16 %v1968
        %v2710 = vunpack.c.l.b16 %v1969
        %v2711 = vunpack.c.h.b16 %v1969
        %v2712 = vunpack.c.l.b16 %v1970
        %v2713 = vunpack.c.h.b16 %v1970
        %v2714 = vunpack.c.l.b16 %v1971
        %v2715 = vunpack.c.h.b16 %v1971
        %v2716 = vunpack.c.l.b16 %v1972
        %v2717 = vunpack.c.h.b16 %v1972
        %v2718 = vunpack.c.l.b16 %v1973
        %v2719 = vunpack.c.h.b16 %v1973
        %v2720 = vunpack.c.l.b16 %v1974
        %v2721 = vunpack.c.h.b16 %v1974
        %v2722 = vunpack.c.l.b16 %v1975
        %v2723 = vunpack.c.h.b16 %v1975
        %v2724 = vunpack.c.l.b16 %v1976
        %v2725 = vunpack.c.h.b16 %v1976
        %v2726 = vunpack.c.l.b16 %v1977
        %v2727 = vunpack.c.h.b16 %v1977
        %v2728 = vunpack.c.l.b16 %v1978
        %v2729 = vunpack.c.h.b16 %v1978
        %v2730 = vunpack.c.l.b16 %v1979
        %v2731 = vunpack.c.h.b16 %v1979
        %v2732 = vunpack.c.l.b16 %v1980
        %v2733 = vunpack.c.h.b16 %v1980
        %v2734 = vunpack.c.l.b16 %v1981
        %v2735 = vunpack.c.h.b16 %v1981
        %v2736 = vunpack.c.l.b16 %v1982
        %v2737 = vunpack.c.h.b16 %v1982
        %v2738 = vunpack.c.l.b16 %v1983
        %v2739 = vunpack.c.h.b16 %v1983
        %v2740 = vunpack.c.l.b16 %v1984
        %v2741 = vunpack.c.h.b16 %v1984
        %v2742 = vunpack.c.l.b16 %v1985
        %v2743 = vunpack.c.h.b16 %v1985
        %v2744 = vunpack.c.l.b16 %v1986
        %v2745 = vunpack.c.h.b16 %v1986
        %v2746 = vunpack.c.l.b16 %v1987
        %v2747 = vunpack.c.h.b16 %v1987
        %v2748 = vunpack.c.l.b16 %v1988
        %v2749 = vunpack.c.h.b16 %v1988
        %v2750 = vunpack.c.l.b16 %v1989
        %v2751 = vunpack.c.h.b16 %v1989
        %v2752 = vunpack.c.l.b16 %v1990
        %v2753 = vunpack.c.h.b16 %v1990
        %v2754 = vunpack.c.l.b16 %v1991
        %v2755 = vunpack.c.h.b16 %v1991
        %v2756 = vunpack.c.l.b16 %v1992
        %v2757 = vunpack.c.h.b16 %v1992
        %v2758 = vunpack.c.l.b16 %v1993
        %v2759 = vunpack.c.h.b16 %v1993
        %v2760 = vunpack.c.l.b16 %v1994
        %v2761 = vunpack.c.h.b16 %v1994
        %v2762 = vunpack.c.l.b16 %v1995
        %v2763 = vunpack.c.h.b16 %v1995
        %v2764 = vunpack.c.l.b16 %v1996
        %v2765 = vunpack.c.h.b16 %v1996
        %v2766 = vunpack.c.l.b16 %v1997
        %v2767 = vunpack.c.h.b16 %v1997
        %v2768 = vunpack.c.l.b16 %v1998
        %v2769 = vunpack.c.h.b16 %v1998
        %v2770 = vunpack.c.l.b16 %v1999
        %v2771 = vunpack.c.h.b16 %v1999
        %v2772 = vunpack.c.l.b16 %v2000
        %v2773 = vunpack.c.h.b16 %v2000
        %v2774 = vunpack.c.l.b16 %v2001
        %v2775 = vunpack.c.h.b16 %v2001
        %v2776 = vunpack.c.l.b16 %v2002
        %v2777 = vunpack.c.h.b16 %v2002
        %v2778 = vunpack.c.l.b16 %v2003
        %v2779 = vunpack.c.h.b16 %v2003
        %v2780 = vunpack.c.l.b16 %v2004
        %v2781 = vunpack.c.h.b16 %v2004
        %v2782 = vunpack.c.l.b16 %v2005
        %v2783 = vunpack.c.h.b16 %v2005
        %v2784 = vunpack.c.l.b16 %v2006
        %v2785 = vunpack.c.h.b16 %v2006
        %v2786 = vunpack.c.l.b16 %v2007
        %v2787 = vunpack.c.h.b16 %v2007
        %v2788 = vunpack.c.l.b16 %v2008
        %v2789 = vunpack.c.h.b16 %v2008
        %v2790 = vunpack.c.l.b16 %v2009
        %v2791 = vunpack.c.h.b16 %v2009
        %v2792 = vunpack.c.l.b16 %v2010
        %v2793 = vunpack.c.h.b16 %v2010
        %v2794 = vunpack.c.l.b16 %v2011
        %v2795 = vunpack.c.h.b16 %v2011
        %v2796 = vunpack.c.l.b16 %v2012
        %v2797 = vunpack.c.h.b16 %v2012
        %v2798 = vunpack.c.l.b16 %v2013
        %v2799 = vunpack.c.h.b16 %v2013
        %v2800 = vunpack.c.l.b16 %v2014
        %v2801 = vunpack.c.h.b16 %v2014
        %v2802 = vunpack.c.l.b16 %v2015
        %v2803 = vunpack.c.h.b16 %v2015
        %v2804 = vunpack.c.l.b16 %v2016
        %v2805 = vunpack.c.h.b16 %v2016
        %v2806 = vunpack.c.l.b16 %v2017
        %v2807 = vunpack.c.h.b16 %v2017
        %v2808 = vunpack.c.l.b16 %v2018
        %v2809 = vunpack.c.h.b16 %v2018
        %v2810 = vunpack.c.l.b16 %v2019
        %v2811 = vunpack.c.h.b16 %v2019
        %v2812 = vunpack.c.l.b16 %v2020
        %v2813 = vunpack.c.h.b16 %v2020
        %v2814 = vunpack.c.l.b16 %v2021
        %v2815 = vunpack.c.h.b16 %v2021
        %v2816 = vunpack.c.l.b16 %v2022
        %v2817 = vunpack.c.h.b16 %v2022
        %v2818 = vunpack.c.l.b16 %v2023
        %v2819 = vunpack.c.h.b16 %v2023
        %v2820 = vunpack.c.l.b16 %v2024
        %v2821 = vunpack.c.h.b16 %v2024
        %v2822 = vunpack.c.l.b16 %v2025
        %v2823 = vunpack.c.h.b16 %v2025
        %v2824 = vunpack.c.l.b16 %v2026
        %v2825 = vunpack.c.h.b16 %v2026
        %v2826 = vunpack.c.l.b16 %v2027
        %v2827 = vunpack.c.h.b16 %v2027
        %v2828 = vunpack.c.l.b16 %v2028
        %v2829 = vunpack.c.h.b16 %v2028
        %v2830 = vunpack.c.l.b16 %v2029
        %v2831 = vunpack.c.h.b16 %v2029
        %v2832 = vunpack.c.l.b16 %v2030
        %v2833 = vunpack.c.h.b16 %v2030
        %v2834 = vunpack.c.l.b16 %v2031
        %v2835 = vunpack.c.h.b16 %v2031
        %v2836 = vunpack.c.l.b16 %v2032
        %v2837 = vunpack.c.h.b16 %v2032
        %v2838 = vunpack.c.l.b16 %v2033
        %v2839 = vunpack.c.h.b16 %v2033
        %v2840 = vunpack.c.l.b16 %v2034
        %v2841 = vunpack.c.h.b16 %v2034
        %v2842 = vunpack.c.l.b16 %v2035
        %v2843 = vunpack.c.h.b16 %v2035
        %v2844 = vunpack.c.l.b16 %v2036
        %v2845 = vunpack.c.h.b16 %v2036
        %v2846 = vunpack.c.l.b16 %v2037
        %v2847 = vunpack.c.h.b16 %v2037
        %v2848 = vunpack.c.l.b16 %v2038
        %v2849 = vunpack.c.h.b16 %v2038
        %v2850 = vunpack.c.l.b16 %v2039
        %v2851 = vunpack.c.h.b16 %v2039
        %v2852 = vunpack.c.l.b16 %v2040
        %v2853 = vunpack.c.h.b16 %v2040
        %v2854 = vunpack.c.l.b16 %v2041
        %v2855 = vunpack.c.h.b16 %v2041
        %v2856 = vunpack.c.l.b16 %v2042
        %v2857 = vunpack.c.h.b16 %v2042
        %v2858 = vunpack.c.l.b16 %v2043
        %v2859 = vunpack.c.h.b16 %v2043
        %v2860 = vunpack.c.l.b16 %v2044
        %v2861 = vunpack.c.h.b16 %v2044
        %v2862 = vunpack.c.l.b16 %v2045
        %v2863 = vunpack.c.h.b16 %v2045
        %v2864 = vunpack.c.l.b16 %v2046
        %v2865 = vunpack.c.h.b16 %v2046
        %v2866 = vunpack.c.l.b16 %v2047
        %v2867 = vunpack.c.h.b16 %v2047
        %v2868 = vunpack.c.l.b16 %v2048
        %v2869 = vunpack.c.h.b16 %v2048
        %v2870 = vunpack.c.l.b16 %v2049
        %v2871 = vunpack.c.h.b16 %v2049
        %v2872 = vunpack.c.l.b16 %v2050
        %v2873 = vunpack.c.h.b16 %v2050
        %v2874 = vunpack.c.l.b16 %v2051
        %v2875 = vunpack.c.h.b16 %v2051
        %v2876 = vunpack.c.l.b16 %v2052
        %v2877 = vunpack.c.h.b16 %v2052
        %v2878 = vunpack.c.l.b16 %v2053
        %v2879 = vunpack.c.h.b16 %v2053
        %v2880 = vunpack.c.l.b16 %v2054
        %v2881 = vunpack.c.h.b16 %v2054
        %v2882 = vunpack.c.l.b16 %v2055
        %v2883 = vunpack.c.h.b16 %v2055
        %v2884 = vunpack.c.l.b16 %v2056
        %v2885 = vunpack.c.h.b16 %v2056
        %v2886 = vunpack.c.l.b16 %v2057
        %v2887 = vunpack.c.h.b16 %v2057
        %v2888 = vunpack.c.l.b16 %v2058
        %v2889 = vunpack.c.h.b16 %v2058
        %v2890 = vunpack.c.l.b16 %v2059
        %v2891 = vunpack.c.h.b16 %v2059
        %v2892 = vunpack.c.l.b16 %v2060
        %v2893 = vunpack.c.h.b16 %v2060
        %v2894 = vunpack.c.l.b16 %v2061
        %v2895 = vunpack.c.h.b16 %v2061
        %v2896 = vunpack.c.l.b16 %v2062
        %v2897 = vunpack.c.h.b16 %v2062
        %v2898 = vunpack.c.l.b16 %v2063
        %v2899 = vunpack.c.h.b16 %v2063
        %v2900 = vunpack.c.l.b16 %v2064
        %v2901 = vunpack.c.h.b16 %v2064
        %v2902 = vunpack.c.l.b16 %v2065
        %v2903 = vunpack.c.h.b16 %v2065
        %v2904 = vunpack.c.l.b16 %v2066
        %v2905 = vunpack.c.h.b16 %v2066
        %v2906 = vunpack.c.l.b16 %v2067
        %v2907 = vunpack.c.h.b16 %v2067
        %v2908 = vunpack.c.l.b16 %v2068
        %v2909 = vunpack.c.h.b16 %v2068
        %v2910 = vunpack.c.l.b16 %v2069
        %v2911 = vunpack.c.h.b16 %v2069
        %v2912 = vunpack.c.l.b16 %v2070
        %v2913 = vunpack.c.h.b16 %v2070
        %v2914 = vunpack.c.l.b16 %v2071
        %v2915 = vunpack.c.h.b16 %v2071
        %v2916 = vunpack.c.l.b16 %v2072
        %v2917 = vunpack.c.h.b16 %v2072
        %v2918 = vunpack.c.l.b16 %v2073
        %v2919 = vunpack.c.h.b16 %v2073
        %v2920 = vunpack.c.l.b16 %v2074
        %v2921 = vunpack.c.h.b16 %v2074
        %v2922 = vunpack.c.l.b16 %v2075
        %v2923 = vunpack.c.h.b16 %v2075
        %v2924 = vunpack.c.l.b16 %v2076
        %v2925 = vunpack.c.h.b16 %v2076
        %v2926 = vunpack.c.l.b16 %v2077
        %v2927 = vunpack.c.h.b16 %v2077
        %v2928 = vunpack.c.l.b16 %v2078
        %v2929 = vunpack.c.h.b16 %v2078
        %v2930 = vunpack.c.l.b16 %v2079
        %v2931 = vunpack.c.h.b16 %v2079
        %v2932 = vunpack.c.l.b16 %v2080
        %v2933 = vunpack.c.h.b16 %v2080
        %v2934 = vunpack.c.l.b16 %v2081
        %v2935 = vunpack.c.h.b16 %v2081
        %v2936 = vunpack.c.l.b16 %v2082
        %v2937 = vunpack.c.h.b16 %v2082
        %v2938 = vunpack.c.l.b16 %v2083
        %v2939 = vunpack.c.h.b16 %v2083
        %v2940 = vunpack.c.l.b16 %v2084
        %v2941 = vunpack.c.h.b16 %v2084
        %v2942 = vunpack.c.l.b16 %v2085
        %v2943 = vunpack.c.h.b16 %v2085
        %v2944 = vunpack.c.l.b16 %v2086
        %v2945 = vunpack.c.h.b16 %v2086
        %v2946 = vunpack.c.l.b16 %v2087
        %v2947 = vunpack.c.h.b16 %v2087
        %v2948 = vunpack.c.l.b16 %v2088
        %v2949 = vunpack.c.h.b16 %v2088
        %v2950 = vunpack.c.l.b16 %v2089
        %v2951 = vunpack.c.h.b16 %v2089
        %v2952 = vunpack.c.l.b16 %v2090
        %v2953 = vunpack.c.h.b16 %v2090
        %v2954 = vunpack.c.l.b16 %v2091
        %v2955 = vunpack.c.h.b16 %v2091
        %v2956 = vpack.c.b16 %v2386, %v2380
        %v2957 = vpack.c.b16 %v2387, %v2381
        %v2958 = vpack.c.b16 %v2388, %v2382
        %v2959 = vpack.c.b16 %v2389, %v2383
        %v2960 = vpack.c.b16 %v2390, %v2384
        %v2961 = vpack.c.b16 %v2391, %v2385
        %v2962 = vpack.c.b16 %v2398, %v2392
        %v2963 = vpack.c.b16 %v2399, %v2393
        %v2964 = vpack.c.b16 %v2400, %v2394
        %v2965 = vpack.c.b16 %v2401, %v2395
        %v2966 = vpack.c.b16 %v2402, %v2396
        %v2967 = vpack.c.b16 %v2403, %v2397
        %v2968 = vpack.c.b16 %v2410, %v2404
        %v2969 = vpack.c.b16 %v2411, %v2405
        %v2970 = vpack.c.b16 %v2412, %v2406
        %v2971 = vpack.c.b16 %v2413, %v2407
        %v2972 = vpack.c.b16 %v2414, %v2408
        %v2973 = vpack.c.b16 %v2415, %v2409
        %v2974 = vpack.c.b16 %v2422, %v2416
        %v2975 = vpack.c.b16 %v2423, %v2417
        %v2976 = vpack.c.b16 %v2424, %v2418
        %v2977 = vpack.c.b16 %v2425, %v2419
        %v2978 = vpack.c.b16 %v2426, %v2420
        %v2979 = vpack.c.b16 %v2427, %v2421
        %v2980 = vpack.c.b16 %v2434, %v2428
        %v2981 = vpack.c.b16 %v2435, %v2429
        %v2982 = vpack.c.b16 %v2436, %v2430
        %v2983 = vpack.c.b16 %v2437, %v2431
        %v2984 = vpack.c.b16 %v2438, %v2432
        %v2985 = vpack.c.b16 %v2439, %v2433
        %v2986 = vpack.c.b16 %v2446, %v2440
        %v2987 = vpack.c.b16 %v2447, %v2441
        %v2988 = vpack.c.b16 %v2448, %v2442
        %v2989 = vpack.c.b16 %v2449, %v2443
        %v2990 = vpack.c.b16 %v2450, %v2444
        %v2991 = vpack.c.b16 %v2451, %v2445
        %v2992 = vpack.c.b16 %v2458, %v2452
        %v2993 = vpack.c.b16 %v2459, %v2453
        %v2994 = vpack.c.b16 %v2460, %v2454
        %v2995 = vpack.c.b16 %v2461, %v2455
        %v2996 = vpack.c.b16 %v2462, %v2456
        %v2997 = vpack.c.b16 %v2463, %v2457
        %v2998 = vpack.c.b16 %v2470, %v2464
        %v2999 = vpack.c.b16 %v2471, %v2465
        %v3000 = vpack.c.b16 %v2472, %v2466
        %v3001 = vpack.c.b16 %v2473, %v2467
        %v3002 = vpack.c.b16 %v2474, %v2468
        %v3003 = vpack.c.b16 %v2475, %v2469
        %v3004 = vpack.c.b16 %v2482, %v2476
        %v3005 = vpack.c.b16 %v2483, %v2477
        %v3006 = vpack.c.b16 %v2484, %v2478
        %v3007 = vpack.c.b16 %v2485, %v2479
        %v3008 = vpack.c.b16 %v2486, %v2480
        %v3009 = vpack.c.b16 %v2487, %v2481
        %v3010 = vpack.c.b16 %v2494, %v2488
        %v3011 = vpack.c.b16 %v2495, %v2489
        %v3012 = vpack.c.b16 %v2496, %v2490
        %v3013 = vpack.c.b16 %v2497, %v2491
        %v3014 = vpack.c.b16 %v2498, %v2492
        %v3015 = vpack.c.b16 %v2499, %v2493
        %v3016 = vpack.c.b16 %v2506, %v2500
        %v3017 = vpack.c.b16 %v2507, %v2501
        %v3018 = vpack.c.b16 %v2508, %v2502
        %v3019 = vpack.c.b16 %v2509, %v2503
        %v3020 = vpack.c.b16 %v2510, %v2504
        %v3021 = vpack.c.b16 %v2511, %v2505
        %v3022 = vpack.c.b16 %v2518, %v2512
        %v3023 = vpack.c.b16 %v2519, %v2513
        %v3024 = vpack.c.b16 %v2520, %v2514
        %v3025 = vpack.c.b16 %v2521, %v2515
        %v3026 = vpack.c.b16 %v2522, %v2516
        %v3027 = vpack.c.b16 %v2523, %v2517
        %v3028 = vpack.c.b16 %v2530, %v2524
        %v3029 = vpack.c.b16 %v2531, %v2525
        %v3030 = vpack.c.b16 %v2532, %v2526
        %v3031 = vpack.c.b16 %v2533, %v2527
        %v3032 = vpack.c.b16 %v2534, %v2528
        %v3033 = vpack.c.b16 %v2535, %v2529
        %v3034 = vpack.c.b16 %v2542, %v2536
        %v3035 = vpack.c.b16 %v2543, %v2537
        %v3036 = vpack.c.b16 %v2544, %v2538
        %v3037 = vpack.c.b16 %v2545, %v2539
        %v3038 = vpack.c.b16 %v2546, %v2540
        %v3039 = vpack.c.b16 %v2547, %v2541
        %v3040 = vpack.c.b16 %v2554, %v2548
        %v3041 = vpack.c.b16 %v2555, %v2549
        %v3042 = vpack.c.b16 %v2556, %v2550
        %v3043 = vpack.c.b16 %v2557, %v2551
        %v3044 = vpack.c.b16 %v2558, %v2552
        %v3045 = vpack.c.b16 %v2559, %v2553
        %v3046 = vpack.c.b16 %v2566, %v2560
        %v3047 = vpack.c.b16 %v2567, %v2561
        %v3048 = vpack.c.b16 %v2568, %v2562
        %v3049 = vpack.c.b16 %v2569, %v2563
        %v3050 = vpack.c.b16 %v2570, %v2564
        %v3051 = vpack.c.b16 %v2571, %v2565
        %v3052 = vpack.c.b16 %v2578, %v2572
        %v3053 = vpack.c.b16 %v2579, %v2573
        %v3054 = vpack.c.b16 %v2580, %v2574
        %v3055 = vpack.c.b16 %v2581, %v2575
        %v3056 = vpack.c.b16 %v2582, %v2576
        %v3057 = vpack.c.b16 %v2583, %v2577
        %v3058 = vpack.c.b16 %v2590, %v2584
        %v3059 = vpack.c.b16 %v2591, %v2585
        %v3060 = vpack.c.b16 %v2592, %v2586
        %v3061 = vpack.c.b16 %v2593, %v2587
        %v3062 = vpack.c.b16 %v2594, %v2588
        %v3063 = vpack.c.b16 %v2595, %v2589
        %v3064 = vpack.c.b16 %v2602, %v2596
        %v3065 = vpack.c.b16 %v2603, %v2597
        %v3066 = vpack.c.b16 %v2604, %v2598
        %v3067 = vpack.c.b16 %v2605, %v2599
        %v3068 = vpack.c.b16 %v2606, %v2600
        %v3069 = vpack.c.b16 %v2607, %v2601
        %v3070 = vpack.c.b16 %v2614, %v2608
        %v3071 = vpack.c.b16 %v2615, %v2609
        %v3072 = vpack.c.b16 %v2616, %v2610
        %v3073 = vpack.c.b16 %v2617, %v2611
        %v3074 = vpack.c.b16 %v2618, %v2612
        %v3075 = vpack.c.b16 %v2619, %v2613
        %v3076 = vpack.c.b16 %v2626, %v2620
        %v3077 = vpack.c.b16 %v2627, %v2621
        %v3078 = vpack.c.b16 %v2628, %v2622
        %v3079 = vpack.c.b16 %v2629, %v2623
        %v3080 = vpack.c.b16 %v2630, %v2624
        %v3081 = vpack.c.b16 %v2631, %v2625
        %v3082 = vpack.c.b16 %v2638, %v2632
        %v3083 = vpack.c.b16 %v2639, %v2633
        %v3084 = vpack.c.b16 %v2640, %v2634
        %v3085 = vpack.c.b16 %v2641, %v2635
        %v3086 = vpack.c.b16 %v2642, %v2636
        %v3087 = vpack.c.b16 %v2643, %v2637
        %v3088 = vpack.c.b16 %v2650, %v2644
        %v3089 = vpack.c.b16 %v2651, %v2645
        %v3090 = vpack.c.b16 %v2652, %v2646
        %v3091 = vpack.c.b16 %v2653, %v2647
        %v3092 = vpack.c.b16 %v2654, %v2648
        %v3093 = vpack.c.b16 %v2655, %v2649
        %v3094 = vpack.c.b16 %v2662, %v2656
        %v3095 = vpack.c.b16 %v2663, %v2657
        %v3096 = vpack.c.b16 %v2664, %v2658
        %v3097 = vpack.c.b16 %v2665, %v2659
        %v3098 = vpack.c.b16 %v2666, %v2660
        %v3099 = vpack.c.b16 %v2667, %v2661
        %v3100 = vpack.c.b16 %v2674, %v2668
        %v3101 = vpack.c.b16 %v2675, %v2669
        %v3102 = vpack.c.b16 %v2676, %v2670
        %v3103 = vpack.c.b16 %v2677, %v2671
        %v3104 = vpack.c.b16 %v2678, %v2672
        %v3105 = vpack.c.b16 %v2679, %v2673
        %v3106 = vpack.c.b16 %v2686, %v2680
        %v3107 = vpack.c.b16 %v2687, %v2681
        %v3108 = vpack.c.b16 %v2688, %v2682
        %v3109 = vpack.c.b16 %v2689, %v2683
        %v3110 = vpack.c.b16 %v2690, %v2684
        %v3111 = vpack.c.b16 %v2691, %v2685
        %v3112 = vpack.c.b16 %v2698, %v2692
        %v3113 = vpack.c.b16 %v2699, %v2693
        %v3114 = vpack.c.b16 %v2700, %v2694
        %v3115 = vpack.c.b16 %v2701, %v2695
        %v3116 = vpack.c.b16 %v2702, %v2696
        %v3117 = vpack.c.b16 %v2703, %v2697
        %v3118 = vpack.c.b16 %v2710, %v2704
        %v3119 = vpack.c.b16 %v2711, %v2705
        %v3120 = vpack.c.b16 %v2712, %v2706
        %v3121 = vpack.c.b16 %v2713, %v2707
        %v3122 = vpack.c.b16 %v2714, %v2708
        %v3123 = vpack.c.b16 %v2715, %v2709
        %v3124 = vpack.c.b16 %v2722, %v2716
        %v3125 = vpack.c.b16 %v2723, %v2717
        %v3126 = vpack.c.b16 %v2724, %v2718
        %v3127 = vpack.c.b16 %v2725, %v2719
        %v3128 = vpack.c.b16 %v2726, %v2720
        %v3129 = vpack.c.b16 %v2727, %v2721
        %v3130 = vpack.c.b16 %v2734, %v2728
        %v3131 = vpack.c.b16 %v2735, %v2729
        %v3132 = vpack.c.b16 %v2736, %v2730
        %v3133 = vpack.c.b16 %v2737, %v2731
        %v3134 = vpack.c.b16 %v2738, %v2732
        %v3135 = vpack.c.b16 %v2739, %v2733
        %v3136 = vpack.c.b16 %v2746, %v2740
        %v3137 = vpack.c.b16 %v2747, %v2741
        %v3138 = vpack.c.b16 %v2748, %v2742
        %v3139 = vpack.c.b16 %v2749, %v2743
        %v3140 = vpack.c.b16 %v2750, %v2744
        %v3141 = vpack.c.b16 %v2751, %v2745
        %v3142 = vpack.c.b16 %v2758, %v2752
        %v3143 = vpack.c.b16 %v2759, %v2753
        %v3144 = vpack.c.b16 %v2760, %v2754
        %v3145 = vpack.c.b16 %v2761, %v2755
        %v3146 = vpack.c.b16 %v2762, %v2756
        %v3147 = vpack.c.b16 %v2763, %v2757
        %v3148 = vpack.c.b16 %v2770, %v2764
        %v3149 = vpack.c.b16 %v2771, %v2765
        %v3150 = vpack.c.b16 %v2772, %v2766
        %v3151 = vpack.c.b16 %v2773, %v2767
        %v3152 = vpack.c.b16 %v2774, %v2768
        %v3153 = vpack.c.b16 %v2775, %v2769
        %v3154 = vpack.c.b16 %v2782, %v2776
        %v3155 = vpack.c.b16 %v2783, %v2777
        %v3156 = vpack.c.b16 %v2784, %v2778
        %v3157 = vpack.c.b16 %v2785, %v2779
        %v3158 = vpack.c.b16 %v2786, %v2780
        %v3159 = vpack.c.b16 %v2787, %v2781
        %v3160 = vpack.c.b16 %v2794, %v2788
        %v3161 = vpack.c.b16 %v2795, %v2789
        %v3162 = vpack.c.b16 %v2796, %v2790
        %v3163 = vpack.c.b16 %v2797, %v2791
        %v3164 = vpack.c.b16 %v2798, %v2792
        %v3165 = vpack.c.b16 %v2799, %v2793
        %v3166 = vpack.c.b16 %v2806, %v2800
        %v3167 = vpack.c.b16 %v2807, %v2801
        %v3168 = vpack.c.b16 %v2808, %v2802
        %v3169 = vpack.c.b16 %v2809, %v2803
        %v3170 = vpack.c.b16 %v2810, %v2804
        %v3171 = vpack.c.b16 %v2811, %v2805
        %v3172 = vpack.c.b16 %v2818, %v2812
        %v3173 = vpack.c.b16 %v2819, %v2813
        %v3174 = vpack.c.b16 %v2820, %v2814
        %v3175 = vpack.c.b16 %v2821, %v2815
        %v3176 = vpack.c.b16 %v2822, %v2816
        %v3177 = vpack.c.b16 %v2823, %v2817
        %v3178 = vpack.c.b16 %v2830, %v2824
        %v3179 = vpack.c.b16 %v2831, %v2825
        %v3180 = vpack.c.b16 %v2832, %v2826
        %v3181 = vpack.c.b16 %v2833, %v2827
        %v3182 = vpack.c.b16 %v2834, %v2828
        %v3183 = vpack.c.b16 %v2835, %v2829
        %v3184 = vpack.c.b16 %v2842, %v2836
        %v3185 = vpack.c.b16 %v2843, %v2837
        %v3186 = vpack.c.b16 %v2844, %v2838
        %v3187 = vpack.c.b16 %v2845, %v2839
        %v3188 = vpack.c.b16 %v2846, %v2840
        %v3189 = vpack.c.b16 %v2847, %v2841
        %v3190 = vpack.c.b16 %v2854, %v2848
        %v3191 = vpack.c.b16 %v2855, %v2849
        %v3192 = vpack.c.b16 %v2856, %v2850
        %v3193 = vpack.c.b16 %v2857, %v2851
        %v3194 = vpack.c.b16 %v2858, %v2852
        %v3195 = vpack.c.b16 %v2859, %v2853
        %v3196 = vpack.c.b16 %v2866, %v2860
        %v3197 = vpack.c.b16 %v2867, %v2861
        %v3198 = vpack.c.b16 %v2868, %v2862
        %v3199 = vpack.c.b16 %v2869, %v2863
        %v3200 = vpack.c.b16 %v2870, %v2864
        %v3201 = vpack.c.b16 %v2871, %v2865
        %v3202 = vpack.c.b16 %v2878, %v2872
        %v3203 = vpack.c.b16 %v2879, %v2873
        %v3204 = vpack.c.b16 %v2880, %v2874
        %v3205 = vpack.c.b16 %v2881, %v2875
        %v3206 = vpack.c.b16 %v2882, %v2876
        %v3207 = vpack.c.b16 %v2883, %v2877
        %v3208 = vpack.c.b16 %v2890, %v2884
        %v3209 = vpack.c.b16 %v2891, %v2885
        %v3210 = vpack.c.b16 %v2892, %v2886
        %v3211 = vpack.c.b16 %v2893, %v2887
        %v3212 = vpack.c.b16 %v2894, %v2888
        %v3213 = vpack.c.b16 %v2895, %v2889
        %v3214 = vpack.c.b16 %v2902, %v2896
        %v3215 = vpack.c.b16 %v2903, %v2897
        %v3216 = vpack.c.b16 %v2904, %v2898
        %v3217 = vpack.c.b16 %v2905, %v2899
        %v3218 = vpack.c.b16 %v2906, %v2900
        %v3219 = vpack.c.b16 %v2907, %v2901
        %v3220 = vpack.c.b16 %v2914, %v2908
        %v3221 = vpack.c.b16 %v2915, %v2909
        %v3222 = vpack.c.b16 %v2916, %v2910
        %v3223 = vpack.c.b16 %v2917, %v2911
        %v3224 = vpack.c.b16 %v2918, %v2912
        %v3225 = vpack.c.b16 %v2919, %v2913
        %v3226 = vpack.c.b16 %v2926, %v2920
        %v3227 = vpack.c.b16 %v2927, %v2921
        %v3228 = vpack.c.b16 %v2928, %v2922
        %v3229 = vpack.c.b16 %v2929, %v2923
        %v3230 = vpack.c.b16 %v2930, %v2924
        %v3231 = vpack.c.b16 %v2931, %v2925
        %v3232 = vpack.c.b16 %v2938, %v2932
        %v3233 = vpack.c.b16 %v2939, %v2933
        %v3234 = vpack.c.b16 %v2940, %v2934
        %v3235 = vpack.c.b16 %v2941, %v2935
        %v3236 = vpack.c.b16 %v2942, %v2936
        %v3237 = vpack.c.b16 %v2943, %v2937
        %v3238 = vpack.c.b16 %v2950, %v2944
        %v3239 = vpack.c.b16 %v2951, %v2945
        %v3240 = vpack.c.b16 %v2952, %v2946
        %v3241 = vpack.c.b16 %v2953, %v2947
        %v3242 = vpack.c.b16 %v2954, %v2948
        %v3243 = vpack.c.b16 %v2955, %v2949
        %3532 = vmatprep.subr.bf16.mxu0 %v2999
        %3533 = vmatpush1.bf16.msra.mxu0 %v2998
        %3534 = vmatprep.subr.bf16.mxu0 %v2993
        %3535 = vmatpush1.bf16.msra.mxu0 %v2992
        %3536 = vmatprep.subr.bf16.mxu0 %v2987
        %3537 = vmatpush1.bf16.msra.mxu0 %v2986
        %3538 = vmatprep.subr.bf16.mxu0 %v2981
        %3539 = vmatpush1.bf16.msra.mxu0 %v2980
        %3540 = vmatprep.subr.bf16.mxu0 %v2975
        %3541 = vmatpush1.bf16.msra.mxu0 %v2974
        %3542 = vmatprep.subr.bf16.mxu0 %v2969
        %3543 = vmatpush1.bf16.msra.mxu0 %v2968
        %3544 = vmatprep.subr.bf16.mxu0 %v2963
        %3545 = vmatpush1.bf16.msra.mxu0 %v2962
        %3546 = vmatprep.subr.bf16.mxu0 %v2957
        %3547 = vmatpush1.bf16.msra.mxu0 %v2956
        %3548 = vmatprep.subr.bf16.mxu0 %v3047
        %3549 = vmatpush2.bf16.msra.mxu0 %v3046
        %3550 = vmatprep.subr.bf16.mxu0 %v3041
        %3551 = vmatpush2.bf16.msra.mxu0 %v3040
        %3552 = vmatprep.subr.bf16.mxu0 %v3035
        %3553 = vmatpush2.bf16.msra.mxu0 %v3034
        %3554 = vmatprep.subr.bf16.mxu0 %v3029
        %3555 = vmatpush2.bf16.msra.mxu0 %v3028
        %3556 = vmatprep.subr.bf16.mxu0 %v3023
        %3557 = vmatpush2.bf16.msra.mxu0 %v3022
        %3558 = vmatprep.subr.bf16.mxu0 %v3017
        %3559 = vmatpush2.bf16.msra.mxu0 %v3016
        %3560 = vmatprep.subr.bf16.mxu0 %v3011
        %3561 = vmatpush2.bf16.msra.mxu0 %v3010
        %3562 = vmatprep.subr.bf16.mxu0 %v3005
        %3563 = vmatpush2.bf16.msra.mxu0 %v3004
        %3564 = vmatprep.mubr.bf16.mxu0 %v1700
        %3565 = vmatmul.mubr.bf16.gmra.mxu0 %v1676
        %v3566 = vpop.f32.mrf.mxu0
        %v3567 = vadd.f32 0.0, %v3566
        %v3568 = vpop.f32.mrf.mxu0
        %v3569 = vadd.f32 0.0, %v3568
        %v3570 = vpop.f32.mrf.mxu0
        %v3571 = vadd.f32 0.0, %v3570
        %v3572 = vpop.f32.mrf.mxu0
        %v3573 = vadd.f32 0.0, %v3572
        %3574 = vmatprep.mubr.bf16.mxu0 %v1701
        %3575 = vmatmul.mubr.bf16.gmra.mxu0 %v1677
        %v3576 = vpop.f32.mrf.mxu0
        %v3577 = vadd.f32 0.0, %v3576
        %v3578 = vpop.f32.mrf.mxu0
        %v3579 = vadd.f32 0.0, %v3578
        %v3580 = vpop.f32.mrf.mxu0
        %v3581 = vadd.f32 0.0, %v3580
        %v3582 = vpop.f32.mrf.mxu0
        %v3583 = vadd.f32 0.0, %v3582
        %3584 = vmatprep.mubr.bf16.mxu0 %v1702
        %3585 = vmatmul.mubr.bf16.gmra.mxu0 %v1678
        %v3586 = vpop.f32.mrf.mxu0
        %v3587 = vadd.f32 0.0, %v3586
        %v3588 = vpop.f32.mrf.mxu0
        %v3589 = vadd.f32 0.0, %v3588
        %v3590 = vpop.f32.mrf.mxu0
        %v3591 = vadd.f32 0.0, %v3590
        %v3592 = vpop.f32.mrf.mxu0
        %v3593 = vadd.f32 0.0, %v3592
        %3594 = vmatprep.mubr.bf16.mxu0 %v1703
        %3595 = vmatmul.mubr.bf16.gmra.mxu0 %v1679
        %v3596 = vpop.f32.mrf.mxu0
        %v3597 = vadd.f32 0.0, %v3596
        %v3598 = vpop.f32.mrf.mxu0
        %v3599 = vadd.f32 0.0, %v3598
        %v3600 = vpop.f32.mrf.mxu0
        %v3601 = vadd.f32 0.0, %v3600
        %v3602 = vpop.f32.mrf.mxu0
        %v3603 = vadd.f32 0.0, %v3602
        %3604 = vdwg.mxu0
        %3605 = vmatprep.subr.bf16.mxu0 %v3095
        %3606 = vmatpush1.bf16.msra.mxu0 %v3094
        %3607 = vmatprep.subr.bf16.mxu0 %v3089
        %3608 = vmatpush1.bf16.msra.mxu0 %v3088
        %3609 = vmatprep.subr.bf16.mxu0 %v3083
        %3610 = vmatpush1.bf16.msra.mxu0 %v3082
        %3611 = vmatprep.subr.bf16.mxu0 %v3077
        %3612 = vmatpush1.bf16.msra.mxu0 %v3076
        %3613 = vmatprep.subr.bf16.mxu0 %v3071
        %3614 = vmatpush1.bf16.msra.mxu0 %v3070
        %3615 = vmatprep.subr.bf16.mxu0 %v3065
        %3616 = vmatpush1.bf16.msra.mxu0 %v3064
        %3617 = vmatprep.subr.bf16.mxu0 %v3059
        %3618 = vmatpush1.bf16.msra.mxu0 %v3058
        %3619 = vmatprep.subr.bf16.mxu0 %v3053
        %3620 = vmatpush1.bf16.msra.mxu0 %v3052
        %3621 = vmatprep.subr.bf16.mxu0 %v3143
        %3622 = vmatpush2.bf16.msra.mxu0 %v3142
        %3623 = vmatprep.subr.bf16.mxu0 %v3137
        %3624 = vmatpush2.bf16.msra.mxu0 %v3136
        %3625 = vmatprep.subr.bf16.mxu0 %v3131
        %3626 = vmatpush2.bf16.msra.mxu0 %v3130
        %3627 = vmatprep.subr.bf16.mxu0 %v3125
        %3628 = vmatpush2.bf16.msra.mxu0 %v3124
        %3629 = vmatprep.subr.bf16.mxu0 %v3119
        %3630 = vmatpush2.bf16.msra.mxu0 %v3118
        %3631 = vmatprep.subr.bf16.mxu0 %v3113
        %3632 = vmatpush2.bf16.msra.mxu0 %v3112
        %3633 = vmatprep.subr.bf16.mxu0 %v3107
        %3634 = vmatpush2.bf16.msra.mxu0 %v3106
        %3635 = vmatprep.subr.bf16.mxu0 %v3101
        %3636 = vmatpush2.bf16.msra.mxu0 %v3100
        %3637 = vmatprep.mubr.bf16.mxu0 %v1748
        %3638 = vmatmul.mubr.bf16.gmra.mxu0 %v1724
        %v3639 = vpop.f32.mrf.mxu0
        %v3640 = vadd.f32 %v3567, %v3639
        %v3641 = vpop.f32.mrf.mxu0
        %v3642 = vadd.f32 %v3569, %v3641
        %v3643 = vpop.f32.mrf.mxu0
        %v3644 = vadd.f32 %v3571, %v3643
        %v3645 = vpop.f32.mrf.mxu0
        %v3646 = vadd.f32 %v3573, %v3645
        %3647 = vmatprep.mubr.bf16.mxu0 %v1749
        %3648 = vmatmul.mubr.bf16.gmra.mxu0 %v1725
        %v3649 = vpop.f32.mrf.mxu0
        %v3650 = vadd.f32 %v3577, %v3649
        %v3651 = vpop.f32.mrf.mxu0
        %v3652 = vadd.f32 %v3579, %v3651
        %v3653 = vpop.f32.mrf.mxu0
        %v3654 = vadd.f32 %v3581, %v3653
        %v3655 = vpop.f32.mrf.mxu0
        %v3656 = vadd.f32 %v3583, %v3655
        %3657 = vmatprep.mubr.bf16.mxu0 %v1750
        %3658 = vmatmul.mubr.bf16.gmra.mxu0 %v1726
        %v3659 = vpop.f32.mrf.mxu0
        %v3660 = vadd.f32 %v3587, %v3659
        %v3661 = vpop.f32.mrf.mxu0
        %v3662 = vadd.f32 %v3589, %v3661
        %v3663 = vpop.f32.mrf.mxu0
        %v3664 = vadd.f32 %v3591, %v3663
        %v3665 = vpop.f32.mrf.mxu0
        %v3666 = vadd.f32 %v3593, %v3665
        %3667 = vmatprep.mubr.bf16.mxu0 %v1751
        %3668 = vmatmul.mubr.bf16.gmra.mxu0 %v1727
        %v3669 = vpop.f32.mrf.mxu0
        %v3670 = vadd.f32 %v3597, %v3669
        %v3671 = vpop.f32.mrf.mxu0
        %v3672 = vadd.f32 %v3599, %v3671
        %v3673 = vpop.f32.mrf.mxu0
        %v3674 = vadd.f32 %v3601, %v3673
        %v3675 = vpop.f32.mrf.mxu0
        %v3676 = vadd.f32 %v3603, %v3675
        %3677 = vdwg.mxu0
        %3678 = vmatprep.subr.bf16.mxu0 %v3191
        %3679 = vmatpush1.bf16.msra.mxu0 %v3190
        %3680 = vmatprep.subr.bf16.mxu0 %v3185
        %3681 = vmatpush1.bf16.msra.mxu0 %v3184
        %3682 = vmatprep.subr.bf16.mxu0 %v3179
        %3683 = vmatpush1.bf16.msra.mxu0 %v3178
        %3684 = vmatprep.subr.bf16.mxu0 %v3173
        %3685 = vmatpush1.bf16.msra.mxu0 %v3172
        %3686 = vmatprep.subr.bf16.mxu0 %v3167
        %3687 = vmatpush1.bf16.msra.mxu0 %v3166
        %3688 = vmatprep.subr.bf16.mxu0 %v3161
        %3689 = vmatpush1.bf16.msra.mxu0 %v3160
        %3690 = vmatprep.subr.bf16.mxu0 %v3155
        %3691 = vmatpush1.bf16.msra.mxu0 %v3154
        %3692 = vmatprep.subr.bf16.mxu0 %v3149
        %3693 = vmatpush1.bf16.msra.mxu0 %v3148
        %3694 = vmatprep.subr.bf16.mxu0 %v3239
        %3695 = vmatpush2.bf16.msra.mxu0 %v3238
        %3696 = vmatprep.subr.bf16.mxu0 %v3233
        %3697 = vmatpush2.bf16.msra.mxu0 %v3232
        %3698 = vmatprep.subr.bf16.mxu0 %v3227
        %3699 = vmatpush2.bf16.msra.mxu0 %v3226
        %3700 = vmatprep.subr.bf16.mxu0 %v3221
        %3701 = vmatpush2.bf16.msra.mxu0 %v3220
        %3702 = vmatprep.subr.bf16.mxu0 %v3215
        %3703 = vmatpush2.bf16.msra.mxu0 %v3214
        %3704 = vmatprep.subr.bf16.mxu0 %v3209
        %3705 = vmatpush2.bf16.msra.mxu0 %v3208
        %3706 = vmatprep.subr.bf16.mxu0 %v3203
        %3707 = vmatpush2.bf16.msra.mxu0 %v3202
        %3708 = vmatprep.subr.bf16.mxu0 %v3197
        %3709 = vmatpush2.bf16.msra.mxu0 %v3196
        %3710 = vmatprep.mubr.bf16.mxu0 %v1796
        %3711 = vmatmul.mubr.bf16.gmra.mxu0 %v1772
        %v3712 = vpop.f32.mrf.mxu0
        %v3713 = vadd.f32 %v3640, %v3712
        %v3714 = vpop.f32.mrf.mxu0
        %v3715 = vadd.f32 %v3642, %v3714
        %v3716 = vpop.f32.mrf.mxu0
        %v3717 = vadd.f32 %v3644, %v3716
        %v3718 = vpop.f32.mrf.mxu0
        %v3719 = vadd.f32 %v3646, %v3718
        %3720 = vmatprep.mubr.bf16.mxu0 %v1797
        %3721 = vmatmul.mubr.bf16.gmra.mxu0 %v1773
        %v3722 = vpop.f32.mrf.mxu0
        %v3723 = vadd.f32 %v3650, %v3722
        %v3724 = vpop.f32.mrf.mxu0
        %v3725 = vadd.f32 %v3652, %v3724
        %v3726 = vpop.f32.mrf.mxu0
        %v3727 = vadd.f32 %v3654, %v3726
        %v3728 = vpop.f32.mrf.mxu0
        %v3729 = vadd.f32 %v3656, %v3728
        %3730 = vmatprep.mubr.bf16.mxu0 %v1798
        %3731 = vmatmul.mubr.bf16.gmra.mxu0 %v1774
        %v3732 = vpop.f32.mrf.mxu0
        %v3733 = vadd.f32 %v3660, %v3732
        %v3734 = vpop.f32.mrf.mxu0
        %v3735 = vadd.f32 %v3662, %v3734
        %v3736 = vpop.f32.mrf.mxu0
        %v3737 = vadd.f32 %v3664, %v3736
        %v3738 = vpop.f32.mrf.mxu0
        %v3739 = vadd.f32 %v3666, %v3738
        %3740 = vmatprep.mubr.bf16.mxu0 %v1799
        %3741 = vmatmul.mubr.bf16.gmra.mxu0 %v1775
        %v3742 = vpop.f32.mrf.mxu0
        %v3743 = vadd.f32 %v3670, %v3742
        %v3744 = vpop.f32.mrf.mxu0
        %v3745 = vadd.f32 %v3672, %v3744
        %v3746 = vpop.f32.mrf.mxu0
        %v3747 = vadd.f32 %v3674, %v3746
        %v3748 = vpop.f32.mrf.mxu0
        %v3749 = vadd.f32 %v3676, %v3748
        %3750 = vdwg.mxu0
        %3751 = vmatprep.subr.bf16.mxu0 %v3001
        %3752 = vmatpush1.bf16.msra.mxu0 %v3000
        %3753 = vmatprep.subr.bf16.mxu0 %v2995
        %3754 = vmatpush1.bf16.msra.mxu0 %v2994
        %3755 = vmatprep.subr.bf16.mxu0 %v2989
        %3756 = vmatpush1.bf16.msra.mxu0 %v2988
        %3757 = vmatprep.subr.bf16.mxu0 %v2983
        %3758 = vmatpush1.bf16.msra.mxu0 %v2982
        %3759 = vmatprep.subr.bf16.mxu0 %v2977
        %3760 = vmatpush1.bf16.msra.mxu0 %v2976
        %3761 = vmatprep.subr.bf16.mxu0 %v2971
        %3762 = vmatpush1.bf16.msra.mxu0 %v2970
        %3763 = vmatprep.subr.bf16.mxu0 %v2965
        %3764 = vmatpush1.bf16.msra.mxu0 %v2964
        %3765 = vmatprep.subr.bf16.mxu0 %v2959
        %3766 = vmatpush1.bf16.msra.mxu0 %v2958
        %3767 = vmatprep.subr.bf16.mxu0 %v3049
        %3768 = vmatpush2.bf16.msra.mxu0 %v3048
        %3769 = vmatprep.subr.bf16.mxu0 %v3043
        %3770 = vmatpush2.bf16.msra.mxu0 %v3042
        %3771 = vmatprep.subr.bf16.mxu0 %v3037
        %3772 = vmatpush2.bf16.msra.mxu0 %v3036
        %3773 = vmatprep.subr.bf16.mxu0 %v3031
        %3774 = vmatpush2.bf16.msra.mxu0 %v3030
        %3775 = vmatprep.subr.bf16.mxu0 %v3025
        %3776 = vmatpush2.bf16.msra.mxu0 %v3024
        %3777 = vmatprep.subr.bf16.mxu0 %v3019
        %3778 = vmatpush2.bf16.msra.mxu0 %v3018
        %3779 = vmatprep.subr.bf16.mxu0 %v3013
        %3780 = vmatpush2.bf16.msra.mxu0 %v3012
        %3781 = vmatprep.subr.bf16.mxu0 %v3007
        %3782 = vmatpush2.bf16.msra.mxu0 %v3006
        %3783 = vmatprep.mubr.bf16.mxu0 %v1700
        %3784 = vmatmul.mubr.bf16.gmra.mxu0 %v1676
        %v3785 = vpop.f32.mrf.mxu0
        %v3786 = vadd.f32 0.0, %v3785
        %v3787 = vpop.f32.mrf.mxu0
        %v3788 = vadd.f32 0.0, %v3787
        %v3789 = vpop.f32.mrf.mxu0
        %v3790 = vadd.f32 0.0, %v3789
        %v3791 = vpop.f32.mrf.mxu0
        %v3792 = vadd.f32 0.0, %v3791
        %3793 = vmatprep.mubr.bf16.mxu0 %v1701
        %3794 = vmatmul.mubr.bf16.gmra.mxu0 %v1677
        %v3795 = vpop.f32.mrf.mxu0
        %v3796 = vadd.f32 0.0, %v3795
        %v3797 = vpop.f32.mrf.mxu0
        %v3798 = vadd.f32 0.0, %v3797
        %v3799 = vpop.f32.mrf.mxu0
        %v3800 = vadd.f32 0.0, %v3799
        %v3801 = vpop.f32.mrf.mxu0
        %v3802 = vadd.f32 0.0, %v3801
        %3803 = vmatprep.mubr.bf16.mxu0 %v1702
        %3804 = vmatmul.mubr.bf16.gmra.mxu0 %v1678
        %v3805 = vpop.f32.mrf.mxu0
        %v3806 = vadd.f32 0.0, %v3805
        %v3807 = vpop.f32.mrf.mxu0
        %v3808 = vadd.f32 0.0, %v3807
        %v3809 = vpop.f32.mrf.mxu0
        %v3810 = vadd.f32 0.0, %v3809
        %v3811 = vpop.f32.mrf.mxu0
        %v3812 = vadd.f32 0.0, %v3811
        %3813 = vmatprep.mubr.bf16.mxu0 %v1703
        %3814 = vmatmul.mubr.bf16.gmra.mxu0 %v1679
        %v3815 = vpop.f32.mrf.mxu0
        %v3816 = vadd.f32 0.0, %v3815
        %v3817 = vpop.f32.mrf.mxu0
        %v3818 = vadd.f32 0.0, %v3817
        %v3819 = vpop.f32.mrf.mxu0
        %v3820 = vadd.f32 0.0, %v3819
        %v3821 = vpop.f32.mrf.mxu0
        %v3822 = vadd.f32 0.0, %v3821
        %3823 = vdwg.mxu0
        %3824 = vmatprep.subr.bf16.mxu0 %v3097
        %3825 = vmatpush1.bf16.msra.mxu0 %v3096
        %3826 = vmatprep.subr.bf16.mxu0 %v3091
        %3827 = vmatpush1.bf16.msra.mxu0 %v3090
        %3828 = vmatprep.subr.bf16.mxu0 %v3085
        %3829 = vmatpush1.bf16.msra.mxu0 %v3084
        %3830 = vmatprep.subr.bf16.mxu0 %v3079
        %3831 = vmatpush1.bf16.msra.mxu0 %v3078
        %3832 = vmatprep.subr.bf16.mxu0 %v3073
        %3833 = vmatpush1.bf16.msra.mxu0 %v3072
        %3834 = vmatprep.subr.bf16.mxu0 %v3067
        %3835 = vmatpush1.bf16.msra.mxu0 %v3066
        %3836 = vmatprep.subr.bf16.mxu0 %v3061
        %3837 = vmatpush1.bf16.msra.mxu0 %v3060
        %3838 = vmatprep.subr.bf16.mxu0 %v3055
        %3839 = vmatpush1.bf16.msra.mxu0 %v3054
        %3840 = vmatprep.subr.bf16.mxu0 %v3145
        %3841 = vmatpush2.bf16.msra.mxu0 %v3144
        %3842 = vmatprep.subr.bf16.mxu0 %v3139
        %3843 = vmatpush2.bf16.msra.mxu0 %v3138
        %3844 = vmatprep.subr.bf16.mxu0 %v3133
        %3845 = vmatpush2.bf16.msra.mxu0 %v3132
        %3846 = vmatprep.subr.bf16.mxu0 %v3127
        %3847 = vmatpush2.bf16.msra.mxu0 %v3126
        %3848 = vmatprep.subr.bf16.mxu0 %v3121
        %3849 = vmatpush2.bf16.msra.mxu0 %v3120
        %3850 = vmatprep.subr.bf16.mxu0 %v3115
        %3851 = vmatpush2.bf16.msra.mxu0 %v3114
        %3852 = vmatprep.subr.bf16.mxu0 %v3109
        %3853 = vmatpush2.bf16.msra.mxu0 %v3108
        %3854 = vmatprep.subr.bf16.mxu0 %v3103
        %3855 = vmatpush2.bf16.msra.mxu0 %v3102
        %3856 = vmatprep.mubr.bf16.mxu0 %v1748
        %3857 = vmatmul.mubr.bf16.gmra.mxu0 %v1724
        %v3858 = vpop.f32.mrf.mxu0
        %v3859 = vadd.f32 %v3786, %v3858
        %v3860 = vpop.f32.mrf.mxu0
        %v3861 = vadd.f32 %v3788, %v3860
        %v3862 = vpop.f32.mrf.mxu0
        %v3863 = vadd.f32 %v3790, %v3862
        %v3864 = vpop.f32.mrf.mxu0
        %v3865 = vadd.f32 %v3792, %v3864
        %3866 = vmatprep.mubr.bf16.mxu0 %v1749
        %3867 = vmatmul.mubr.bf16.gmra.mxu0 %v1725
        %v3868 = vpop.f32.mrf.mxu0
        %v3869 = vadd.f32 %v3796, %v3868
        %v3870 = vpop.f32.mrf.mxu0
        %v3871 = vadd.f32 %v3798, %v3870
        %v3872 = vpop.f32.mrf.mxu0
        %v3873 = vadd.f32 %v3800, %v3872
        %v3874 = vpop.f32.mrf.mxu0
        %v3875 = vadd.f32 %v3802, %v3874
        %3876 = vmatprep.mubr.bf16.mxu0 %v1750
        %3877 = vmatmul.mubr.bf16.gmra.mxu0 %v1726
        %v3878 = vpop.f32.mrf.mxu0
        %v3879 = vadd.f32 %v3806, %v3878
        %v3880 = vpop.f32.mrf.mxu0
        %v3881 = vadd.f32 %v3808, %v3880
        %v3882 = vpop.f32.mrf.mxu0
        %v3883 = vadd.f32 %v3810, %v3882
        %v3884 = vpop.f32.mrf.mxu0
        %v3885 = vadd.f32 %v3812, %v3884
        %3886 = vmatprep.mubr.bf16.mxu0 %v1751
        %3887 = vmatmul.mubr.bf16.gmra.mxu0 %v1727
        %v3888 = vpop.f32.mrf.mxu0
        %v3889 = vadd.f32 %v3816, %v3888
        %v3890 = vpop.f32.mrf.mxu0
        %v3891 = vadd.f32 %v3818, %v3890
        %v3892 = vpop.f32.mrf.mxu0
        %v3893 = vadd.f32 %v3820, %v3892
        %v3894 = vpop.f32.mrf.mxu0
        %v3895 = vadd.f32 %v3822, %v3894
        %3896 = vdwg.mxu0
        %3897 = vmatprep.subr.bf16.mxu0 %v3193
        %3898 = vmatpush1.bf16.msra.mxu0 %v3192
        %3899 = vmatprep.subr.bf16.mxu0 %v3187
        %3900 = vmatpush1.bf16.msra.mxu0 %v3186
        %3901 = vmatprep.subr.bf16.mxu0 %v3181
        %3902 = vmatpush1.bf16.msra.mxu0 %v3180
        %3903 = vmatprep.subr.bf16.mxu0 %v3175
        %3904 = vmatpush1.bf16.msra.mxu0 %v3174
        %3905 = vmatprep.subr.bf16.mxu0 %v3169
        %3906 = vmatpush1.bf16.msra.mxu0 %v3168
        %3907 = vmatprep.subr.bf16.mxu0 %v3163
        %3908 = vmatpush1.bf16.msra.mxu0 %v3162
        %3909 = vmatprep.subr.bf16.mxu0 %v3157
        %3910 = vmatpush1.bf16.msra.mxu0 %v3156
        %3911 = vmatprep.subr.bf16.mxu0 %v3151
        %3912 = vmatpush1.bf16.msra.mxu0 %v3150
        %3913 = vmatprep.subr.bf16.mxu0 %v3241
        %3914 = vmatpush2.bf16.msra.mxu0 %v3240
        %3915 = vmatprep.subr.bf16.mxu0 %v3235
        %3916 = vmatpush2.bf16.msra.mxu0 %v3234
        %3917 = vmatprep.subr.bf16.mxu0 %v3229
        %3918 = vmatpush2.bf16.msra.mxu0 %v3228
        %3919 = vmatprep.subr.bf16.mxu0 %v3223
        %3920 = vmatpush2.bf16.msra.mxu0 %v3222
        %3921 = vmatprep.subr.bf16.mxu0 %v3217
        %3922 = vmatpush2.bf16.msra.mxu0 %v3216
        %3923 = vmatprep.subr.bf16.mxu0 %v3211
        %3924 = vmatpush2.bf16.msra.mxu0 %v3210
        %3925 = vmatprep.subr.bf16.mxu0 %v3205
        %3926 = vmatpush2.bf16.msra.mxu0 %v3204
        %3927 = vmatprep.subr.bf16.mxu0 %v3199
        %3928 = vmatpush2.bf16.msra.mxu0 %v3198
        %3929 = vmatprep.mubr.bf16.mxu0 %v1796
        %3930 = vmatmul.mubr.bf16.gmra.mxu0 %v1772
        %v3931 = vpop.f32.mrf.mxu0
        %v3932 = vadd.f32 %v3859, %v3931
        %v3933 = vpop.f32.mrf.mxu0
        %v3934 = vadd.f32 %v3861, %v3933
        %v3935 = vpop.f32.mrf.mxu0
        %v3936 = vadd.f32 %v3863, %v3935
        %v3937 = vpop.f32.mrf.mxu0
        %v3938 = vadd.f32 %v3865, %v3937
        %3939 = vmatprep.mubr.bf16.mxu0 %v1797
        %3940 = vmatmul.mubr.bf16.gmra.mxu0 %v1773
        %v3941 = vpop.f32.mrf.mxu0
        %v3942 = vadd.f32 %v3869, %v3941
        %v3943 = vpop.f32.mrf.mxu0
        %v3944 = vadd.f32 %v3871, %v3943
        %v3945 = vpop.f32.mrf.mxu0
        %v3946 = vadd.f32 %v3873, %v3945
        %v3947 = vpop.f32.mrf.mxu0
        %v3948 = vadd.f32 %v3875, %v3947
        %3949 = vmatprep.mubr.bf16.mxu0 %v1798
        %3950 = vmatmul.mubr.bf16.gmra.mxu0 %v1774
        %v3951 = vpop.f32.mrf.mxu0
        %v3952 = vadd.f32 %v3879, %v3951
        %v3953 = vpop.f32.mrf.mxu0
        %v3954 = vadd.f32 %v3881, %v3953
        %v3955 = vpop.f32.mrf.mxu0
        %v3956 = vadd.f32 %v3883, %v3955
        %v3957 = vpop.f32.mrf.mxu0
        %v3958 = vadd.f32 %v3885, %v3957
        %3959 = vmatprep.mubr.bf16.mxu0 %v1799
        %3960 = vmatmul.mubr.bf16.gmra.mxu0 %v1775
        %v3961 = vpop.f32.mrf.mxu0
        %v3962 = vadd.f32 %v3889, %v3961
        %v3963 = vpop.f32.mrf.mxu0
        %v3964 = vadd.f32 %v3891, %v3963
        %v3965 = vpop.f32.mrf.mxu0
        %v3966 = vadd.f32 %v3893, %v3965
        %v3967 = vpop.f32.mrf.mxu0
        %v3968 = vadd.f32 %v3895, %v3967
        %3969 = vdwg.mxu0
        %3970 = vmatprep.subr.bf16.mxu0 %v3003
        %3971 = vmatpush1.bf16.msra.mxu0 %v3002
        %3972 = vmatprep.subr.bf16.mxu0 %v2997
        %3973 = vmatpush1.bf16.msra.mxu0 %v2996
        %3974 = vmatprep.subr.bf16.mxu0 %v2991
        %3975 = vmatpush1.bf16.msra.mxu0 %v2990
        %3976 = vmatprep.subr.bf16.mxu0 %v2985
        %3977 = vmatpush1.bf16.msra.mxu0 %v2984
        %3978 = vmatprep.subr.bf16.mxu0 %v2979
        %3979 = vmatpush1.bf16.msra.mxu0 %v2978
        %3980 = vmatprep.subr.bf16.mxu0 %v2973
        %3981 = vmatpush1.bf16.msra.mxu0 %v2972
        %3982 = vmatprep.subr.bf16.mxu0 %v2967
        %3983 = vmatpush1.bf16.msra.mxu0 %v2966
        %3984 = vmatprep.subr.bf16.mxu0 %v2961
        %3985 = vmatpush1.bf16.msra.mxu0 %v2960
        %3986 = vmatprep.subr.bf16.mxu0 %v3051
        %3987 = vmatpush2.bf16.msra.mxu0 %v3050
        %3988 = vmatprep.subr.bf16.mxu0 %v3045
        %3989 = vmatpush2.bf16.msra.mxu0 %v3044
        %3990 = vmatprep.subr.bf16.mxu0 %v3039
        %3991 = vmatpush2.bf16.msra.mxu0 %v3038
        %3992 = vmatprep.subr.bf16.mxu0 %v3033
        %3993 = vmatpush2.bf16.msra.mxu0 %v3032
        %3994 = vmatprep.subr.bf16.mxu0 %v3027
        %3995 = vmatpush2.bf16.msra.mxu0 %v3026
        %3996 = vmatprep.subr.bf16.mxu0 %v3021
        %3997 = vmatpush2.bf16.msra.mxu0 %v3020
        %3998 = vmatprep.subr.bf16.mxu0 %v3015
        %3999 = vmatpush2.bf16.msra.mxu0 %v3014
        %4000 = vmatprep.subr.bf16.mxu0 %v3009
        %4001 = vmatpush2.bf16.msra.mxu0 %v3008
        %4002 = vmatprep.mubr.bf16.mxu0 %v1700
        %4003 = vmatmul.mubr.bf16.gmra.mxu0 %v1676
        %v4004 = vpop.f32.mrf.mxu0
        %v4005 = vadd.f32 0.0, %v4004
        %v4006 = vpop.f32.mrf.mxu0
        %v4007 = vadd.f32 0.0, %v4006
        %v4008 = vpop.f32.mrf.mxu0
        %v4009 = vadd.f32 0.0, %v4008
        %v4010 = vpop.f32.mrf.mxu0
        %v4011 = vadd.f32 0.0, %v4010
        %4012 = vmatprep.mubr.bf16.mxu0 %v1701
        %4013 = vmatmul.mubr.bf16.gmra.mxu0 %v1677
        %v4014 = vpop.f32.mrf.mxu0
        %v4015 = vadd.f32 0.0, %v4014
        %v4016 = vpop.f32.mrf.mxu0
        %v4017 = vadd.f32 0.0, %v4016
        %v4018 = vpop.f32.mrf.mxu0
        %v4019 = vadd.f32 0.0, %v4018
        %v4020 = vpop.f32.mrf.mxu0
        %v4021 = vadd.f32 0.0, %v4020
        %4022 = vmatprep.mubr.bf16.mxu0 %v1702
        %4023 = vmatmul.mubr.bf16.gmra.mxu0 %v1678
        %v4024 = vpop.f32.mrf.mxu0
        %v4025 = vadd.f32 0.0, %v4024
        %v4026 = vpop.f32.mrf.mxu0
        %v4027 = vadd.f32 0.0, %v4026
        %v4028 = vpop.f32.mrf.mxu0
        %v4029 = vadd.f32 0.0, %v4028
        %v4030 = vpop.f32.mrf.mxu0
        %v4031 = vadd.f32 0.0, %v4030
        %4032 = vmatprep.mubr.bf16.mxu0 %v1703
        %4033 = vmatmul.mubr.bf16.gmra.mxu0 %v1679
        %v4034 = vpop.f32.mrf.mxu0
        %v4035 = vadd.f32 0.0, %v4034
        %v4036 = vpop.f32.mrf.mxu0
        %v4037 = vadd.f32 0.0, %v4036
        %v4038 = vpop.f32.mrf.mxu0
        %v4039 = vadd.f32 0.0, %v4038
        %v4040 = vpop.f32.mrf.mxu0
        %v4041 = vadd.f32 0.0, %v4040
        %4042 = vdwg.mxu0
        %4043 = vmatprep.subr.bf16.mxu0 %v3099
        %4044 = vmatpush1.bf16.msra.mxu0 %v3098
        %4045 = vmatprep.subr.bf16.mxu0 %v3093
        %4046 = vmatpush1.bf16.msra.mxu0 %v3092
        %4047 = vmatprep.subr.bf16.mxu0 %v3087
        %4048 = vmatpush1.bf16.msra.mxu0 %v3086
        %4049 = vmatprep.subr.bf16.mxu0 %v3081
        %4050 = vmatpush1.bf16.msra.mxu0 %v3080
        %4051 = vmatprep.subr.bf16.mxu0 %v3075
        %4052 = vmatpush1.bf16.msra.mxu0 %v3074
        %4053 = vmatprep.subr.bf16.mxu0 %v3069
        %4054 = vmatpush1.bf16.msra.mxu0 %v3068
        %4055 = vmatprep.subr.bf16.mxu0 %v3063
        %4056 = vmatpush1.bf16.msra.mxu0 %v3062
        %4057 = vmatprep.subr.bf16.mxu0 %v3057
        %4058 = vmatpush1.bf16.msra.mxu0 %v3056
        %4059 = vmatprep.subr.bf16.mxu0 %v3147
        %4060 = vmatpush2.bf16.msra.mxu0 %v3146
        %4061 = vmatprep.subr.bf16.mxu0 %v3141
        %4062 = vmatpush2.bf16.msra.mxu0 %v3140
        %4063 = vmatprep.subr.bf16.mxu0 %v3135
        %4064 = vmatpush2.bf16.msra.mxu0 %v3134
        %4065 = vmatprep.subr.bf16.mxu0 %v3129
        %4066 = vmatpush2.bf16.msra.mxu0 %v3128
        %4067 = vmatprep.subr.bf16.mxu0 %v3123
        %4068 = vmatpush2.bf16.msra.mxu0 %v3122
        %4069 = vmatprep.subr.bf16.mxu0 %v3117
        %4070 = vmatpush2.bf16.msra.mxu0 %v3116
        %4071 = vmatprep.subr.bf16.mxu0 %v3111
        %4072 = vmatpush2.bf16.msra.mxu0 %v3110
        %4073 = vmatprep.subr.bf16.mxu0 %v3105
        %4074 = vmatpush2.bf16.msra.mxu0 %v3104
        %4075 = vmatprep.mubr.bf16.mxu0 %v1748
        %4076 = vmatmul.mubr.bf16.gmra.mxu0 %v1724
        %v4077 = vpop.f32.mrf.mxu0
        %v4078 = vadd.f32 %v4005, %v4077
        %v4079 = vpop.f32.mrf.mxu0
        %v4080 = vadd.f32 %v4007, %v4079
        %v4081 = vpop.f32.mrf.mxu0
        %v4082 = vadd.f32 %v4009, %v4081
        %v4083 = vpop.f32.mrf.mxu0
        %v4084 = vadd.f32 %v4011, %v4083
        %4085 = vmatprep.mubr.bf16.mxu0 %v1749
        %4086 = vmatmul.mubr.bf16.gmra.mxu0 %v1725
        %v4087 = vpop.f32.mrf.mxu0
        %v4088 = vadd.f32 %v4015, %v4087
        %v4089 = vpop.f32.mrf.mxu0
        %v4090 = vadd.f32 %v4017, %v4089
        %v4091 = vpop.f32.mrf.mxu0
        %v4092 = vadd.f32 %v4019, %v4091
        %v4093 = vpop.f32.mrf.mxu0
        %v4094 = vadd.f32 %v4021, %v4093
        %4095 = vmatprep.mubr.bf16.mxu0 %v1750
        %4096 = vmatmul.mubr.bf16.gmra.mxu0 %v1726
        %v4097 = vpop.f32.mrf.mxu0
        %v4098 = vadd.f32 %v4025, %v4097
        %v4099 = vpop.f32.mrf.mxu0
        %v4100 = vadd.f32 %v4027, %v4099
        %v4101 = vpop.f32.mrf.mxu0
        %v4102 = vadd.f32 %v4029, %v4101
        %v4103 = vpop.f32.mrf.mxu0
        %v4104 = vadd.f32 %v4031, %v4103
        %4105 = vmatprep.mubr.bf16.mxu0 %v1751
        %4106 = vmatmul.mubr.bf16.gmra.mxu0 %v1727
        %v4107 = vpop.f32.mrf.mxu0
        %v4108 = vadd.f32 %v4035, %v4107
        %v4109 = vpop.f32.mrf.mxu0
        %v4110 = vadd.f32 %v4037, %v4109
        %v4111 = vpop.f32.mrf.mxu0
        %v4112 = vadd.f32 %v4039, %v4111
        %v4113 = vpop.f32.mrf.mxu0
        %v4114 = vadd.f32 %v4041, %v4113
        %4115 = vdwg.mxu0
        %4116 = vmatprep.subr.bf16.mxu0 %v3195
        %4117 = vmatpush1.bf16.msra.mxu0 %v3194
        %4118 = vmatprep.subr.bf16.mxu0 %v3189
        %4119 = vmatpush1.bf16.msra.mxu0 %v3188
        %4120 = vmatprep.subr.bf16.mxu0 %v3183
        %4121 = vmatpush1.bf16.msra.mxu0 %v3182
        %4122 = vmatprep.subr.bf16.mxu0 %v3177
        %4123 = vmatpush1.bf16.msra.mxu0 %v3176
        %4124 = vmatprep.subr.bf16.mxu0 %v3171
        %4125 = vmatpush1.bf16.msra.mxu0 %v3170
        %4126 = vmatprep.subr.bf16.mxu0 %v3165
        %4127 = vmatpush1.bf16.msra.mxu0 %v3164
        %4128 = vmatprep.subr.bf16.mxu0 %v3159
        %4129 = vmatpush1.bf16.msra.mxu0 %v3158
        %4130 = vmatprep.subr.bf16.mxu0 %v3153
        %4131 = vmatpush1.bf16.msra.mxu0 %v3152
        %4132 = vmatprep.subr.bf16.mxu0 %v3243
        %4133 = vmatpush2.bf16.msra.mxu0 %v3242
        %4134 = vmatprep.subr.bf16.mxu0 %v3237
        %4135 = vmatpush2.bf16.msra.mxu0 %v3236
        %4136 = vmatprep.subr.bf16.mxu0 %v3231
        %4137 = vmatpush2.bf16.msra.mxu0 %v3230
        %4138 = vmatprep.subr.bf16.mxu0 %v3225
        %4139 = vmatpush2.bf16.msra.mxu0 %v3224
        %4140 = vmatprep.subr.bf16.mxu0 %v3219
        %4141 = vmatpush2.bf16.msra.mxu0 %v3218
        %4142 = vmatprep.subr.bf16.mxu0 %v3213
        %4143 = vmatpush2.bf16.msra.mxu0 %v3212
        %4144 = vmatprep.subr.bf16.mxu0 %v3207
        %4145 = vmatpush2.bf16.msra.mxu0 %v3206
        %4146 = vmatprep.subr.bf16.mxu0 %v3201
        %4147 = vmatpush2.bf16.msra.mxu0 %v3200
        %4148 = vmatprep.mubr.bf16.mxu0 %v1796
        %4149 = vmatmul.mubr.bf16.gmra.mxu0 %v1772
        %v4150 = vpop.f32.mrf.mxu0
        %v4151 = vadd.f32 %v4078, %v4150
        %v4152 = vpop.f32.mrf.mxu0
        %v4153 = vadd.f32 %v4080, %v4152
        %v4154 = vpop.f32.mrf.mxu0
        %v4155 = vadd.f32 %v4082, %v4154
        %v4156 = vpop.f32.mrf.mxu0
        %v4157 = vadd.f32 %v4084, %v4156
        %4158 = vmatprep.mubr.bf16.mxu0 %v1797
        %4159 = vmatmul.mubr.bf16.gmra.mxu0 %v1773
        %v4160 = vpop.f32.mrf.mxu0
        %v4161 = vadd.f32 %v4088, %v4160
        %v4162 = vpop.f32.mrf.mxu0
        %v4163 = vadd.f32 %v4090, %v4162
        %v4164 = vpop.f32.mrf.mxu0
        %v4165 = vadd.f32 %v4092, %v4164
        %v4166 = vpop.f32.mrf.mxu0
        %v4167 = vadd.f32 %v4094, %v4166
        %4168 = vmatprep.mubr.bf16.mxu0 %v1798
        %4169 = vmatmul.mubr.bf16.gmra.mxu0 %v1774
        %v4170 = vpop.f32.mrf.mxu0
        %v4171 = vadd.f32 %v4098, %v4170
        %v4172 = vpop.f32.mrf.mxu0
        %v4173 = vadd.f32 %v4100, %v4172
        %v4174 = vpop.f32.mrf.mxu0
        %v4175 = vadd.f32 %v4102, %v4174
        %v4176 = vpop.f32.mrf.mxu0
        %v4177 = vadd.f32 %v4104, %v4176
        %4178 = vmatprep.mubr.bf16.mxu0 %v1799
        %4179 = vmatmul.mubr.bf16.gmra.mxu0 %v1775
        %v4180 = vpop.f32.mrf.mxu0
        %v4181 = vadd.f32 %v4108, %v4180
        %v4182 = vpop.f32.mrf.mxu0
        %v4183 = vadd.f32 %v4110, %v4182
        %v4184 = vpop.f32.mrf.mxu0
        %v4185 = vadd.f32 %v4112, %v4184
        %v4186 = vpop.f32.mrf.mxu0
        %v4187 = vadd.f32 %v4114, %v4186
        %4188 = vdwg.mxu0
        %v4189 = vadd.f32 %v3713, %v3717
        %v4190 = vadd.f32 %v4189, %v3723
        %v4191 = vadd.f32 %v4190, %v3727
        %v4192 = vadd.f32 %v4191, %v3733
        %v4193 = vadd.f32 %v4192, %v3737
        %v4194 = vadd.f32 %v4193, %v3743
        %v4195 = vadd.f32 %v4194, %v3747
        %v4196 = vrot.slane %v4195, 4
        %v4197 = vadd.f32 %v4195, %v4196
        %v4198 = vrot.slane %v4197, 2
        %v4199 = vadd.f32 %v4197, %v4198
        %v4200 = vrot.slane %v4199, 1
        %v4201 = vadd.f32 %v4199, %v4200
        %v4202 = vadd.f32 %v3715, %v3719
        %v4203 = vadd.f32 %v4202, %v3725
        %v4204 = vadd.f32 %v4203, %v3729
        %v4205 = vadd.f32 %v4204, %v3735
        %v4206 = vadd.f32 %v4205, %v3739
        %v4207 = vadd.f32 %v4206, %v3745
        %v4208 = vadd.f32 %v4207, %v3749
        %v4209 = vrot.slane %v4208, 4
        %v4210 = vadd.f32 %v4208, %v4209
        %v4211 = vrot.slane %v4210, 2
        %v4212 = vadd.f32 %v4210, %v4211
        %v4213 = vrot.slane %v4212, 1
        %v4214 = vadd.f32 %v4212, %v4213
        %v4215 = vadd.f32 %v3932, %v3936
        %v4216 = vadd.f32 %v4215, %v3942
        %v4217 = vadd.f32 %v4216, %v3946
        %v4218 = vadd.f32 %v4217, %v3952
        %v4219 = vadd.f32 %v4218, %v3956
        %v4220 = vadd.f32 %v4219, %v3962
        %v4221 = vadd.f32 %v4220, %v3966
        %v4222 = vrot.slane %v4221, 4
        %v4223 = vadd.f32 %v4221, %v4222
        %v4224 = vrot.slane %v4223, 2
        %v4225 = vadd.f32 %v4223, %v4224
        %v4226 = vrot.slane %v4225, 1
        %v4227 = vadd.f32 %v4225, %v4226
        %v4228 = vadd.f32 %v3934, %v3938
        %v4229 = vadd.f32 %v4228, %v3944
        %v4230 = vadd.f32 %v4229, %v3948
        %v4231 = vadd.f32 %v4230, %v3954
        %v4232 = vadd.f32 %v4231, %v3958
        %v4233 = vadd.f32 %v4232, %v3964
        %v4234 = vadd.f32 %v4233, %v3968
        %v4235 = vrot.slane %v4234, 4
        %v4236 = vadd.f32 %v4234, %v4235
        %v4237 = vrot.slane %v4236, 2
        %v4238 = vadd.f32 %v4236, %v4237
        %v4239 = vrot.slane %v4238, 1
        %v4240 = vadd.f32 %v4238, %v4239
        %v4241 = vadd.f32 %v4151, %v4155
        %v4242 = vadd.f32 %v4241, %v4161
        %v4243 = vadd.f32 %v4242, %v4165
        %v4244 = vadd.f32 %v4243, %v4171
        %v4245 = vadd.f32 %v4244, %v4175
        %v4246 = vadd.f32 %v4245, %v4181
        %v4247 = vadd.f32 %v4246, %v4185
        %v4248 = vrot.slane %v4247, 4
        %v4249 = vadd.f32 %v4247, %v4248
        %v4250 = vrot.slane %v4249, 2
        %v4251 = vadd.f32 %v4249, %v4250
        %v4252 = vrot.slane %v4251, 1
        %v4253 = vadd.f32 %v4251, %v4252
        %v4254 = vadd.f32 %v4153, %v4157
        %v4255 = vadd.f32 %v4254, %v4163
        %v4256 = vadd.f32 %v4255, %v4167
        %v4257 = vadd.f32 %v4256, %v4173
        %v4258 = vadd.f32 %v4257, %v4177
        %v4259 = vadd.f32 %v4258, %v4183
        %v4260 = vadd.f32 %v4259, %v4187
        %v4261 = vrot.slane %v4260, 4
        %v4262 = vadd.f32 %v4260, %v4261
        %v4263 = vrot.slane %v4262, 2
        %v4264 = vadd.f32 %v4262, %v4263
        %v4265 = vrot.slane %v4264, 1
        %v4266 = vadd.f32 %v4264, %v4265
        %v4267 = vmul.f32 %v4201, 0.020408163
        %v4268 = vmul.f32 %v4214, 0.020408163
        %v4269 = vmul.f32 %v4227, 0.020408163
        %v4270 = vmul.f32 %v4240, 0.020408163
        %v4271 = vmul.f32 %v4253, 0.020408163
        %v4272 = vmul.f32 %v4266, 0.020408163
        %v4273 = vmul.f32 %v3713, %v3713
        %v4274 = vmul.f32 %v3715, %v3715
        %v4275 = vmul.f32 %v3932, %v3932
        %v4276 = vmul.f32 %v3934, %v3934
        %v4277 = vmul.f32 %v4151, %v4151
        %v4278 = vmul.f32 %v4153, %v4153
        %v4279 = vmul.f32 %v3717, %v3717
        %v4280 = vmul.f32 %v3719, %v3719
        %v4281 = vmul.f32 %v3936, %v3936
        %v4282 = vmul.f32 %v3938, %v3938
        %v4283 = vmul.f32 %v4155, %v4155
        %v4284 = vmul.f32 %v4157, %v4157
        %v4285 = vmul.f32 %v3723, %v3723
        %v4286 = vmul.f32 %v3725, %v3725
        %v4287 = vmul.f32 %v3942, %v3942
        %v4288 = vmul.f32 %v3944, %v3944
        %v4289 = vmul.f32 %v4161, %v4161
        %v4290 = vmul.f32 %v4163, %v4163
        %v4291 = vmul.f32 %v3727, %v3727
        %v4292 = vmul.f32 %v3729, %v3729
        %v4293 = vmul.f32 %v3946, %v3946
        %v4294 = vmul.f32 %v3948, %v3948
        %v4295 = vmul.f32 %v4165, %v4165
        %v4296 = vmul.f32 %v4167, %v4167
        %v4297 = vmul.f32 %v3733, %v3733
        %v4298 = vmul.f32 %v3735, %v3735
        %v4299 = vmul.f32 %v3952, %v3952
        %v4300 = vmul.f32 %v3954, %v3954
        %v4301 = vmul.f32 %v4171, %v4171
        %v4302 = vmul.f32 %v4173, %v4173
        %v4303 = vmul.f32 %v3737, %v3737
        %v4304 = vmul.f32 %v3739, %v3739
        %v4305 = vmul.f32 %v3956, %v3956
        %v4306 = vmul.f32 %v3958, %v3958
        %v4307 = vmul.f32 %v4175, %v4175
        %v4308 = vmul.f32 %v4177, %v4177
        %v4309 = vmul.f32 %v3743, %v3743
        %v4310 = vmul.f32 %v3745, %v3745
        %v4311 = vmul.f32 %v3962, %v3962
        %v4312 = vmul.f32 %v3964, %v3964
        %v4313 = vmul.f32 %v4181, %v4181
        %v4314 = vmul.f32 %v4183, %v4183
        %v4315 = vmul.f32 %v3747, %v3747
        %v4316 = vmul.f32 %v3749, %v3749
        %v4317 = vmul.f32 %v3966, %v3966
        %v4318 = vmul.f32 %v3968, %v3968
        %v4319 = vmul.f32 %v4185, %v4185
        %v4320 = vmul.f32 %v4187, %v4187
        %v4321 = vadd.f32 %v4273, %v4279
        %v4322 = vadd.f32 %v4321, %v4285
        %v4323 = vadd.f32 %v4322, %v4291
        %v4324 = vadd.f32 %v4323, %v4297
        %v4325 = vadd.f32 %v4324, %v4303
        %v4326 = vadd.f32 %v4325, %v4309
        %v4327 = vadd.f32 %v4326, %v4315
        %v4328 = vrot.slane %v4327, 4
        %v4329 = vadd.f32 %v4327, %v4328
        %v4330 = vrot.slane %v4329, 2
        %v4331 = vadd.f32 %v4329, %v4330
        %v4332 = vrot.slane %v4331, 1
        %v4333 = vadd.f32 %v4331, %v4332
        %v4334 = vadd.f32 %v4274, %v4280
        %v4335 = vadd.f32 %v4334, %v4286
        %v4336 = vadd.f32 %v4335, %v4292
        %v4337 = vadd.f32 %v4336, %v4298
        %v4338 = vadd.f32 %v4337, %v4304
        %v4339 = vadd.f32 %v4338, %v4310
        %v4340 = vadd.f32 %v4339, %v4316
        %v4341 = vrot.slane %v4340, 4
        %v4342 = vadd.f32 %v4340, %v4341
        %v4343 = vrot.slane %v4342, 2
        %v4344 = vadd.f32 %v4342, %v4343
        %v4345 = vrot.slane %v4344, 1
        %v4346 = vadd.f32 %v4344, %v4345
        %v4347 = vadd.f32 %v4275, %v4281
        %v4348 = vadd.f32 %v4347, %v4287
        %v4349 = vadd.f32 %v4348, %v4293
        %v4350 = vadd.f32 %v4349, %v4299
        %v4351 = vadd.f32 %v4350, %v4305
        %v4352 = vadd.f32 %v4351, %v4311
        %v4353 = vadd.f32 %v4352, %v4317
        %v4354 = vrot.slane %v4353, 4
        %v4355 = vadd.f32 %v4353, %v4354
        %v4356 = vrot.slane %v4355, 2
        %v4357 = vadd.f32 %v4355, %v4356
        %v4358 = vrot.slane %v4357, 1
        %v4359 = vadd.f32 %v4357, %v4358
        %v4360 = vadd.f32 %v4276, %v4282
        %v4361 = vadd.f32 %v4360, %v4288
        %v4362 = vadd.f32 %v4361, %v4294
        %v4363 = vadd.f32 %v4362, %v4300
        %v4364 = vadd.f32 %v4363, %v4306
        %v4365 = vadd.f32 %v4364, %v4312
        %v4366 = vadd.f32 %v4365, %v4318
        %v4367 = vrot.slane %v4366, 4
        %v4368 = vadd.f32 %v4366, %v4367
        %v4369 = vrot.slane %v4368, 2
        %v4370 = vadd.f32 %v4368, %v4369
        %v4371 = vrot.slane %v4370, 1
        %v4372 = vadd.f32 %v4370, %v4371
        %v4373 = vadd.f32 %v4277, %v4283
        %v4374 = vadd.f32 %v4373, %v4289
        %v4375 = vadd.f32 %v4374, %v4295
        %v4376 = vadd.f32 %v4375, %v4301
        %v4377 = vadd.f32 %v4376, %v4307
        %v4378 = vadd.f32 %v4377, %v4313
        %v4379 = vadd.f32 %v4378, %v4319
        %v4380 = vrot.slane %v4379, 4
        %v4381 = vadd.f32 %v4379, %v4380
        %v4382 = vrot.slane %v4381, 2
        %v4383 = vadd.f32 %v4381, %v4382
        %v4384 = vrot.slane %v4383, 1
        %v4385 = vadd.f32 %v4383, %v4384
        %v4386 = vadd.f32 %v4278, %v4284
        %v4387 = vadd.f32 %v4386, %v4290
        %v4388 = vadd.f32 %v4387, %v4296
        %v4389 = vadd.f32 %v4388, %v4302
        %v4390 = vadd.f32 %v4389, %v4308
        %v4391 = vadd.f32 %v4390, %v4314
        %v4392 = vadd.f32 %v4391, %v4320
        %v4393 = vrot.slane %v4392, 4
        %v4394 = vadd.f32 %v4392, %v4393
        %v4395 = vrot.slane %v4394, 2
        %v4396 = vadd.f32 %v4394, %v4395
        %v4397 = vrot.slane %v4396, 1
        %v4398 = vadd.f32 %v4396, %v4397
        %v4399 = vmul.f32 %v4333, 0.020408163
        %v4400 = vmul.f32 %v4346, 0.020408163
        %v4401 = vmul.f32 %v4359, 0.020408163
        %v4402 = vmul.f32 %v4372, 0.020408163
        %v4403 = vmul.f32 %v4385, 0.020408163
        %v4404 = vmul.f32 %v4398, 0.020408163
        %v4405 = vld [vmem:[%s5] sm:$0x3f]
        %v4406 = vmul.f32 %v4267, %v4267
        %v4407 = vmul.f32 %v4268, %v4268
        %v4408 = vmul.f32 %v4269, %v4269
        %v4409 = vmul.f32 %v4270, %v4270
        %v4410 = vmul.f32 %v4271, %v4271
        %v4411 = vmul.f32 %v4272, %v4272
        %v4412 = vsub.f32 %v4399, %v4406
        %v4413 = vsub.f32 %v4400, %v4407
        %v4414 = vsub.f32 %v4401, %v4408
        %v4415 = vsub.f32 %v4402, %v4409
        %v4416 = vsub.f32 %v4403, %v4410
        %v4417 = vsub.f32 %v4404, %v4411
        %v4418 = vadd.f32 %v4412, 1e-05
        %v4419 = vadd.f32 %v4413, 1e-05
        %v4420 = vadd.f32 %v4414, 1e-05
        %v4421 = vadd.f32 %v4415, 1e-05
        %v4422 = vadd.f32 %v4416, 1e-05
        %v4423 = vadd.f32 %v4417, 1e-05
        %v4424 = vrsqrt.pop %v4418
        %v4425 = vrsqrt.pop %v4419
        %v4426 = vrsqrt.pop %v4420
        %v4427 = vrsqrt.pop %v4421
        %v4428 = vrsqrt.pop %v4422
        %v4429 = vrsqrt.pop %v4423
        %v4436 = vcombine.low %v4424, %v4425
        %v4437 = vcombine.low %v4426, %v4427
        %v4438 = vcombine.low %v4428, %v4429
        %v4440 = vunpack.c.l.s4 1966171168
        %v4441 = vunpack.c.0.s8 %v4440
        %v4442 = vlaneseq
        %v4443 = vshrl.u32 %v4442, 7
        %v4444 = vsub.s32 %v4441, %v4443
        %v4445 = vrot.slane %v4436, %v4444
        %v4447 = vunpack.c.l.s4 1966171168
        %v4448 = vunpack.c.0.s8 %v4447
        %v4449 = vlaneseq
        %v4450 = vshrl.u32 %v4449, 7
        %v4451 = vsub.s32 %v4448, %v4450
        %v4452 = vrot.slane %v4437, %v4451
        %v4454 = vunpack.c.l.s4 1966171168
        %v4455 = vunpack.c.0.s8 %v4454
        %v4456 = vlaneseq
        %v4457 = vshrl.u32 %v4456, 7
        %v4458 = vsub.s32 %v4455, %v4457
        %v4459 = vrot.slane %v4438, %v4458
        %v4460 = vcombine.low %v4445, %v4452
        %v4462 = vunpack.c.l.s4 1966171168
        %v4463 = vunpack.c.0.s8 %v4462
        %v4464 = vlaneseq
        %v4465 = vshrl.u32 %v4464, 7
        %v4466 = vsub.s32 %v4463, %v4465
        %v4467 = vrot.slane %v4460, %v4466
        %v4469 = vunpack.c.l.s4 1966171168
        %v4470 = vunpack.c.0.s8 %v4469
        %v4471 = vlaneseq
        %v4472 = vshrl.u32 %v4471, 7
        %v4473 = vsub.s32 %v4470, %v4472
        %v4474 = vrot.slane %v4459, %v4473
        %v4475 = vcombine.low %v4467, %v4474
        %v4477 = vmul.f32 %v4405, %v4475
        %v4479 = vlaneseq
        %v4480 = vshrl.u32 %v4479, 7
        %v4481 = vsub.s32 0, %v4480
        %v4482 = vrot.slane %v4477, %v4481
        %v4483 = vlaneseq
        %v4484 = vshrl.u32 %v4483, 7
        %v4485 = vsub.s32 1, %v4484
        %v4486 = vrot.slane %v4477, %v4485
        %v4487 = vlaneseq
        %v4488 = vshrl.u32 %v4487, 7
        %v4489 = vsub.s32 2, %v4488
        %v4490 = vrot.slane %v4477, %v4489
        %v4491 = vlaneseq
        %v4492 = vshrl.u32 %v4491, 7
        %v4493 = vsub.s32 3, %v4492
        %v4494 = vrot.slane %v4477, %v4493
        %v4495 = vlaneseq
        %v4496 = vshrl.u32 %v4495, 7
        %v4497 = vsub.s32 4, %v4496
        %v4498 = vrot.slane %v4477, %v4497
        %v4499 = vlaneseq
        %v4500 = vshrl.u32 %v4499, 7
        %v4501 = vsub.s32 5, %v4500
        %v4502 = vrot.slane %v4477, %v4501
        %v4509 = vmul.f32 %v3713, %v4482
        %v4510 = vmul.f32 %v3715, %v4486
        %v4511 = vmul.f32 %v3932, %v4490
        %v4512 = vmul.f32 %v3934, %v4494
        %v4513 = vmul.f32 %v4151, %v4498
        %v4514 = vmul.f32 %v4153, %v4502
        %v4515 = vmul.f32 %v3717, %v4482
        %v4516 = vmul.f32 %v3719, %v4486
        %v4517 = vmul.f32 %v3936, %v4490
        %v4518 = vmul.f32 %v3938, %v4494
        %v4519 = vmul.f32 %v4155, %v4498
        %v4520 = vmul.f32 %v4157, %v4502
        %v4521 = vmul.f32 %v3723, %v4482
        %v4522 = vmul.f32 %v3725, %v4486
        %v4523 = vmul.f32 %v3942, %v4490
        %v4524 = vmul.f32 %v3944, %v4494
        %v4525 = vmul.f32 %v4161, %v4498
        %v4526 = vmul.f32 %v4163, %v4502
        %v4527 = vmul.f32 %v3727, %v4482
        %v4528 = vmul.f32 %v3729, %v4486
        %v4529 = vmul.f32 %v3946, %v4490
        %v4530 = vmul.f32 %v3948, %v4494
        %v4531 = vmul.f32 %v4165, %v4498
        %v4532 = vmul.f32 %v4167, %v4502
        %v4533 = vmul.f32 %v3733, %v4482
        %v4534 = vmul.f32 %v3735, %v4486
        %v4535 = vmul.f32 %v3952, %v4490
        %v4536 = vmul.f32 %v3954, %v4494
        %v4537 = vmul.f32 %v4171, %v4498
        %v4538 = vmul.f32 %v4173, %v4502
        %v4539 = vmul.f32 %v3737, %v4482
        %v4540 = vmul.f32 %v3739, %v4486
        %v4541 = vmul.f32 %v3956, %v4490
        %v4542 = vmul.f32 %v3958, %v4494
        %v4543 = vmul.f32 %v4175, %v4498
        %v4544 = vmul.f32 %v4177, %v4502
        %v4545 = vmul.f32 %v3743, %v4482
        %v4546 = vmul.f32 %v3745, %v4486
        %v4547 = vmul.f32 %v3962, %v4490
        %v4548 = vmul.f32 %v3964, %v4494
        %v4549 = vmul.f32 %v4181, %v4498
        %v4550 = vmul.f32 %v4183, %v4502
        %v4551 = vmul.f32 %v3747, %v4482
        %v4552 = vmul.f32 %v3749, %v4486
        %v4553 = vmul.f32 %v3966, %v4490
        %v4554 = vmul.f32 %v3968, %v4494
        %v4555 = vmul.f32 %v4185, %v4498
        %v4556 = vmul.f32 %v4187, %v4502
        %v4557 = vld [vmem:[%s6] sm:$0x3f]
        %v4558 = vmul.f32 %v4267, %v4482
        %v4559 = vmul.f32 %v4268, %v4486
        %v4560 = vmul.f32 %v4269, %v4490
        %v4561 = vmul.f32 %v4270, %v4494
        %v4562 = vmul.f32 %v4271, %v4498
        %v4563 = vmul.f32 %v4272, %v4502
        %v4570 = vcombine.low %v4558, %v4559
        %v4571 = vcombine.low %v4560, %v4561
        %v4572 = vcombine.low %v4562, %v4563
        %v4574 = vunpack.c.l.s4 1966171168
        %v4575 = vunpack.c.0.s8 %v4574
        %v4576 = vlaneseq
        %v4577 = vshrl.u32 %v4576, 7
        %v4578 = vsub.s32 %v4575, %v4577
        %v4579 = vrot.slane %v4570, %v4578
        %v4581 = vunpack.c.l.s4 1966171168
        %v4582 = vunpack.c.0.s8 %v4581
        %v4583 = vlaneseq
        %v4584 = vshrl.u32 %v4583, 7
        %v4585 = vsub.s32 %v4582, %v4584
        %v4586 = vrot.slane %v4571, %v4585
        %v4588 = vunpack.c.l.s4 1966171168
        %v4589 = vunpack.c.0.s8 %v4588
        %v4590 = vlaneseq
        %v4591 = vshrl.u32 %v4590, 7
        %v4592 = vsub.s32 %v4589, %v4591
        %v4593 = vrot.slane %v4572, %v4592
        %v4594 = vcombine.low %v4579, %v4586
        %v4596 = vunpack.c.l.s4 1966171168
        %v4597 = vunpack.c.0.s8 %v4596
        %v4598 = vlaneseq
        %v4599 = vshrl.u32 %v4598, 7
        %v4600 = vsub.s32 %v4597, %v4599
        %v4601 = vrot.slane %v4594, %v4600
        %v4603 = vunpack.c.l.s4 1966171168
        %v4604 = vunpack.c.0.s8 %v4603
        %v4605 = vlaneseq
        %v4606 = vshrl.u32 %v4605, 7
        %v4607 = vsub.s32 %v4604, %v4606
        %v4608 = vrot.slane %v4593, %v4607
        %v4609 = vcombine.low %v4601, %v4608
        %v4611 = vsub.f32 %v4557, %v4609
        %v4613 = vlaneseq
        %v4614 = vshrl.u32 %v4613, 7
        %v4615 = vsub.s32 0, %v4614
        %v4616 = vrot.slane %v4611, %v4615
        %v4617 = vlaneseq
        %v4618 = vshrl.u32 %v4617, 7
        %v4619 = vsub.s32 1, %v4618
        %v4620 = vrot.slane %v4611, %v4619
        %v4621 = vlaneseq
        %v4622 = vshrl.u32 %v4621, 7
        %v4623 = vsub.s32 2, %v4622
        %v4624 = vrot.slane %v4611, %v4623
        %v4625 = vlaneseq
        %v4626 = vshrl.u32 %v4625, 7
        %v4627 = vsub.s32 3, %v4626
        %v4628 = vrot.slane %v4611, %v4627
        %v4629 = vlaneseq
        %v4630 = vshrl.u32 %v4629, 7
        %v4631 = vsub.s32 4, %v4630
        %v4632 = vrot.slane %v4611, %v4631
        %v4633 = vlaneseq
        %v4634 = vshrl.u32 %v4633, 7
        %v4635 = vsub.s32 5, %v4634
        %v4636 = vrot.slane %v4611, %v4635
        %v4643 = vadd.f32 %v4509, %v4616
        %v4644 = vadd.f32 %v4510, %v4620
        %v4645 = vadd.f32 %v4511, %v4624
        %v4646 = vadd.f32 %v4512, %v4628
        %v4647 = vadd.f32 %v4513, %v4632
        %v4648 = vadd.f32 %v4514, %v4636
        %v4649 = vadd.f32 %v4515, %v4616
        %v4650 = vadd.f32 %v4516, %v4620
        %v4651 = vadd.f32 %v4517, %v4624
        %v4652 = vadd.f32 %v4518, %v4628
        %v4653 = vadd.f32 %v4519, %v4632
        %v4654 = vadd.f32 %v4520, %v4636
        %v4655 = vadd.f32 %v4521, %v4616
        %v4656 = vadd.f32 %v4522, %v4620
        %v4657 = vadd.f32 %v4523, %v4624
        %v4658 = vadd.f32 %v4524, %v4628
        %v4659 = vadd.f32 %v4525, %v4632
        %v4660 = vadd.f32 %v4526, %v4636
        %v4661 = vadd.f32 %v4527, %v4616
        %v4662 = vadd.f32 %v4528, %v4620
        %v4663 = vadd.f32 %v4529, %v4624
        %v4664 = vadd.f32 %v4530, %v4628
        %v4665 = vadd.f32 %v4531, %v4632
        %v4666 = vadd.f32 %v4532, %v4636
        %v4667 = vadd.f32 %v4533, %v4616
        %v4668 = vadd.f32 %v4534, %v4620
        %v4669 = vadd.f32 %v4535, %v4624
        %v4670 = vadd.f32 %v4536, %v4628
        %v4671 = vadd.f32 %v4537, %v4632
        %v4672 = vadd.f32 %v4538, %v4636
        %v4673 = vadd.f32 %v4539, %v4616
        %v4674 = vadd.f32 %v4540, %v4620
        %v4675 = vadd.f32 %v4541, %v4624
        %v4676 = vadd.f32 %v4542, %v4628
        %v4677 = vadd.f32 %v4543, %v4632
        %v4678 = vadd.f32 %v4544, %v4636
        %v4679 = vadd.f32 %v4545, %v4616
        %v4680 = vadd.f32 %v4546, %v4620
        %v4681 = vadd.f32 %v4547, %v4624
        %v4682 = vadd.f32 %v4548, %v4628
        %v4683 = vadd.f32 %v4549, %v4632
        %v4684 = vadd.f32 %v4550, %v4636
        %v4685 = vadd.f32 %v4551, %v4616
        %v4686 = vadd.f32 %v4552, %v4620
        %v4687 = vadd.f32 %v4553, %v4624
        %v4688 = vadd.f32 %v4554, %v4628
        %v4689 = vadd.f32 %v4555, %v4632
        %v4690 = vadd.f32 %v4556, %v4636
        %4691 = vst [vmem:[%s7] sm:$0xff] %v4643
        %4692 = vst [vmem:[%s7 + $0x8] sm:$0xff] %v4644
        %4693 = vst [vmem:[%s7 + $0x10] sm:$0xff] %v4645
        %4694 = vst [vmem:[%s7 + $0x18] sm:$0xff] %v4646
        %4695 = vst [vmem:[%s7 + $0x20] sm:$0xff] %v4647
        %4696 = vst [vmem:[%s7 + $0x28] sm:$0xff] %v4648
        %4697 = vst [vmem:[%s7 + $0x30] sm:$0xff] %v4649
        %4698 = vst [vmem:[%s7 + $0x38] sm:$0xff] %v4650
        %4699 = vst [vmem:[%s7 + $0x40] sm:$0xff] %v4651
        %4700 = vst [vmem:[%s7 + $0x48] sm:$0xff] %v4652
        %4701 = vst [vmem:[%s7 + $0x50] sm:$0xff] %v4653
        %4702 = vst [vmem:[%s7 + $0x58] sm:$0xff] %v4654
        %4703 = vst [vmem:[%s7 + $0x60] sm:$0xff] %v4655
        %4704 = vst [vmem:[%s7 + $0x68] sm:$0xff] %v4656
        %4705 = vst [vmem:[%s7 + $0x70] sm:$0xff] %v4657
        %4706 = vst [vmem:[%s7 + $0x78] sm:$0xff] %v4658
        %4707 = vst [vmem:[%s7 + $0x80] sm:$0xff] %v4659
        %4708 = vst [vmem:[%s7 + $0x88] sm:$0xff] %v4660
        %4709 = vst [vmem:[%s7 + $0x90] sm:$0xff] %v4661
        %4710 = vst [vmem:[%s7 + $0x98] sm:$0xff] %v4662
        %4711 = vst [vmem:[%s7 + $0xa0] sm:$0xff] %v4663
        %4712 = vst [vmem:[%s7 + $0xa8] sm:$0xff] %v4664
        %4713 = vst [vmem:[%s7 + $0xb0] sm:$0xff] %v4665
        %4714 = vst [vmem:[%s7 + $0xb8] sm:$0xff] %v4666
        %4715 = vst [vmem:[%s7 + $0xc0] sm:$0xff] %v4667
        %4716 = vst [vmem:[%s7 + $0xc8] sm:$0xff] %v4668
        %4717 = vst [vmem:[%s7 + $0xd0] sm:$0xff] %v4669
        %4718 = vst [vmem:[%s7 + $0xd8] sm:$0xff] %v4670
        %4719 = vst [vmem:[%s7 + $0xe0] sm:$0xff] %v4671
        %4720 = vst [vmem:[%s7 + $0xe8] sm:$0xff] %v4672
        %4721 = vst [vmem:[%s7 + $0xf0] sm:$0xff] %v4673
        %4722 = vst [vmem:[%s7 + $0xf8] sm:$0xff] %v4674
        %4723 = vst [vmem:[%s7 + $0x100] sm:$0xff] %v4675
        %4724 = vst [vmem:[%s7 + $0x108] sm:$0xff] %v4676
        %4725 = vst [vmem:[%s7 + $0x110] sm:$0xff] %v4677
        %4726 = vst [vmem:[%s7 + $0x118] sm:$0xff] %v4678
        %4727 = vst [vmem:[%s7 + $0x120] sm:$0xff] %v4679
        %4728 = vst [vmem:[%s7 + $0x128] sm:$0xff] %v4680
        %4729 = vst [vmem:[%s7 + $0x130] sm:$0xff] %v4681
        %4730 = vst [vmem:[%s7 + $0x138] sm:$0xff] %v4682
        %4731 = vst [vmem:[%s7 + $0x140] sm:$0xff] %v4683
        %4732 = vst [vmem:[%s7 + $0x148] sm:$0xff] %v4684
        %4733 = vst [vmem:[%s7 + $0x150] sm:$0xff] %v4685
        %4734 = vst [vmem:[%s7 + $0x158] sm:$0xff] %v4686
        %4735 = vst [vmem:[%s7 + $0x160] sm:$0xff] %v4687
        %4736 = vst [vmem:[%s7 + $0x168] sm:$0xff] %v4688
        %4737 = vst [vmem:[%s7 + $0x170] sm:$0xff] %v4689
        %4738 = vst [vmem:[%s7 + $0x178] sm:$0xff] %v4690
      $region52: #{model_forward.1} parent=47 // pred_fallthru
        _
      // Predicated region
      $region53: #{model_forward.1} parent=47 // pred_check
        %p4739 = pneg %p198
      $region54: #{model_forward.1} parent=47 // pred_check_branch
        %4741 = sbr.rel (%p4739) target = $region56
      $region55: #{model_forward.1} parent=47 // pred_region
        _
      $region56: #{model_forward.1} parent=47 // pred_fallthru
        _
      // Predicated region
      $region57: #{model_forward.1} parent=47 // pred_check
        %p4742 = pneg %p198
      $region58: #{model_forward.1} parent=47 // pred_check_branch
        %4744 = sbr.rel (%p4742) target = $region60
      $region59: #{model_forward.1} parent=47 // pred_region
        _
      $region60: #{model_forward.1} parent=47 // pred_fallthru
        _
    $region48: #{model_forward.1} parent=5 // pred_fallthru
      _
    %p4745 = scmp.le.s32.totalorder 2, %s13
    // Predicated region
    $region61: #{model_forward.1} parent=5 // pred_check
      %p4746 = pneg %p4745
    $region62: #{model_forward.1} parent=5 // pred_check_branch
      %4748 = sbr.rel (%p4746) target = $region64
    $region63: #{model_forward.1} parent=5 // pred_region
      %s4749 = ssub.s32 %s13, 2
    $region64: #{model_forward.1} parent=5 // pred_fallthru
      _
  $region6: #{model_forward.1} parent=0 // loop_footer
    %s17 = sadd.s32 1, %s13
  $region7: #{model_forward.1} parent=0 // loop_footer_branch
    %12 = sbr.rel target = $region3
  $region8: #{model_forward.1} parent=0 // loop_exit
    _

</llo_original>
